<compile_context>
chip_gen: v6e
topology: v6e:2x2x1
jax: 0.10.0
libtpu: 0.0.40
codegen_flags: <defaults>
</compile_context>

<pallas_src>
import functools

import jax
import jax.numpy as jnp
from jax.experimental import pallas as pl
from jax.experimental.pallas import tpu as pltpu

VMEM_SPEC = pl.BlockSpec(memory_space=pltpu.MemorySpace.VMEM)
_PADR = 8  # sublane-aligned row padding of the depthwise scratch


# ------------------------------ fused Pallas kernel ------------------------------ #

def _make_dscnn_kernel(B, OH, OW, n_blocks, lpad):
    BH = B * OH

    def kernel(*refs):
        patches_ref, pool_ref, w0_ref, b0_ref = refs[:4]
        blk_refs = refs[4:4 + 4 * n_blocks]
        fc0w_ref, fc0b_ref, fc1w_ref, fc1b_ref = refs[4 + 4 * n_blocks:8 + 4 * n_blocks]
        out_ref = refs[8 + 4 * n_blocks]
        pad_sc = refs[9 + 4 * n_blocks]

        # ---- initial conv (block-diagonal GEMM over OW) + folded BN + ReLU ----
        y = jnp.dot(patches_ref[...], w0_ref[...], preferred_element_type=jnp.float32)
        y = jnp.maximum(y + b0_ref[...], 0.0)                      # (BH, OW*C0)

        # row validity masks for the vertical depthwise taps (batch-boundary guard)
        row = jax.lax.broadcasted_iota(jnp.int32, (BH, 1), 0)
        h = row % OH
        mask_up = h > 0            # valid for dh = -1
        mask_dn = h < OH - 1       # valid for dh = +1

        # ---- 4x DSConv blocks, fully unrolled, all VMEM-resident ----
        for blk in range(n_blocks):
            dw_ref, db_ref, pw_ref, pb_ref = blk_refs[4 * blk:4 * blk + 4]
            wc = dw_ref.shape[1]           # OW * cin
            cin = wc // OW

            # in-kernel 'same' padding: zero scratch, write interior (tile-aligned),
            # then the 9 taps are static slices of the padded slab.
            pad_sc[...] = jnp.zeros(pad_sc.shape, pad_sc.dtype)
            pad_sc[_PADR:_PADR + BH, lpad:lpad + wc] = y

            acc = jnp.zeros((BH, wc), jnp.float32)
            t = 0
            for dh in (-1, 0, 1):
                for dw in (-1, 0, 1):
                    tap = pad_sc[_PADR + dh:_PADR + dh + BH,
                                 lpad + dw * cin:lpad + dw * cin + wc]
                    if dh == -1:
                        tap = jnp.where(mask_up, tap, 0.0)
                    elif dh == 1:
                        tap = jnp.where(mask_dn, tap, 0.0)
                    acc = acc + tap * dw_ref[t:t + 1, :]
                    t += 1
            y = jnp.maximum(acc + db_ref[...], 0.0)                # depthwise + BN1 + ReLU

            # pointwise 1x1 as a block-diagonal GEMM + folded BN2 + ReLU
            y = jnp.dot(y, pw_ref[...], preferred_element_type=jnp.float32)
            y = jnp.maximum(y + pb_ref[...], 0.0)                  # (BH, OW*cout)

        # ---- head: avg-pool (as a GEMM) -> fc0 -> ReLU -> fc1 -> softmax ----
        z = jnp.dot(pool_ref[...], y, preferred_element_type=jnp.float32)   # (B, OW*C4)
        hid = jnp.maximum(
            jnp.dot(z, fc0w_ref[...], preferred_element_type=jnp.float32) + fc0b_ref[...],
            0.0)
        logits = jnp.dot(hid, fc1w_ref[...], preferred_element_type=jnp.float32) + fc1b_ref[...]
        m = jnp.max(logits, axis=1, keepdims=True)
        e = jnp.exp(logits - m)
        out_ref[...] = e / jnp.sum(e, axis=1, keepdims=True)

    return kernel


def _dscnn_pallas(patches, pool, packed, B, OH, OW, n_classes, cmax):
    inputs = [patches, pool, packed["w0"], packed["b0"]]
    for blk in packed["dsconv"]:
        inputs.extend(blk)
    inputs += [packed["fc0_w"], packed["fc0_b"], packed["fc1_w"], packed["fc1_b"]]

    lpad = max(128, cmax)  # lane-aligned left padding of the depthwise scratch
    kernel = _make_dscnn_kernel(B, OH, OW, len(packed["dsconv"]), lpad)
    return pl.pallas_call(
        kernel,
        out_shape=jax.ShapeDtypeStruct((B, n_classes), jnp.float32),
        in_specs=[VMEM_SPEC] * len(inputs),
        out_specs=VMEM_SPEC,
        scratch_shapes=[
            pltpu.VMEM((B * OH + 2 * _PADR, lpad + OW * cmax + cmax), jnp.float32)
        ],
    )(*inputs)


# ------------------------------ parameter handling ------------------------------ #

def _kaiming_out(key, shape, fan_out):
    std = (2.0 / fan_out) ** 0.5
    return std * jax.random.normal(key, shape, jnp.float32)


def _bn_fold(c, eps=1e-5):
    # eval-mode BatchNorm with default init / running stats, folded to (scale, bias)
    gamma = jnp.ones((c,), jnp.float32)
    beta = jnp.zeros((c,), jnp.float32)
    mean = jnp.zeros((c,), jnp.float32)
    var = jnp.ones((c,), jnp.float32)
    scale = gamma / jnp.sqrt(var + eps)
    bias = beta - mean * scale
    return scale, bias


def init_params(input_channels, out_classes, structure, key):
    ks = iter(jax.random.split(key, 32))
    KH, KW = 10, 4
    c0 = structure[0]
    p = {}

    # initial conv (10,4) stride (2,2), no bias; BN scale folded into the columns
    w0 = _kaiming_out(next(ks), (KH, KW, input_channels, c0), fan_out=c0 * KH * KW)
    s0, b0 = _bn_fold(c0)
    p["init_w"] = w0.reshape(KH * KW * input_channels, c0) * s0[None, :]
    p["init_b"] = b0.reshape(1, c0)

    # 4x DSConv blocks: depthwise 3x3 (groups=cin) + BN, pointwise 1x1 + BN
    p["dsconv"] = []
    chans = structure[:5]
    for i in range(4):
        cin, cout = chans[i], chans[i + 1]
        dw = _kaiming_out(next(ks), (9, cin), fan_out=cin * 9)
        s1, b1 = _bn_fold(cin)
        pw = _kaiming_out(next(ks), (cin, cout), fan_out=cout)
        s2, b2 = _bn_fold(cout)
        p["dsconv"].append((dw * s1[None, :], b1.reshape(1, cin),
                            pw * s2[None, :], b2.reshape(1, cout)))

    # Linear layers: normal(0, 0.01), zero bias; stored pre-transposed as (in, out)
    p["fc0_w"] = 0.01 * jax.random.normal(next(ks), (structure[4], structure[5]), jnp.float32)
    p["fc0_b"] = jnp.zeros((1, structure[5]), jnp.float32)
    p["fc1_w"] = 0.01 * jax.random.normal(next(ks), (structure[5], out_classes), jnp.float32)
    p["fc1_b"] = jnp.zeros((1, out_classes), jnp.float32)
    return p


def _pack_params(params, OW):
    # Repack weights for the lane-dense (B*OH, OW*C) activation layout.
    # Constant-folded at trace time since params are closed over by jit.
    eye = jnp.eye(OW, dtype=jnp.float32)
    packed = {
        "w0": jnp.kron(eye, params["init_w"]),        # (OW*K0, OW*C0) block-diagonal
        "b0": jnp.tile(params["init_b"], (1, OW)),    # (1, OW*C0)
        "fc0_w": jnp.tile(params["fc0_w"], (OW, 1)),  # (OW*C4, C5): folds the OW-sum
        "fc0_b": params["fc0_b"],
        "fc1_w": params["fc1_w"],
        "fc1_b": params["fc1_b"],
        "dsconv": [],
    }
    for dw, db, pw, pb in params["dsconv"]:
        packed["dsconv"].append((
            jnp.tile(dw, (1, OW)),   # (9, OW*cin)  depthwise taps (BN scale folded)
            jnp.tile(db, (1, OW)),   # (1, OW*cin)
            jnp.kron(eye, pw),       # (OW*cin, OW*cout) block-diagonal pointwise
            jnp.tile(pb, (1, OW)),   # (1, OW*cout)
        ))
    return packed


# --------------------------------- forward pass --------------------------------- #

def dscnn_forward(x_nchw, params):
    x = jnp.transpose(x_nchw, (0, 2, 3, 1)).astype(jnp.float32)     # NCHW -> NHWC
    B, H, W, Cin = x.shape
    KH, KW, SH, SW = 10, 4, 2, 2
    OH = (H - KH) // SH + 1
    OW = (W - KW) // SW + 1

    # im2col for the strided initial conv (tiny XLA glue, ~26 KB).  Column order is
    # (ow, kh, kw, cin) so it lines up with the kron(I_OW, W0) block-diagonal weight.
    taps = []
    for kh in range(KH):
        for kw in range(KW):
            taps.append(x[:, kh:kh + SH * OH:SH, kw:kw + SW * OW:SW, :])
    patches = jnp.stack(taps, axis=3).reshape(B * OH, OW * KH * KW * Cin)

    # adaptive-avg-pool as a GEMM: pool[b, b*OH + h] = 1 / (OH*OW)
    pool = (jnp.arange(B)[:, None] == (jnp.arange(B * OH)[None, :] // OH)
            ).astype(jnp.float32) / (OH * OW)

    # initial dropout p=0.2 and final dropout p=0.4: identity (eval mode)
    packed = _pack_params(params, OW)
    cmax = max(dw.shape[1] for dw, _, _, _ in params["dsconv"])
    n_classes = params["fc1_w"].shape[1]
    return _dscnn_pallas(patches, pool, packed, B, OH, OW, n_classes, cmax)


# ------------------------------------- main -------------------------------------- #

if __name__ == "__main__":
    key = jax.random.PRNGKey(0)
    k_x, k_p = jax.random.split(key)

    B, Cin, H, W = 2, 1, 49, 10           # KWS-style mel-spectrogram input, NCHW
    out_classes = 12
    structure = [64, 64, 64, 64, 64, 64]  # DSCNN size=1

    x = jax.random.normal(k_x, (B, Cin, H, W), jnp.float32)
    params = init_params(Cin, out_classes, structure, k_p)

    fwd = jax.jit(functools.partial(dscnn_forward, params=params))
    probs = jax.block_until_ready(fwd(x))

    assert probs.shape == (B, out_classes), probs.shape
    assert bool(jnp.all(jnp.isfinite(probs)))
    assert bool(jnp.allclose(jnp.sum(probs, axis=1), 1.0, atol=1e-5))
    print("KERNEL_OK")
</pallas_src>

<mosaic_0001>
module attributes {stable_mosaic.version = 11 : i64} {
  func.func @kernel(%arg0: memref<40x160xf32, #tpu.memory_space<vmem>>, %arg1: memref<2x40xf32, #tpu.memory_space<vmem>>, %arg2: memref<160x256xf32, #tpu.memory_space<vmem>>, %arg3: memref<1x256xf32, #tpu.memory_space<vmem>>, %arg4: memref<9x256xf32, #tpu.memory_space<vmem>>, %arg5: memref<1x256xf32, #tpu.memory_space<vmem>>, %arg6: memref<256x256xf32, #tpu.memory_space<vmem>>, %arg7: memref<1x256xf32, #tpu.memory_space<vmem>>, %arg8: memref<9x256xf32, #tpu.memory_space<vmem>>, %arg9: memref<1x256xf32, #tpu.memory_space<vmem>>, %arg10: memref<256x256xf32, #tpu.memory_space<vmem>>, %arg11: memref<1x256xf32, #tpu.memory_space<vmem>>, %arg12: memref<9x256xf32, #tpu.memory_space<vmem>>, %arg13: memref<1x256xf32, #tpu.memory_space<vmem>>, %arg14: memref<256x256xf32, #tpu.memory_space<vmem>>, %arg15: memref<1x256xf32, #tpu.memory_space<vmem>>, %arg16: memref<9x256xf32, #tpu.memory_space<vmem>>, %arg17: memref<1x256xf32, #tpu.memory_space<vmem>>, %arg18: memref<256x256xf32, #tpu.memory_space<vmem>>, %arg19: memref<1x256xf32, #tpu.memory_space<vmem>>, %arg20: memref<256x64xf32, #tpu.memory_space<vmem>>, %arg21: memref<1x64xf32, #tpu.memory_space<vmem>>, %arg22: memref<64x12xf32, #tpu.memory_space<vmem>>, %arg23: memref<1x12xf32, #tpu.memory_space<vmem>>, %arg24: memref<2x12xf32, #tpu.memory_space<vmem>>, %arg25: memref<56x448xf32, #tpu.memory_space<vmem>>) attributes {dimension_semantics = [], scalar_prefetch = 0 : i64, scratch_operands = 1 : i64, tpu.core_type = #tpu.core_type<tc>} {
    %c0 = arith.constant 0 : index
    %c0_0 = arith.constant 0 : index
    %0 = vector.load %arg0[%c0, %c0_0] : memref<40x160xf32, #tpu.memory_space<vmem>>, vector<40x160xf32>
    %c0_1 = arith.constant 0 : index
    %c0_2 = arith.constant 0 : index
    %1 = vector.load %arg2[%c0_1, %c0_2] : memref<160x256xf32, #tpu.memory_space<vmem>>, vector<160x256xf32>
    %cst = arith.constant dense<0.000000e+00> : vector<40x256xf32>
    %2 = tpu.matmul %0, %1, %cst {dimension_numbers = #tpu.dot_dimension_numbers<[1], [0], [0], [1], [0, 0, 1, 1], [], []>} : vector<40x160xf32>, vector<160x256xf32>, vector<40x256xf32> -> vector<40x256xf32>
    %c0_3 = arith.constant 0 : index
    %c0_4 = arith.constant 0 : index
    %3 = vector.load %arg3[%c0_3, %c0_4] : memref<1x256xf32, #tpu.memory_space<vmem>>, vector<1x256xf32>
    %4 = vector.broadcast %3 : vector<1x256xf32> to vector<40x256xf32>
    %5 = arith.addf %2, %4 : vector<40x256xf32>
    %cst_5 = arith.constant 0.000000e+00 : f32
    %6 = vector.broadcast %cst_5 : f32 to vector<40x256xf32>
    %7 = arith.maximumf %5, %6 : vector<40x256xf32>
    %8 = tpu.iota {dimensions = array<i32: 0>} : vector<40x1xi32>
    %c20_i32 = arith.constant 20 : i32
    %c0_i32 = arith.constant 0 : i32
    %9 = arith.cmpi eq, %c20_i32, %c0_i32 : i32
    %c1_i32 = arith.constant 1 : i32
    %10 = arith.select %9, %c1_i32, %c20_i32 : i32
    %11 = vector.broadcast %10 : i32 to vector<40x1xi32>
    %12 = arith.remsi %8, %11 : vector<40x1xi32>
    %c0_i32_6 = arith.constant 0 : i32
    %13 = vector.broadcast %c0_i32_6 : i32 to vector<40x1xi32>
    %14 = arith.cmpi ne, %12, %13 : vector<40x1xi32>
    %c0_i32_7 = arith.constant 0 : i32
    %15 = vector.broadcast %c0_i32_7 : i32 to vector<40x1xi32>
    %16 = arith.cmpi slt, %12, %15 : vector<40x1xi32>
    %c0_i32_8 = arith.constant 0 : i32
    %17 = arith.cmpi slt, %10, %c0_i32_8 : i32
    %18 = vector.broadcast %17 : i1 to vector<40x1xi1>
    %19 = vector.broadcast %18 : vector<40x1xi1> to vector<40x1xi1>
    %20 = arith.xori %16, %19 : vector<40x1xi1>
    %21 = arith.andi %20, %14 : vector<40x1xi1>
    %22 = vector.broadcast %10 : i32 to vector<40x1xi32>
    %23 = arith.addi %12, %22 : vector<40x1xi32>
    %24 = arith.select %21, %23, %12 : vector<40x1xi1>, vector<40x1xi32>
    %c0_i32_9 = arith.constant 0 : i32
    %25 = vector.broadcast %c0_i32_9 : i32 to vector<40x1xi32>
    %26 = arith.cmpi sgt, %24, %25 : vector<40x1xi32>
    %c19_i32 = arith.constant 19 : i32
    %27 = vector.broadcast %c19_i32 : i32 to vector<40x1xi32>
    %28 = arith.cmpi slt, %24, %27 : vector<40x1xi32>
    %cst_10 = arith.constant 0.000000e+00 : f32
    %29 = vector.broadcast %cst_10 : f32 to vector<56x448xf32>
    %c0_11 = arith.constant 0 : index
    %c0_12 = arith.constant 0 : index
    %30 = vector.load %arg25[%c0_11, %c0_12] : memref<56x448xf32, #tpu.memory_space<vmem>>, vector<56x448xf32>
    tpu.vector_store %arg25[%c0_11, %c0_12], %29 {strides = array<i32>} : memref<56x448xf32, #tpu.memory_space<vmem>>, vector<56x448xf32>,
    %c8 = arith.constant 8 : index
    %c128 = arith.constant 128 : index
    %31 = vector.load %arg25[%c8, %c128] : memref<56x448xf32, #tpu.memory_space<vmem>>, vector<40x256xf32>
    tpu.vector_store %arg25[%c8, %c128], %7 {strides = array<i32>} : memref<56x448xf32, #tpu.memory_space<vmem>>, vector<40x256xf32>,
    %cst_13 = arith.constant 0.000000e+00 : f32
    %32 = vector.broadcast %cst_13 : f32 to vector<40x256xf32>
    %c7 = arith.constant 7 : index
    %c64 = arith.constant 64 : index
    %33 = vector.load %arg25[%c7, %c64] : memref<56x448xf32, #tpu.memory_space<vmem>>, vector<40x256xf32>
    %cst_14 = arith.constant 0.000000e+00 : f32
    %34 = vector.shape_cast %26 : vector<40x1xi1> to vector<40x1xi1>
    %35 = vector.broadcast %34 : vector<40x1xi1> to vector<40x256xi1>
    %36 = vector.broadcast %cst_14 : f32 to vector<40x256xf32>
    %37 = arith.select %35, %33, %36 : vector<40x256xi1>, vector<40x256xf32>
    %c0_15 = arith.constant 0 : index
    %c0_16 = arith.constant 0 : index
    %38 = vector.load %arg4[%c0_15, %c0_16] : memref<9x256xf32, #tpu.memory_space<vmem>>, vector<1x256xf32>
    %39 = vector.broadcast %38 : vector<1x256xf32> to vector<40x256xf32>
    %40 = arith.mulf %37, %39 : vector<40x256xf32>
    %41 = arith.addf %32, %40 : vector<40x256xf32>
    %c7_17 = arith.constant 7 : index
    %c128_18 = arith.constant 128 : index
    %42 = vector.load %arg25[%c7_17, %c128_18] : memref<56x448xf32, #tpu.memory_space<vmem>>, vector<40x256xf32>
    %cst_19 = arith.constant 0.000000e+00 : f32
    %43 = vector.shape_cast %26 : vector<40x1xi1> to vector<40x1xi1>
    %44 = vector.broadcast %43 : vector<40x1xi1> to vector<40x256xi1>
    %45 = vector.broadcast %cst_19 : f32 to vector<40x256xf32>
    %46 = arith.select %44, %42, %45 : vector<40x256xi1>, vector<40x256xf32>
    %c1 = arith.constant 1 : index
    %c0_20 = arith.constant 0 : index
    %47 = vector.load %arg4[%c1, %c0_20] : memref<9x256xf32, #tpu.memory_space<vmem>>, vector<1x256xf32>
    %48 = vector.broadcast %47 : vector<1x256xf32> to vector<40x256xf32>
    %49 = arith.mulf %46, %48 : vector<40x256xf32>
    %50 = arith.addf %41, %49 : vector<40x256xf32>
    %c7_21 = arith.constant 7 : index
    %c192 = arith.constant 192 : index
    %51 = vector.load %arg25[%c7_21, %c192] : memref<56x448xf32, #tpu.memory_space<vmem>>, vector<40x256xf32>
    %cst_22 = arith.constant 0.000000e+00 : f32
    %52 = vector.shape_cast %26 : vector<40x1xi1> to vector<40x1xi1>
    %53 = vector.broadcast %52 : vector<40x1xi1> to vector<40x256xi1>
    %54 = vector.broadcast %cst_22 : f32 to vector<40x256xf32>
    %55 = arith.select %53, %51, %54 : vector<40x256xi1>, vector<40x256xf32>
    %c2 = arith.constant 2 : index
    %c0_23 = arith.constant 0 : index
    %56 = vector.load %arg4[%c2, %c0_23] : memref<9x256xf32, #tpu.memory_space<vmem>>, vector<1x256xf32>
    %57 = vector.broadcast %56 : vector<1x256xf32> to vector<40x256xf32>
    %58 = arith.mulf %55, %57 : vector<40x256xf32>
    %59 = arith.addf %50, %58 : vector<40x256xf32>
    %c8_24 = arith.constant 8 : index
    %c64_25 = arith.constant 64 : index
    %60 = vector.load %arg25[%c8_24, %c64_25] : memref<56x448xf32, #tpu.memory_space<vmem>>, vector<40x256xf32>
    %c3 = arith.constant 3 : index
    %c0_26 = arith.constant 0 : index
    %61 = vector.load %arg4[%c3, %c0_26] : memref<9x256xf32, #tpu.memory_space<vmem>>, vector<1x256xf32>
    %62 = vector.broadcast %61 : vector<1x256xf32> to vector<40x256xf32>
    %63 = arith.mulf %60, %62 : vector<40x256xf32>
    %64 = arith.addf %59, %63 : vector<40x256xf32>
    %c8_27 = arith.constant 8 : index
    %c128_28 = arith.constant 128 : index
    %65 = vector.load %arg25[%c8_27, %c128_28] : memref<56x448xf32, #tpu.memory_space<vmem>>, vector<40x256xf32>
    %c4 = arith.constant 4 : index
    %c0_29 = arith.constant 0 : index
    %66 = vector.load %arg4[%c4, %c0_29] : memref<9x256xf32, #tpu.memory_space<vmem>>, vector<1x256xf32>
    %67 = vector.broadcast %66 : vector<1x256xf32> to vector<40x256xf32>
    %68 = arith.mulf %65, %67 : vector<40x256xf32>
    %69 = arith.addf %64, %68 : vector<40x256xf32>
    %c8_30 = arith.constant 8 : index
    %c192_31 = arith.constant 192 : index
    %70 = vector.load %arg25[%c8_30, %c192_31] : memref<56x448xf32, #tpu.memory_space<vmem>>, vector<40x256xf32>
    %c5 = arith.constant 5 : index
    %c0_32 = arith.constant 0 : index
    %71 = vector.load %arg4[%c5, %c0_32] : memref<9x256xf32, #tpu.memory_space<vmem>>, vector<1x256xf32>
    %72 = vector.broadcast %71 : vector<1x256xf32> to vector<40x256xf32>
    %73 = arith.mulf %70, %72 : vector<40x256xf32>
    %74 = arith.addf %69, %73 : vector<40x256xf32>
    %c9 = arith.constant 9 : index
    %c64_33 = arith.constant 64 : index
    %75 = vector.load %arg25[%c9, %c64_33] : memref<56x448xf32, #tpu.memory_space<vmem>>, vector<40x256xf32>
    %cst_34 = arith.constant 0.000000e+00 : f32
    %76 = vector.shape_cast %28 : vector<40x1xi1> to vector<40x1xi1>
    %77 = vector.broadcast %76 : vector<40x1xi1> to vector<40x256xi1>
    %78 = vector.broadcast %cst_34 : f32 to vector<40x256xf32>
    %79 = arith.select %77, %75, %78 : vector<40x256xi1>, vector<40x256xf32>
    %c6 = arith.constant 6 : index
    %c0_35 = arith.constant 0 : index
    %80 = vector.load %arg4[%c6, %c0_35] : memref<9x256xf32, #tpu.memory_space<vmem>>, vector<1x256xf32>
    %81 = vector.broadcast %80 : vector<1x256xf32> to vector<40x256xf32>
    %82 = arith.mulf %79, %81 : vector<40x256xf32>
    %83 = arith.addf %74, %82 : vector<40x256xf32>
    %c9_36 = arith.constant 9 : index
    %c128_37 = arith.constant 128 : index
    %84 = vector.load %arg25[%c9_36, %c128_37] : memref<56x448xf32, #tpu.memory_space<vmem>>, vector<40x256xf32>
    %cst_38 = arith.constant 0.000000e+00 : f32
    %85 = vector.shape_cast %28 : vector<40x1xi1> to vector<40x1xi1>
    %86 = vector.broadcast %85 : vector<40x1xi1> to vector<40x256xi1>
    %87 = vector.broadcast %cst_38 : f32 to vector<40x256xf32>
    %88 = arith.select %86, %84, %87 : vector<40x256xi1>, vector<40x256xf32>
    %c7_39 = arith.constant 7 : index
    %c0_40 = arith.constant 0 : index
    %89 = vector.load %arg4[%c7_39, %c0_40] : memref<9x256xf32, #tpu.memory_space<vmem>>, vector<1x256xf32>
    %90 = vector.broadcast %89 : vector<1x256xf32> to vector<40x256xf32>
    %91 = arith.mulf %88, %90 : vector<40x256xf32>
    %92 = arith.addf %83, %91 : vector<40x256xf32>
    %c9_41 = arith.constant 9 : index
    %c192_42 = arith.constant 192 : index
    %93 = vector.load %arg25[%c9_41, %c192_42] : memref<56x448xf32, #tpu.memory_space<vmem>>, vector<40x256xf32>
    %cst_43 = arith.constant 0.000000e+00 : f32
    %94 = vector.shape_cast %28 : vector<40x1xi1> to vector<40x1xi1>
    %95 = vector.broadcast %94 : vector<40x1xi1> to vector<40x256xi1>
    %96 = vector.broadcast %cst_43 : f32 to vector<40x256xf32>
    %97 = arith.select %95, %93, %96 : vector<40x256xi1>, vector<40x256xf32>
    %c8_44 = arith.constant 8 : index
    %c0_45 = arith.constant 0 : index
    %98 = vector.load %arg4[%c8_44, %c0_45] : memref<9x256xf32, #tpu.memory_space<vmem>>, vector<1x256xf32>
    %99 = vector.broadcast %98 : vector<1x256xf32> to vector<40x256xf32>
    %100 = arith.mulf %97, %99 : vector<40x256xf32>
    %101 = arith.addf %92, %100 : vector<40x256xf32>
    %c0_46 = arith.constant 0 : index
    %c0_47 = arith.constant 0 : index
    %102 = vector.load %arg5[%c0_46, %c0_47] : memref<1x256xf32, #tpu.memory_space<vmem>>, vector<1x256xf32>
    %103 = vector.broadcast %102 : vector<1x256xf32> to vector<40x256xf32>
    %104 = arith.addf %101, %103 : vector<40x256xf32>
    %cst_48 = arith.constant 0.000000e+00 : f32
    %105 = vector.broadcast %cst_48 : f32 to vector<40x256xf32>
    %106 = arith.maximumf %104, %105 : vector<40x256xf32>
    %c0_49 = arith.constant 0 : index
    %c0_50 = arith.constant 0 : index
    %107 = vector.load %arg6[%c0_49, %c0_50] : memref<256x256xf32, #tpu.memory_space<vmem>>, vector<256x256xf32>
    %cst_51 = arith.constant dense<0.000000e+00> : vector<40x256xf32>
    %108 = tpu.matmul %106, %107, %cst_51 {dimension_numbers = #tpu.dot_dimension_numbers<[1], [0], [0], [1], [0, 0, 1, 1], [], []>} : vector<40x256xf32>, vector<256x256xf32>, vector<40x256xf32> -> vector<40x256xf32>
    %c0_52 = arith.constant 0 : index
    %c0_53 = arith.constant 0 : index
    %109 = vector.load %arg7[%c0_52, %c0_53] : memref<1x256xf32, #tpu.memory_space<vmem>>, vector<1x256xf32>
    %110 = vector.broadcast %109 : vector<1x256xf32> to vector<40x256xf32>
    %111 = arith.addf %108, %110 : vector<40x256xf32>
    %cst_54 = arith.constant 0.000000e+00 : f32
    %112 = vector.broadcast %cst_54 : f32 to vector<40x256xf32>
    %113 = arith.maximumf %111, %112 : vector<40x256xf32>
    %cst_55 = arith.constant 0.000000e+00 : f32
    %114 = vector.broadcast %cst_55 : f32 to vector<56x448xf32>
    %c0_56 = arith.constant 0 : index
    %c0_57 = arith.constant 0 : index
    %115 = vector.load %arg25[%c0_56, %c0_57] : memref<56x448xf32, #tpu.memory_space<vmem>>, vector<56x448xf32>
    tpu.vector_store %arg25[%c0_56, %c0_57], %114 {strides = array<i32>} : memref<56x448xf32, #tpu.memory_space<vmem>>, vector<56x448xf32>,
    %c8_58 = arith.constant 8 : index
    %c128_59 = arith.constant 128 : index
    %116 = vector.load %arg25[%c8_58, %c128_59] : memref<56x448xf32, #tpu.memory_space<vmem>>, vector<40x256xf32>
    tpu.vector_store %arg25[%c8_58, %c128_59], %113 {strides = array<i32>} : memref<56x448xf32, #tpu.memory_space<vmem>>, vector<40x256xf32>,
    %cst_60 = arith.constant 0.000000e+00 : f32
    %117 = vector.broadcast %cst_60 : f32 to vector<40x256xf32>
    %c7_61 = arith.constant 7 : index
    %c64_62 = arith.constant 64 : index
    %118 = vector.load %arg25[%c7_61, %c64_62] : memref<56x448xf32, #tpu.memory_space<vmem>>, vector<40x256xf32>
    %cst_63 = arith.constant 0.000000e+00 : f32
    %119 = vector.shape_cast %26 : vector<40x1xi1> to vector<40x1xi1>
    %120 = vector.broadcast %119 : vector<40x1xi1> to vector<40x256xi1>
    %121 = vector.broadcast %cst_63 : f32 to vector<40x256xf32>
    %122 = arith.select %120, %118, %121 : vector<40x256xi1>, vector<40x256xf32>
    %c0_64 = arith.constant 0 : index
    %c0_65 = arith.constant 0 : index
    %123 = vector.load %arg8[%c0_64, %c0_65] : memref<9x256xf32, #tpu.memory_space<vmem>>, vector<1x256xf32>
    %124 = vector.broadcast %123 : vector<1x256xf32> to vector<40x256xf32>
    %125 = arith.mulf %122, %124 : vector<40x256xf32>
    %126 = arith.addf %117, %125 : vector<40x256xf32>
    %c7_66 = arith.constant 7 : index
    %c128_67 = arith.constant 128 : index
    %127 = vector.load %arg25[%c7_66, %c128_67] : memref<56x448xf32, #tpu.memory_space<vmem>>, vector<40x256xf32>
    %cst_68 = arith.constant 0.000000e+00 : f32
    %128 = vector.shape_cast %26 : vector<40x1xi1> to vector<40x1xi1>
    %129 = vector.broadcast %128 : vector<40x1xi1> to vector<40x256xi1>
    %130 = vector.broadcast %cst_68 : f32 to vector<40x256xf32>
    %131 = arith.select %129, %127, %130 : vector<40x256xi1>, vector<40x256xf32>
    %c1_69 = arith.constant 1 : index
    %c0_70 = arith.constant 0 : index
    %132 = vector.load %arg8[%c1_69, %c0_70] : memref<9x256xf32, #tpu.memory_space<vmem>>, vector<1x256xf32>
    %133 = vector.broadcast %132 : vector<1x256xf32> to vector<40x256xf32>
    %134 = arith.mulf %131, %133 : vector<40x256xf32>
    %135 = arith.addf %126, %134 : vector<40x256xf32>
    %c7_71 = arith.constant 7 : index
    %c192_72 = arith.constant 192 : index
    %136 = vector.load %arg25[%c7_71, %c192_72] : memref<56x448xf32, #tpu.memory_space<vmem>>, vector<40x256xf32>
    %cst_73 = arith.constant 0.000000e+00 : f32
    %137 = vector.shape_cast %26 : vector<40x1xi1> to vector<40x1xi1>
    %138 = vector.broadcast %137 : vector<40x1xi1> to vector<40x256xi1>
    %139 = vector.broadcast %cst_73 : f32 to vector<40x256xf32>
    %140 = arith.select %138, %136, %139 : vector<40x256xi1>, vector<40x256xf32>
    %c2_74 = arith.constant 2 : index
    %c0_75 = arith.constant 0 : index
    %141 = vector.load %arg8[%c2_74, %c0_75] : memref<9x256xf32, #tpu.memory_space<vmem>>, vector<1x256xf32>
    %142 = vector.broadcast %141 : vector<1x256xf32> to vector<40x256xf32>
    %143 = arith.mulf %140, %142 : vector<40x256xf32>
    %144 = arith.addf %135, %143 : vector<40x256xf32>
    %c8_76 = arith.constant 8 : index
    %c64_77 = arith.constant 64 : index
    %145 = vector.load %arg25[%c8_76, %c64_77] : memref<56x448xf32, #tpu.memory_space<vmem>>, vector<40x256xf32>
    %c3_78 = arith.constant 3 : index
    %c0_79 = arith.constant 0 : index
    %146 = vector.load %arg8[%c3_78, %c0_79] : memref<9x256xf32, #tpu.memory_space<vmem>>, vector<1x256xf32>
    %147 = vector.broadcast %146 : vector<1x256xf32> to vector<40x256xf32>
    %148 = arith.mulf %145, %147 : vector<40x256xf32>
    %149 = arith.addf %144, %148 : vector<40x256xf32>
    %c8_80 = arith.constant 8 : index
    %c128_81 = arith.constant 128 : index
    %150 = vector.load %arg25[%c8_80, %c128_81] : memref<56x448xf32, #tpu.memory_space<vmem>>, vector<40x256xf32>
    %c4_82 = arith.constant 4 : index
    %c0_83 = arith.constant 0 : index
    %151 = vector.load %arg8[%c4_82, %c0_83] : memref<9x256xf32, #tpu.memory_space<vmem>>, vector<1x256xf32>
    %152 = vector.broadcast %151 : vector<1x256xf32> to vector<40x256xf32>
    %153 = arith.mulf %150, %152 : vector<40x256xf32>
    %154 = arith.addf %149, %153 : vector<40x256xf32>
    %c8_84 = arith.constant 8 : index
    %c192_85 = arith.constant 192 : index
    %155 = vector.load %arg25[%c8_84, %c192_85] : memref<56x448xf32, #tpu.memory_space<vmem>>, vector<40x256xf32>
    %c5_86 = arith.constant 5 : index
    %c0_87 = arith.constant 0 : index
    %156 = vector.load %arg8[%c5_86, %c0_87] : memref<9x256xf32, #tpu.memory_space<vmem>>, vector<1x256xf32>
    %157 = vector.broadcast %156 : vector<1x256xf32> to vector<40x256xf32>
    %158 = arith.mulf %155, %157 : vector<40x256xf32>
    %159 = arith.addf %154, %158 : vector<40x256xf32>
    %c9_88 = arith.constant 9 : index
    %c64_89 = arith.constant 64 : index
    %160 = vector.load %arg25[%c9_88, %c64_89] : memref<56x448xf32, #tpu.memory_space<vmem>>, vector<40x256xf32>
    %cst_90 = arith.constant 0.000000e+00 : f32
    %161 = vector.shape_cast %28 : vector<40x1xi1> to vector<40x1xi1>
    %162 = vector.broadcast %161 : vector<40x1xi1> to vector<40x256xi1>
    %163 = vector.broadcast %cst_90 : f32 to vector<40x256xf32>
    %164 = arith.select %162, %160, %163 : vector<40x256xi1>, vector<40x256xf32>
    %c6_91 = arith.constant 6 : index
    %c0_92 = arith.constant 0 : index
    %165 = vector.load %arg8[%c6_91, %c0_92] : memref<9x256xf32, #tpu.memory_space<vmem>>, vector<1x256xf32>
    %166 = vector.broadcast %165 : vector<1x256xf32> to vector<40x256xf32>
    %167 = arith.mulf %164, %166 : vector<40x256xf32>
    %168 = arith.addf %159, %167 : vector<40x256xf32>
    %c9_93 = arith.constant 9 : index
    %c128_94 = arith.constant 128 : index
    %169 = vector.load %arg25[%c9_93, %c128_94] : memref<56x448xf32, #tpu.memory_space<vmem>>, vector<40x256xf32>
    %cst_95 = arith.constant 0.000000e+00 : f32
    %170 = vector.shape_cast %28 : vector<40x1xi1> to vector<40x1xi1>
    %171 = vector.broadcast %170 : vector<40x1xi1> to vector<40x256xi1>
    %172 = vector.broadcast %cst_95 : f32 to vector<40x256xf32>
    %173 = arith.select %171, %169, %172 : vector<40x256xi1>, vector<40x256xf32>
    %c7_96 = arith.constant 7 : index
    %c0_97 = arith.constant 0 : index
    %174 = vector.load %arg8[%c7_96, %c0_97] : memref<9x256xf32, #tpu.memory_space<vmem>>, vector<1x256xf32>
    %175 = vector.broadcast %174 : vector<1x256xf32> to vector<40x256xf32>
    %176 = arith.mulf %173, %175 : vector<40x256xf32>
    %177 = arith.addf %168, %176 : vector<40x256xf32>
    %c9_98 = arith.constant 9 : index
    %c192_99 = arith.constant 192 : index
    %178 = vector.load %arg25[%c9_98, %c192_99] : memref<56x448xf32, #tpu.memory_space<vmem>>, vector<40x256xf32>
    %cst_100 = arith.constant 0.000000e+00 : f32
    %179 = vector.shape_cast %28 : vector<40x1xi1> to vector<40x1xi1>
    %180 = vector.broadcast %179 : vector<40x1xi1> to vector<40x256xi1>
    %181 = vector.broadcast %cst_100 : f32 to vector<40x256xf32>
    %182 = arith.select %180, %178, %181 : vector<40x256xi1>, vector<40x256xf32>
    %c8_101 = arith.constant 8 : index
    %c0_102 = arith.constant 0 : index
    %183 = vector.load %arg8[%c8_101, %c0_102] : memref<9x256xf32, #tpu.memory_space<vmem>>, vector<1x256xf32>
    %184 = vector.broadcast %183 : vector<1x256xf32> to vector<40x256xf32>
    %185 = arith.mulf %182, %184 : vector<40x256xf32>
    %186 = arith.addf %177, %185 : vector<40x256xf32>
    %c0_103 = arith.constant 0 : index
    %c0_104 = arith.constant 0 : index
    %187 = vector.load %arg9[%c0_103, %c0_104] : memref<1x256xf32, #tpu.memory_space<vmem>>, vector<1x256xf32>
    %188 = vector.broadcast %187 : vector<1x256xf32> to vector<40x256xf32>
    %189 = arith.addf %186, %188 : vector<40x256xf32>
    %cst_105 = arith.constant 0.000000e+00 : f32
    %190 = vector.broadcast %cst_105 : f32 to vector<40x256xf32>
    %191 = arith.maximumf %189, %190 : vector<40x256xf32>
    %c0_106 = arith.constant 0 : index
    %c0_107 = arith.constant 0 : index
    %192 = vector.load %arg10[%c0_106, %c0_107] : memref<256x256xf32, #tpu.memory_space<vmem>>, vector<256x256xf32>
    %cst_108 = arith.constant dense<0.000000e+00> : vector<40x256xf32>
    %193 = tpu.matmul %191, %192, %cst_108 {dimension_numbers = #tpu.dot_dimension_numbers<[1], [0], [0], [1], [0, 0, 1, 1], [], []>} : vector<40x256xf32>, vector<256x256xf32>, vector<40x256xf32> -> vector<40x256xf32>
    %c0_109 = arith.constant 0 : index
    %c0_110 = arith.constant 0 : index
    %194 = vector.load %arg11[%c0_109, %c0_110] : memref<1x256xf32, #tpu.memory_space<vmem>>, vector<1x256xf32>
    %195 = vector.broadcast %194 : vector<1x256xf32> to vector<40x256xf32>
    %196 = arith.addf %193, %195 : vector<40x256xf32>
    %cst_111 = arith.constant 0.000000e+00 : f32
    %197 = vector.broadcast %cst_111 : f32 to vector<40x256xf32>
    %198 = arith.maximumf %196, %197 : vector<40x256xf32>
    %cst_112 = arith.constant 0.000000e+00 : f32
    %199 = vector.broadcast %cst_112 : f32 to vector<56x448xf32>
    %c0_113 = arith.constant 0 : index
    %c0_114 = arith.constant 0 : index
    %200 = vector.load %arg25[%c0_113, %c0_114] : memref<56x448xf32, #tpu.memory_space<vmem>>, vector<56x448xf32>
    tpu.vector_store %arg25[%c0_113, %c0_114], %199 {strides = array<i32>} : memref<56x448xf32, #tpu.memory_space<vmem>>, vector<56x448xf32>,
    %c8_115 = arith.constant 8 : index
    %c128_116 = arith.constant 128 : index
    %201 = vector.load %arg25[%c8_115, %c128_116] : memref<56x448xf32, #tpu.memory_space<vmem>>, vector<40x256xf32>
    tpu.vector_store %arg25[%c8_115, %c128_116], %198 {strides = array<i32>} : memref<56x448xf32, #tpu.memory_space<vmem>>, vector<40x256xf32>,
    %cst_117 = arith.constant 0.000000e+00 : f32
    %202 = vector.broadcast %cst_117 : f32 to vector<40x256xf32>
    %c7_118 = arith.constant 7 : index
    %c64_119 = arith.constant 64 : index
    %203 = vector.load %arg25[%c7_118, %c64_119] : memref<56x448xf32, #tpu.memory_space<vmem>>, vector<40x256xf32>
    %cst_120 = arith.constant 0.000000e+00 : f32
    %204 = vector.shape_cast %26 : vector<40x1xi1> to vector<40x1xi1>
    %205 = vector.broadcast %204 : vector<40x1xi1> to vector<40x256xi1>
    %206 = vector.broadcast %cst_120 : f32 to vector<40x256xf32>
    %207 = arith.select %205, %203, %206 : vector<40x256xi1>, vector<40x256xf32>
    %c0_121 = arith.constant 0 : index
    %c0_122 = arith.constant 0 : index
    %208 = vector.load %arg12[%c0_121, %c0_122] : memref<9x256xf32, #tpu.memory_space<vmem>>, vector<1x256xf32>
    %209 = vector.broadcast %208 : vector<1x256xf32> to vector<40x256xf32>
    %210 = arith.mulf %207, %209 : vector<40x256xf32>
    %211 = arith.addf %202, %210 : vector<40x256xf32>
    %c7_123 = arith.constant 7 : index
    %c128_124 = arith.constant 128 : index
    %212 = vector.load %arg25[%c7_123, %c128_124] : memref<56x448xf32, #tpu.memory_space<vmem>>, vector<40x256xf32>
    %cst_125 = arith.constant 0.000000e+00 : f32
    %213 = vector.shape_cast %26 : vector<40x1xi1> to vector<40x1xi1>
    %214 = vector.broadcast %213 : vector<40x1xi1> to vector<40x256xi1>
    %215 = vector.broadcast %cst_125 : f32 to vector<40x256xf32>
    %216 = arith.select %214, %212, %215 : vector<40x256xi1>, vector<40x256xf32>
    %c1_126 = arith.constant 1 : index
    %c0_127 = arith.constant 0 : index
    %217 = vector.load %arg12[%c1_126, %c0_127] : memref<9x256xf32, #tpu.memory_space<vmem>>, vector<1x256xf32>
    %218 = vector.broadcast %217 : vector<1x256xf32> to vector<40x256xf32>
    %219 = arith.mulf %216, %218 : vector<40x256xf32>
    %220 = arith.addf %211, %219 : vector<40x256xf32>
    %c7_128 = arith.constant 7 : index
    %c192_129 = arith.constant 192 : index
    %221 = vector.load %arg25[%c7_128, %c192_129] : memref<56x448xf32, #tpu.memory_space<vmem>>, vector<40x256xf32>
    %cst_130 = arith.constant 0.000000e+00 : f32
    %222 = vector.shape_cast %26 : vector<40x1xi1> to vector<40x1xi1>
    %223 = vector.broadcast %222 : vector<40x1xi1> to vector<40x256xi1>
    %224 = vector.broadcast %cst_130 : f32 to vector<40x256xf32>
    %225 = arith.select %223, %221, %224 : vector<40x256xi1>, vector<40x256xf32>
    %c2_131 = arith.constant 2 : index
    %c0_132 = arith.constant 0 : index
    %226 = vector.load %arg12[%c2_131, %c0_132] : memref<9x256xf32, #tpu.memory_space<vmem>>, vector<1x256xf32>
    %227 = vector.broadcast %226 : vector<1x256xf32> to vector<40x256xf32>
    %228 = arith.mulf %225, %227 : vector<40x256xf32>
    %229 = arith.addf %220, %228 : vector<40x256xf32>
    %c8_133 = arith.constant 8 : index
    %c64_134 = arith.constant 64 : index
    %230 = vector.load %arg25[%c8_133, %c64_134] : memref<56x448xf32, #tpu.memory_space<vmem>>, vector<40x256xf32>
    %c3_135 = arith.constant 3 : index
    %c0_136 = arith.constant 0 : index
    %231 = vector.load %arg12[%c3_135, %c0_136] : memref<9x256xf32, #tpu.memory_space<vmem>>, vector<1x256xf32>
    %232 = vector.broadcast %231 : vector<1x256xf32> to vector<40x256xf32>
    %233 = arith.mulf %230, %232 : vector<40x256xf32>
    %234 = arith.addf %229, %233 : vector<40x256xf32>
    %c8_137 = arith.constant 8 : index
    %c128_138 = arith.constant 128 : index
    %235 = vector.load %arg25[%c8_137, %c128_138] : memref<56x448xf32, #tpu.memory_space<vmem>>, vector<40x256xf32>
    %c4_139 = arith.constant 4 : index
    %c0_140 = arith.constant 0 : index
    %236 = vector.load %arg12[%c4_139, %c0_140] : memref<9x256xf32, #tpu.memory_space<vmem>>, vector<1x256xf32>
    %237 = vector.broadcast %236 : vector<1x256xf32> to vector<40x256xf32>
    %238 = arith.mulf %235, %237 : vector<40x256xf32>
    %239 = arith.addf %234, %238 : vector<40x256xf32>
    %c8_141 = arith.constant 8 : index
    %c192_142 = arith.constant 192 : index
    %240 = vector.load %arg25[%c8_141, %c192_142] : memref<56x448xf32, #tpu.memory_space<vmem>>, vector<40x256xf32>
    %c5_143 = arith.constant 5 : index
    %c0_144 = arith.constant 0 : index
    %241 = vector.load %arg12[%c5_143, %c0_144] : memref<9x256xf32, #tpu.memory_space<vmem>>, vector<1x256xf32>
    %242 = vector.broadcast %241 : vector<1x256xf32> to vector<40x256xf32>
    %243 = arith.mulf %240, %242 : vector<40x256xf32>
    %244 = arith.addf %239, %243 : vector<40x256xf32>
    %c9_145 = arith.constant 9 : index
    %c64_146 = arith.constant 64 : index
    %245 = vector.load %arg25[%c9_145, %c64_146] : memref<56x448xf32, #tpu.memory_space<vmem>>, vector<40x256xf32>
    %cst_147 = arith.constant 0.000000e+00 : f32
    %246 = vector.shape_cast %28 : vector<40x1xi1> to vector<40x1xi1>
    %247 = vector.broadcast %246 : vector<40x1xi1> to vector<40x256xi1>
    %248 = vector.broadcast %cst_147 : f32 to vector<40x256xf32>
    %249 = arith.select %247, %245, %248 : vector<40x256xi1>, vector<40x256xf32>
    %c6_148 = arith.constant 6 : index
    %c0_149 = arith.constant 0 : index
    %250 = vector.load %arg12[%c6_148, %c0_149] : memref<9x256xf32, #tpu.memory_space<vmem>>, vector<1x256xf32>
    %251 = vector.broadcast %250 : vector<1x256xf32> to vector<40x256xf32>
    %252 = arith.mulf %249, %251 : vector<40x256xf32>
    %253 = arith.addf %244, %252 : vector<40x256xf32>
    %c9_150 = arith.constant 9 : index
    %c128_151 = arith.constant 128 : index
    %254 = vector.load %arg25[%c9_150, %c128_151] : memref<56x448xf32, #tpu.memory_space<vmem>>, vector<40x256xf32>
    %cst_152 = arith.constant 0.000000e+00 : f32
    %255 = vector.shape_cast %28 : vector<40x1xi1> to vector<40x1xi1>
    %256 = vector.broadcast %255 : vector<40x1xi1> to vector<40x256xi1>
    %257 = vector.broadcast %cst_152 : f32 to vector<40x256xf32>
    %258 = arith.select %256, %254, %257 : vector<40x256xi1>, vector<40x256xf32>
    %c7_153 = arith.constant 7 : index
    %c0_154 = arith.constant 0 : index
    %259 = vector.load %arg12[%c7_153, %c0_154] : memref<9x256xf32, #tpu.memory_space<vmem>>, vector<1x256xf32>
    %260 = vector.broadcast %259 : vector<1x256xf32> to vector<40x256xf32>
    %261 = arith.mulf %258, %260 : vector<40x256xf32>
    %262 = arith.addf %253, %261 : vector<40x256xf32>
    %c9_155 = arith.constant 9 : index
    %c192_156 = arith.constant 192 : index
    %263 = vector.load %arg25[%c9_155, %c192_156] : memref<56x448xf32, #tpu.memory_space<vmem>>, vector<40x256xf32>
    %cst_157 = arith.constant 0.000000e+00 : f32
    %264 = vector.shape_cast %28 : vector<40x1xi1> to vector<40x1xi1>
    %265 = vector.broadcast %264 : vector<40x1xi1> to vector<40x256xi1>
    %266 = vector.broadcast %cst_157 : f32 to vector<40x256xf32>
    %267 = arith.select %265, %263, %266 : vector<40x256xi1>, vector<40x256xf32>
    %c8_158 = arith.constant 8 : index
    %c0_159 = arith.constant 0 : index
    %268 = vector.load %arg12[%c8_158, %c0_159] : memref<9x256xf32, #tpu.memory_space<vmem>>, vector<1x256xf32>
    %269 = vector.broadcast %268 : vector<1x256xf32> to vector<40x256xf32>
    %270 = arith.mulf %267, %269 : vector<40x256xf32>
    %271 = arith.addf %262, %270 : vector<40x256xf32>
    %c0_160 = arith.constant 0 : index
    %c0_161 = arith.constant 0 : index
    %272 = vector.load %arg13[%c0_160, %c0_161] : memref<1x256xf32, #tpu.memory_space<vmem>>, vector<1x256xf32>
    %273 = vector.broadcast %272 : vector<1x256xf32> to vector<40x256xf32>
    %274 = arith.addf %271, %273 : vector<40x256xf32>
    %cst_162 = arith.constant 0.000000e+00 : f32
    %275 = vector.broadcast %cst_162 : f32 to vector<40x256xf32>
    %276 = arith.maximumf %274, %275 : vector<40x256xf32>
    %c0_163 = arith.constant 0 : index
    %c0_164 = arith.constant 0 : index
    %277 = vector.load %arg14[%c0_163, %c0_164] : memref<256x256xf32, #tpu.memory_space<vmem>>, vector<256x256xf32>
    %cst_165 = arith.constant dense<0.000000e+00> : vector<40x256xf32>
    %278 = tpu.matmul %276, %277, %cst_165 {dimension_numbers = #tpu.dot_dimension_numbers<[1], [0], [0], [1], [0, 0, 1, 1], [], []>} : vector<40x256xf32>, vector<256x256xf32>, vector<40x256xf32> -> vector<40x256xf32>
    %c0_166 = arith.constant 0 : index
    %c0_167 = arith.constant 0 : index
    %279 = vector.load %arg15[%c0_166, %c0_167] : memref<1x256xf32, #tpu.memory_space<vmem>>, vector<1x256xf32>
    %280 = vector.broadcast %279 : vector<1x256xf32> to vector<40x256xf32>
    %281 = arith.addf %278, %280 : vector<40x256xf32>
    %cst_168 = arith.constant 0.000000e+00 : f32
    %282 = vector.broadcast %cst_168 : f32 to vector<40x256xf32>
    %283 = arith.maximumf %281, %282 : vector<40x256xf32>
    %cst_169 = arith.constant 0.000000e+00 : f32
    %284 = vector.broadcast %cst_169 : f32 to vector<56x448xf32>
    %c0_170 = arith.constant 0 : index
    %c0_171 = arith.constant 0 : index
    %285 = vector.load %arg25[%c0_170, %c0_171] : memref<56x448xf32, #tpu.memory_space<vmem>>, vector<56x448xf32>
    tpu.vector_store %arg25[%c0_170, %c0_171], %284 {strides = array<i32>} : memref<56x448xf32, #tpu.memory_space<vmem>>, vector<56x448xf32>,
    %c8_172 = arith.constant 8 : index
    %c128_173 = arith.constant 128 : index
    %286 = vector.load %arg25[%c8_172, %c128_173] : memref<56x448xf32, #tpu.memory_space<vmem>>, vector<40x256xf32>
    tpu.vector_store %arg25[%c8_172, %c128_173], %283 {strides = array<i32>} : memref<56x448xf32, #tpu.memory_space<vmem>>, vector<40x256xf32>,
    %cst_174 = arith.constant 0.000000e+00 : f32
    %287 = vector.broadcast %cst_174 : f32 to vector<40x256xf32>
    %c7_175 = arith.constant 7 : index
    %c64_176 = arith.constant 64 : index
    %288 = vector.load %arg25[%c7_175, %c64_176] : memref<56x448xf32, #tpu.memory_space<vmem>>, vector<40x256xf32>
    %cst_177 = arith.constant 0.000000e+00 : f32
    %289 = vector.shape_cast %26 : vector<40x1xi1> to vector<40x1xi1>
    %290 = vector.broadcast %289 : vector<40x1xi1> to vector<40x256xi1>
    %291 = vector.broadcast %cst_177 : f32 to vector<40x256xf32>
    %292 = arith.select %290, %288, %291 : vector<40x256xi1>, vector<40x256xf32>
    %c0_178 = arith.constant 0 : index
    %c0_179 = arith.constant 0 : index
    %293 = vector.load %arg16[%c0_178, %c0_179] : memref<9x256xf32, #tpu.memory_space<vmem>>, vector<1x256xf32>
    %294 = vector.broadcast %293 : vector<1x256xf32> to vector<40x256xf32>
    %295 = arith.mulf %292, %294 : vector<40x256xf32>
    %296 = arith.addf %287, %295 : vector<40x256xf32>
    %c7_180 = arith.constant 7 : index
    %c128_181 = arith.constant 128 : index
    %297 = vector.load %arg25[%c7_180, %c128_181] : memref<56x448xf32, #tpu.memory_space<vmem>>, vector<40x256xf32>
    %cst_182 = arith.constant 0.000000e+00 : f32
    %298 = vector.shape_cast %26 : vector<40x1xi1> to vector<40x1xi1>
    %299 = vector.broadcast %298 : vector<40x1xi1> to vector<40x256xi1>
    %300 = vector.broadcast %cst_182 : f32 to vector<40x256xf32>
    %301 = arith.select %299, %297, %300 : vector<40x256xi1>, vector<40x256xf32>
    %c1_183 = arith.constant 1 : index
    %c0_184 = arith.constant 0 : index
    %302 = vector.load %arg16[%c1_183, %c0_184] : memref<9x256xf32, #tpu.memory_space<vmem>>, vector<1x256xf32>
    %303 = vector.broadcast %302 : vector<1x256xf32> to vector<40x256xf32>
    %304 = arith.mulf %301, %303 : vector<40x256xf32>
    %305 = arith.addf %296, %304 : vector<40x256xf32>
    %c7_185 = arith.constant 7 : index
    %c192_186 = arith.constant 192 : index
    %306 = vector.load %arg25[%c7_185, %c192_186] : memref<56x448xf32, #tpu.memory_space<vmem>>, vector<40x256xf32>
    %cst_187 = arith.constant 0.000000e+00 : f32
    %307 = vector.shape_cast %26 : vector<40x1xi1> to vector<40x1xi1>
    %308 = vector.broadcast %307 : vector<40x1xi1> to vector<40x256xi1>
    %309 = vector.broadcast %cst_187 : f32 to vector<40x256xf32>
    %310 = arith.select %308, %306, %309 : vector<40x256xi1>, vector<40x256xf32>
    %c2_188 = arith.constant 2 : index
    %c0_189 = arith.constant 0 : index
    %311 = vector.load %arg16[%c2_188, %c0_189] : memref<9x256xf32, #tpu.memory_space<vmem>>, vector<1x256xf32>
    %312 = vector.broadcast %311 : vector<1x256xf32> to vector<40x256xf32>
    %313 = arith.mulf %310, %312 : vector<40x256xf32>
    %314 = arith.addf %305, %313 : vector<40x256xf32>
    %c8_190 = arith.constant 8 : index
    %c64_191 = arith.constant 64 : index
    %315 = vector.load %arg25[%c8_190, %c64_191] : memref<56x448xf32, #tpu.memory_space<vmem>>, vector<40x256xf32>
    %c3_192 = arith.constant 3 : index
    %c0_193 = arith.constant 0 : index
    %316 = vector.load %arg16[%c3_192, %c0_193] : memref<9x256xf32, #tpu.memory_space<vmem>>, vector<1x256xf32>
    %317 = vector.broadcast %316 : vector<1x256xf32> to vector<40x256xf32>
    %318 = arith.mulf %315, %317 : vector<40x256xf32>
    %319 = arith.addf %314, %318 : vector<40x256xf32>
    %c8_194 = arith.constant 8 : index
    %c128_195 = arith.constant 128 : index
    %320 = vector.load %arg25[%c8_194, %c128_195] : memref<56x448xf32, #tpu.memory_space<vmem>>, vector<40x256xf32>
    %c4_196 = arith.constant 4 : index
    %c0_197 = arith.constant 0 : index
    %321 = vector.load %arg16[%c4_196, %c0_197] : memref<9x256xf32, #tpu.memory_space<vmem>>, vector<1x256xf32>
    %322 = vector.broadcast %321 : vector<1x256xf32> to vector<40x256xf32>
    %323 = arith.mulf %320, %322 : vector<40x256xf32>
    %324 = arith.addf %319, %323 : vector<40x256xf32>
    %c8_198 = arith.constant 8 : index
    %c192_199 = arith.constant 192 : index
    %325 = vector.load %arg25[%c8_198, %c192_199] : memref<56x448xf32, #tpu.memory_space<vmem>>, vector<40x256xf32>
    %c5_200 = arith.constant 5 : index
    %c0_201 = arith.constant 0 : index
    %326 = vector.load %arg16[%c5_200, %c0_201] : memref<9x256xf32, #tpu.memory_space<vmem>>, vector<1x256xf32>
    %327 = vector.broadcast %326 : vector<1x256xf32> to vector<40x256xf32>
    %328 = arith.mulf %325, %327 : vector<40x256xf32>
    %329 = arith.addf %324, %328 : vector<40x256xf32>
    %c9_202 = arith.constant 9 : index
    %c64_203 = arith.constant 64 : index
    %330 = vector.load %arg25[%c9_202, %c64_203] : memref<56x448xf32, #tpu.memory_space<vmem>>, vector<40x256xf32>
    %cst_204 = arith.constant 0.000000e+00 : f32
    %331 = vector.shape_cast %28 : vector<40x1xi1> to vector<40x1xi1>
    %332 = vector.broadcast %331 : vector<40x1xi1> to vector<40x256xi1>
    %333 = vector.broadcast %cst_204 : f32 to vector<40x256xf32>
    %334 = arith.select %332, %330, %333 : vector<40x256xi1>, vector<40x256xf32>
    %c6_205 = arith.constant 6 : index
    %c0_206 = arith.constant 0 : index
    %335 = vector.load %arg16[%c6_205, %c0_206] : memref<9x256xf32, #tpu.memory_space<vmem>>, vector<1x256xf32>
    %336 = vector.broadcast %335 : vector<1x256xf32> to vector<40x256xf32>
    %337 = arith.mulf %334, %336 : vector<40x256xf32>
    %338 = arith.addf %329, %337 : vector<40x256xf32>
    %c9_207 = arith.constant 9 : index
    %c128_208 = arith.constant 128 : index
    %339 = vector.load %arg25[%c9_207, %c128_208] : memref<56x448xf32, #tpu.memory_space<vmem>>, vector<40x256xf32>
    %cst_209 = arith.constant 0.000000e+00 : f32
    %340 = vector.shape_cast %28 : vector<40x1xi1> to vector<40x1xi1>
    %341 = vector.broadcast %340 : vector<40x1xi1> to vector<40x256xi1>
    %342 = vector.broadcast %cst_209 : f32 to vector<40x256xf32>
    %343 = arith.select %341, %339, %342 : vector<40x256xi1>, vector<40x256xf32>
    %c7_210 = arith.constant 7 : index
    %c0_211 = arith.constant 0 : index
    %344 = vector.load %arg16[%c7_210, %c0_211] : memref<9x256xf32, #tpu.memory_space<vmem>>, vector<1x256xf32>
    %345 = vector.broadcast %344 : vector<1x256xf32> to vector<40x256xf32>
    %346 = arith.mulf %343, %345 : vector<40x256xf32>
    %347 = arith.addf %338, %346 : vector<40x256xf32>
    %c9_212 = arith.constant 9 : index
    %c192_213 = arith.constant 192 : index
    %348 = vector.load %arg25[%c9_212, %c192_213] : memref<56x448xf32, #tpu.memory_space<vmem>>, vector<40x256xf32>
    %cst_214 = arith.constant 0.000000e+00 : f32
    %349 = vector.shape_cast %28 : vector<40x1xi1> to vector<40x1xi1>
    %350 = vector.broadcast %349 : vector<40x1xi1> to vector<40x256xi1>
    %351 = vector.broadcast %cst_214 : f32 to vector<40x256xf32>
    %352 = arith.select %350, %348, %351 : vector<40x256xi1>, vector<40x256xf32>
    %c8_215 = arith.constant 8 : index
    %c0_216 = arith.constant 0 : index
    %353 = vector.load %arg16[%c8_215, %c0_216] : memref<9x256xf32, #tpu.memory_space<vmem>>, vector<1x256xf32>
    %354 = vector.broadcast %353 : vector<1x256xf32> to vector<40x256xf32>
    %355 = arith.mulf %352, %354 : vector<40x256xf32>
    %356 = arith.addf %347, %355 : vector<40x256xf32>
    %c0_217 = arith.constant 0 : index
    %c0_218 = arith.constant 0 : index
    %357 = vector.load %arg17[%c0_217, %c0_218] : memref<1x256xf32, #tpu.memory_space<vmem>>, vector<1x256xf32>
    %358 = vector.broadcast %357 : vector<1x256xf32> to vector<40x256xf32>
    %359 = arith.addf %356, %358 : vector<40x256xf32>
    %cst_219 = arith.constant 0.000000e+00 : f32
    %360 = vector.broadcast %cst_219 : f32 to vector<40x256xf32>
    %361 = arith.maximumf %359, %360 : vector<40x256xf32>
    %c0_220 = arith.constant 0 : index
    %c0_221 = arith.constant 0 : index
    %362 = vector.load %arg18[%c0_220, %c0_221] : memref<256x256xf32, #tpu.memory_space<vmem>>, vector<256x256xf32>
    %cst_222 = arith.constant dense<0.000000e+00> : vector<40x256xf32>
    %363 = tpu.matmul %361, %362, %cst_222 {dimension_numbers = #tpu.dot_dimension_numbers<[1], [0], [0], [1], [0, 0, 1, 1], [], []>} : vector<40x256xf32>, vector<256x256xf32>, vector<40x256xf32> -> vector<40x256xf32>
    %c0_223 = arith.constant 0 : index
    %c0_224 = arith.constant 0 : index
    %364 = vector.load %arg19[%c0_223, %c0_224] : memref<1x256xf32, #tpu.memory_space<vmem>>, vector<1x256xf32>
    %365 = vector.broadcast %364 : vector<1x256xf32> to vector<40x256xf32>
    %366 = arith.addf %363, %365 : vector<40x256xf32>
    %cst_225 = arith.constant 0.000000e+00 : f32
    %367 = vector.broadcast %cst_225 : f32 to vector<40x256xf32>
    %368 = arith.maximumf %366, %367 : vector<40x256xf32>
    %c0_226 = arith.constant 0 : index
    %c0_227 = arith.constant 0 : index
    %369 = vector.load %arg1[%c0_226, %c0_227] : memref<2x40xf32, #tpu.memory_space<vmem>>, vector<2x40xf32>
    %cst_228 = arith.constant dense<0.000000e+00> : vector<2x256xf32>
    %370 = tpu.matmul %369, %368, %cst_228 {dimension_numbers = #tpu.dot_dimension_numbers<[1], [0], [0], [1], [0, 0, 1, 1], [], []>} : vector<2x40xf32>, vector<40x256xf32>, vector<2x256xf32> -> vector<2x256xf32>
    %c0_229 = arith.constant 0 : index
    %c0_230 = arith.constant 0 : index
    %371 = vector.load %arg20[%c0_229, %c0_230] : memref<256x64xf32, #tpu.memory_space<vmem>>, vector<256x64xf32>
    %cst_231 = arith.constant dense<0.000000e+00> : vector<2x64xf32>
    %372 = tpu.matmul %370, %371, %cst_231 {dimension_numbers = #tpu.dot_dimension_numbers<[1], [0], [0], [1], [0, 0, 1, 1], [], []>} : vector<2x256xf32>, vector<256x64xf32>, vector<2x64xf32> -> vector<2x64xf32>
    %c0_232 = arith.constant 0 : index
    %c0_233 = arith.constant 0 : index
    %373 = vector.load %arg21[%c0_232, %c0_233] : memref<1x64xf32, #tpu.memory_space<vmem>>, vector<1x64xf32>
    %374 = vector.broadcast %373 : vector<1x64xf32> to vector<2x64xf32>
    %375 = arith.addf %372, %374 : vector<2x64xf32>
    %cst_234 = arith.constant 0.000000e+00 : f32
    %376 = vector.broadcast %cst_234 : f32 to vector<2x64xf32>
    %377 = arith.maximumf %375, %376 : vector<2x64xf32>
    %c0_235 = arith.constant 0 : index
    %c0_236 = arith.constant 0 : index
    %378 = vector.load %arg22[%c0_235, %c0_236] : memref<64x12xf32, #tpu.memory_space<vmem>>, vector<64x12xf32>
    %cst_237 = arith.constant dense<0.000000e+00> : vector<2x12xf32>
    %379 = tpu.matmul %377, %378, %cst_237 {dimension_numbers = #tpu.dot_dimension_numbers<[1], [0], [0], [1], [0, 0, 1, 1], [], []>} : vector<2x64xf32>, vector<64x12xf32>, vector<2x12xf32> -> vector<2x12xf32>
    %c0_238 = arith.constant 0 : index
    %c0_239 = arith.constant 0 : index
    %380 = vector.load %arg23[%c0_238, %c0_239] : memref<1x12xf32, #tpu.memory_space<vmem>>, vector<1x12xf32>
    %381 = vector.broadcast %380 : vector<1x12xf32> to vector<2x12xf32>
    %382 = arith.addf %379, %381 : vector<2x12xf32>
    %cst_240 = arith.constant dense<0xFF800000> : vector<2xf32>
    %383 = vector.multi_reduction <maximumf>, %382, %cst_240 [1] : vector<2x12xf32> to vector<2xf32>
    %384 = vector.shape_cast %383 : vector<2xf32> to vector<2x1xf32>
    %385 = vector.broadcast %384 : vector<2x1xf32> to vector<2x12xf32>
    %386 = arith.subf %382, %385 : vector<2x12xf32>
    %387 = math.exp %386 : vector<2x12xf32>
    %cst_241 = arith.constant dense<0.000000e+00> : vector<2xf32>
    %388 = vector.multi_reduction <add>, %387, %cst_241 [1] : vector<2x12xf32> to vector<2xf32>
    %389 = vector.shape_cast %388 : vector<2xf32> to vector<2x1xf32>
    %390 = vector.broadcast %389 : vector<2x1xf32> to vector<2x12xf32>
    %391 = arith.divf %387, %390 : vector<2x12xf32>
    %c0_242 = arith.constant 0 : index
    %c0_243 = arith.constant 0 : index
    %392 = vector.load %arg24[%c0_242, %c0_243] : memref<2x12xf32, #tpu.memory_space<vmem>>, vector<2x12xf32>
    tpu.vector_store %arg24[%c0_242, %c0_243], %391 {strides = array<i32>} : memref<2x12xf32, #tpu.memory_space<vmem>>, vector<2x12xf32>,
    return
  }
}

</mosaic_0001>

<llo_original>
// kernel: tile.27
$region0: #{tile.27}
  %s0 = inlined_call_operand.vmem [shape: f32[9,4,64], index: 0, kind: input, shape index: {}]
  %s1 = inlined_call_operand.vmem [shape: f32[9,256], index: 1, kind: output, shape index: {}]
  $region1: #{tile.27} parent=0
    #allocation0 [shape = 'u8[36864]{0}', space=vmem, size = 0x9000, scoped, tag = 'scoped mem for input reshape']
    %s3 = sshll.u32 1, 4
    %s4 = ssub.s32 %s3, 1
    %s5 = smul.addr 4, 8
    %s6 = scalar_lea.vmem %s0, %s5
    %v7 = vld [vmem:[%s6] sm:%s4]
    %s8 = scalar_lea.vmem [#allocation0], 64
    %9 = vst [vmem:[%s8] sm:%s4] %v7
    %s10 = smul.addr 4, 7
    %s11 = scalar_lea.vmem %s0, %s10
    %v12 = vld [vmem:[%s11] sm:%s4]
    %s13 = scalar_lea.vmem [#allocation0], 56
    %14 = vst [vmem:[%s13] sm:%s4] %v12
    %s15 = smul.addr 4, 6
    %s16 = scalar_lea.vmem %s0, %s15
    %v17 = vld [vmem:[%s16] sm:%s4]
    %s18 = scalar_lea.vmem [#allocation0], 48
    %19 = vst [vmem:[%s18] sm:%s4] %v17
    %s20 = smul.addr 4, 5
    %s21 = scalar_lea.vmem %s0, %s20
    %v22 = vld [vmem:[%s21] sm:%s4]
    %s23 = scalar_lea.vmem [#allocation0], 40
    %24 = vst [vmem:[%s23] sm:%s4] %v22
    %s25 = smul.addr 4, 4
    %s26 = scalar_lea.vmem %s0, %s25
    %v27 = vld [vmem:[%s26] sm:%s4]
    %s28 = scalar_lea.vmem [#allocation0], 32
    %29 = vst [vmem:[%s28] sm:%s4] %v27
    %s30 = smul.addr 4, 3
    %s31 = scalar_lea.vmem %s0, %s30
    %v32 = vld [vmem:[%s31] sm:%s4]
    %s33 = scalar_lea.vmem [#allocation0], 24
    %34 = vst [vmem:[%s33] sm:%s4] %v32
    %s35 = smul.addr 4, 2
    %s36 = scalar_lea.vmem %s0, %s35
    %v37 = vld [vmem:[%s36] sm:%s4]
    %s38 = scalar_lea.vmem [#allocation0], 16
    %39 = vst [vmem:[%s38] sm:%s4] %v37
    %s40 = scalar_lea.vmem %s0, 4
    %v41 = vld [vmem:[%s40] sm:%s4]
    %s42 = scalar_lea.vmem [#allocation0], 8
    %43 = vst [vmem:[%s42] sm:%s4] %v41
    %v44 = vld [vmem:[%s0] sm:%s4]
    %45 = vst [vmem:[#allocation0] sm:%s4] %v44
    %s46 = smov 3
    %v47 = vld [vmem:[#allocation0] ss:$2 sm:%s46]
    %vm48 = vcmask 523264
    %49 = vst.msk [vmem:[%s1] ss:$8 sm:$0x3] %vm48, %v47
    %s50 = scalar_lea.vmem [#allocation0], 8
    %s51 = smov 3
    %v52 = vld [vmem:[%s50] ss:$2 sm:%s51]
    %vm53 = vcmask 523264
    %s54 = scalar_lea.vmem %s1, 1
    %55 = vst.msk [vmem:[%s54] ss:$8 sm:$0x3] %vm53, %v52
    %s56 = scalar_lea.vmem [#allocation0], 16
    %s57 = smov 3
    %v58 = vld [vmem:[%s56] ss:$2 sm:%s57]
    %vm59 = vcmask 523264
    %s60 = scalar_lea.vmem %s1, 2
    %61 = vst.msk [vmem:[%s60] ss:$8 sm:$0x3] %vm59, %v58
    %s62 = scalar_lea.vmem [#allocation0], 24
    %s63 = smov 3
    %v64 = vld [vmem:[%s62] ss:$2 sm:%s63]
    %vm65 = vcmask 523264
    %s66 = scalar_lea.vmem %s1, 3
    %67 = vst.msk [vmem:[%s66] ss:$8 sm:$0x3] %vm65, %v64
    %s68 = scalar_lea.vmem [#allocation0], 32
    %s69 = smov 3
    %v70 = vld [vmem:[%s68] ss:$2 sm:%s69]
    %vm71 = vcmask 523264
    %s72 = scalar_lea.vmem %s1, 4
    %73 = vst.msk [vmem:[%s72] ss:$8 sm:$0x3] %vm71, %v70
    %s74 = scalar_lea.vmem [#allocation0], 40
    %s75 = smov 3
    %v76 = vld [vmem:[%s74] ss:$2 sm:%s75]
    %vm77 = vcmask 523264
    %s78 = scalar_lea.vmem %s1, 5
    %79 = vst.msk [vmem:[%s78] ss:$8 sm:$0x3] %vm77, %v76
    %s80 = scalar_lea.vmem [#allocation0], 48
    %s81 = smov 3
    %v82 = vld [vmem:[%s80] ss:$2 sm:%s81]
    %vm83 = vcmask 523264
    %s84 = scalar_lea.vmem %s1, 6
    %85 = vst.msk [vmem:[%s84] ss:$8 sm:$0x3] %vm83, %v82
    %s86 = scalar_lea.vmem [#allocation0], 56
    %s87 = smov 3
    %v88 = vld [vmem:[%s86] ss:$2 sm:%s87]
    %vm89 = vcmask 523264
    %s90 = scalar_lea.vmem %s1, 7
    %91 = vst.msk [vmem:[%s90] ss:$8 sm:$0x3] %vm89, %v88
    %s92 = scalar_lea.vmem [#allocation0], 64
    %s93 = smov 3
    %v94 = vld [vmem:[%s92] ss:$2 sm:%s93]
    %vm95 = vcmask 523264
    %s96 = scalar_lea.vmem %s1, 16
    %97 = vst.msk [vmem:[%s96] ss:$8 sm:$0x3] %vm95, %v94
    %s98 = scalar_lea.vmem [#allocation0], 1
    %v99 = vld [vmem:[%s98] ss:$8 sm:$0xf]
    %s100 = scalar_lea.vmem [#allocation0], 1
    %v101 = vld [vmem:[%s100] ss:$8 sm:$0xf0]
    %vm102 = vcmask 1047556
    %v103 = vsel %vm102, %v101, %v99
    %104 = vrot.lane.b32.xlu0 %v103, 64
    %v105 = vpop.permute.xlu0 %104
    %vm106 = vcmask 1048064
    %107 = vst.msk [vmem:[%s1] sm:$0xff] %vm106, %v105
    %s108 = scalar_lea.vmem [#allocation0], 3
    %v109 = vld [vmem:[%s108] ss:$8 sm:$0xf]
    %s110 = scalar_lea.vmem [#allocation0], 3
    %v111 = vld [vmem:[%s110] ss:$8 sm:$0xf0]
    %vm112 = vcmask 1047556
    %v113 = vsel %vm112, %v111, %v109
    %114 = vrot.lane.b32.xlu0 %v113, 64
    %v115 = vpop.permute.xlu0 %114
    %vm116 = vcmask 1048064
    %s117 = scalar_lea.vmem %s1, 8
    %118 = vst.msk [vmem:[%s117] sm:$0xff] %vm116, %v115
    %s119 = scalar_lea.vmem [#allocation0], 65
    %s120 = smov 3
    %v121 = vld [vmem:[%s119] ss:$2 sm:%s120]
    %122 = vrot.lane.b32.xlu0 %v121, 64
    %v123 = vpop.permute.xlu0 %122
    %vm124 = vcmask 1048064
    %s125 = scalar_lea.vmem %s1, 16
    %126 = vst.msk [vmem:[%s125] ss:$8 sm:$0x3] %vm124, %v123

// kernel: dscnn_forward.1
$region0: #{dscnn_forward.1}
  #allocation0 [shape = 'u32[]', space=smem, size = 0x4, offset = 0x4, fixed_abs, tag = 'smem constant byte address 0x4 - core index']
  #allocation1 [shape = 'u32[144,128]{1,0:T(1,128)}', space=vmem, size = 0x12000, scoped, tag = 'internal scratch']
  #allocation2 [shape = 'f32[56,448]{1,0:T(8,128)}', space=vmem, size = 0x1c000, scoped, tag = 'scratch operand']
  %s0 = inlined_call_operand.vmem [shape: f32[40,160], index: 0, kind: input, shape index: {}]
  %s1 = inlined_call_operand.vmem [shape: f32[2,40], index: 1, kind: input, shape index: {}]
  %s2 = inlined_call_operand.vmem [shape: f32[160,256], index: 2, kind: input, shape index: {}]
  %s3 = inlined_call_operand.vmem [shape: f32[1,256], index: 3, kind: input, shape index: {}, may-alias: {3,5,7,9,11,13,15,17,19}]
  %s4 = inlined_call_operand.vmem [shape: f32[9,256], index: 4, kind: input, shape index: {}]
  %s5 = inlined_call_operand.vmem [shape: f32[1,256], index: 5, kind: input, shape index: {}, may-alias: {3,5,7,9,11,13,15,17,19}]
  %s6 = inlined_call_operand.vmem [shape: f32[256,256], index: 6, kind: input, shape index: {}]
  %s7 = inlined_call_operand.vmem [shape: f32[1,256], index: 7, kind: input, shape index: {}, may-alias: {3,5,7,9,11,13,15,17,19}]
  %s8 = inlined_call_operand.vmem [shape: f32[9,256], index: 8, kind: input, shape index: {}]
  %s9 = inlined_call_operand.vmem [shape: f32[1,256], index: 9, kind: input, shape index: {}, may-alias: {3,5,7,9,11,13,15,17,19}]
  %s10 = inlined_call_operand.vmem [shape: f32[256,256], index: 10, kind: input, shape index: {}]
  %s11 = inlined_call_operand.vmem [shape: f32[1,256], index: 11, kind: input, shape index: {}, may-alias: {3,5,7,9,11,13,15,17,19}]
  %s12 = inlined_call_operand.vmem [shape: f32[9,256], index: 12, kind: input, shape index: {}]
  %s13 = inlined_call_operand.vmem [shape: f32[1,256], index: 13, kind: input, shape index: {}, may-alias: {3,5,7,9,11,13,15,17,19}]
  %s14 = inlined_call_operand.vmem [shape: f32[256,256], index: 14, kind: input, shape index: {}]
  %s15 = inlined_call_operand.vmem [shape: f32[1,256], index: 15, kind: input, shape index: {}, may-alias: {3,5,7,9,11,13,15,17,19}]
  %s16 = inlined_call_operand.vmem [shape: f32[9,256], index: 16, kind: input, shape index: {}]
  %s17 = inlined_call_operand.vmem [shape: f32[1,256], index: 17, kind: input, shape index: {}, may-alias: {3,5,7,9,11,13,15,17,19}]
  %s18 = inlined_call_operand.vmem [shape: f32[256,256], index: 18, kind: input, shape index: {}]
  %s19 = inlined_call_operand.vmem [shape: f32[1,256], index: 19, kind: input, shape index: {}, may-alias: {3,5,7,9,11,13,15,17,19}]
  %s20 = inlined_call_operand.vmem [shape: f32[256,64], index: 20, kind: input, shape index: {}]
  %s21 = inlined_call_operand.vmem [shape: f32[1,64], index: 21, kind: input, shape index: {}]
  %s22 = inlined_call_operand.vmem [shape: f32[64,12], index: 22, kind: input, shape index: {}]
  %s23 = inlined_call_operand.vmem [shape: f32[1,12], index: 23, kind: input, shape index: {}]
  %s24 = inlined_call_operand.hbm [shape: f32[2,12], index: 24, kind: output, shape index: {}]
  %s25 = sld [smem:[#allocation0]]
  $region106: #{dscnn_forward.1} parent=0
    _
  %s27 = ssub.s32 1, %s25
  %s28 = scalar_select 0, %s27, %s25
  $region1: #{dscnn_forward.1} parent=0
    #allocation3 [shape = 'u8[1024]{0}', space=vmem, size = 0x400, scoped, tag = 'output window, operand 0, single buffered']
    #allocation4 [shape = 's32[1]{0}', space=sflag, size = 0x4, scoped, tag = 'scoped memory for dscnn_forward.1']
    %29 = vsyncpa [#allocation4], 0
    // Predicated region
    $region2: #{dscnn_forward.1} parent=1 // pred_check
      _
    $region3: #{dscnn_forward.1} parent=1 // pred_check_branch
      %31 = sbr.rel (0) target = $region5
    $region4: #{dscnn_forward.1} parent=1 // pred_region
      _
    $region5: #{dscnn_forward.1} parent=1 // pred_fallthru
      _
    // Predicated region
    $region6: #{dscnn_forward.1} parent=1 // pred_check
      _
    $region7: #{dscnn_forward.1} parent=1 // pred_check_branch
      %33 = sbr.rel (0) target = $region9
    $region8: #{dscnn_forward.1} parent=1 // pred_region
      _
    $region9: #{dscnn_forward.1} parent=1 // pred_fallthru
      _
    // Predicated region
    $region10: #{dscnn_forward.1} parent=1 // pred_check
      _
    $region11: #{dscnn_forward.1} parent=1 // pred_check_branch
      %35 = sbr.rel (0) target = $region13
    $region12: #{dscnn_forward.1} parent=1 // pred_region
      _
    $region13: #{dscnn_forward.1} parent=1 // pred_fallthru
      _
    // Predicated region
    $region14: #{dscnn_forward.1} parent=1 // pred_check
      _
    $region15: #{dscnn_forward.1} parent=1 // pred_check_branch
      %37 = sbr.rel (0) target = $region17
    $region16: #{dscnn_forward.1} parent=1 // pred_region
      _
    $region17: #{dscnn_forward.1} parent=1 // pred_fallthru
      _
    // Predicated region
    $region18: #{dscnn_forward.1} parent=1 // pred_check
      _
    $region19: #{dscnn_forward.1} parent=1 // pred_check_branch
      %39 = sbr.rel (0) target = $region21
    $region20: #{dscnn_forward.1} parent=1 // pred_region
      _
    $region21: #{dscnn_forward.1} parent=1 // pred_fallthru
      _
    // Predicated region
    $region22: #{dscnn_forward.1} parent=1 // pred_check
      _
    $region23: #{dscnn_forward.1} parent=1 // pred_check_branch
      %41 = sbr.rel (0) target = $region25
    $region24: #{dscnn_forward.1} parent=1 // pred_region
      _
    $region25: #{dscnn_forward.1} parent=1 // pred_fallthru
      _
    // Predicated region
    $region26: #{dscnn_forward.1} parent=1 // pred_check
      _
    $region27: #{dscnn_forward.1} parent=1 // pred_check_branch
      %43 = sbr.rel (0) target = $region29
    $region28: #{dscnn_forward.1} parent=1 // pred_region
      _
    $region29: #{dscnn_forward.1} parent=1 // pred_fallthru
      _
    // Predicated region
    $region30: #{dscnn_forward.1} parent=1 // pred_check
      _
    $region31: #{dscnn_forward.1} parent=1 // pred_check_branch
      %45 = sbr.rel (0) target = $region33
    $region32: #{dscnn_forward.1} parent=1 // pred_region
      _
    $region33: #{dscnn_forward.1} parent=1 // pred_fallthru
      _
    // Predicated region
    $region34: #{dscnn_forward.1} parent=1 // pred_check
      _
    $region35: #{dscnn_forward.1} parent=1 // pred_check_branch
      %47 = sbr.rel (0) target = $region37
    $region36: #{dscnn_forward.1} parent=1 // pred_region
      _
    $region37: #{dscnn_forward.1} parent=1 // pred_fallthru
      _
    // Predicated region
    $region38: #{dscnn_forward.1} parent=1 // pred_check
      _
    $region39: #{dscnn_forward.1} parent=1 // pred_check_branch
      %49 = sbr.rel (0) target = $region41
    $region40: #{dscnn_forward.1} parent=1 // pred_region
      _
    $region41: #{dscnn_forward.1} parent=1 // pred_fallthru
      _
    // Predicated region
    $region42: #{dscnn_forward.1} parent=1 // pred_check
      _
    $region43: #{dscnn_forward.1} parent=1 // pred_check_branch
      %51 = sbr.rel (0) target = $region45
    $region44: #{dscnn_forward.1} parent=1 // pred_region
      _
    $region45: #{dscnn_forward.1} parent=1 // pred_fallthru
      _
    // Predicated region
    $region46: #{dscnn_forward.1} parent=1 // pred_check
      _
    $region47: #{dscnn_forward.1} parent=1 // pred_check_branch
      %53 = sbr.rel (0) target = $region49
    $region48: #{dscnn_forward.1} parent=1 // pred_region
      _
    $region49: #{dscnn_forward.1} parent=1 // pred_fallthru
      _
    // Predicated region
    $region50: #{dscnn_forward.1} parent=1 // pred_check
      _
    $region51: #{dscnn_forward.1} parent=1 // pred_check_branch
      %55 = sbr.rel (0) target = $region53
    $region52: #{dscnn_forward.1} parent=1 // pred_region
      _
    $region53: #{dscnn_forward.1} parent=1 // pred_fallthru
      _
    // Predicated region
    $region54: #{dscnn_forward.1} parent=1 // pred_check
      _
    $region55: #{dscnn_forward.1} parent=1 // pred_check_branch
      %57 = sbr.rel (0) target = $region57
    $region56: #{dscnn_forward.1} parent=1 // pred_region
      _
    $region57: #{dscnn_forward.1} parent=1 // pred_fallthru
      _
    // Predicated region
    $region58: #{dscnn_forward.1} parent=1 // pred_check
      _
    $region59: #{dscnn_forward.1} parent=1 // pred_check_branch
      %59 = sbr.rel (0) target = $region61
    $region60: #{dscnn_forward.1} parent=1 // pred_region
      _
    $region61: #{dscnn_forward.1} parent=1 // pred_fallthru
      _
    // Predicated region
    $region62: #{dscnn_forward.1} parent=1 // pred_check
      _
    $region63: #{dscnn_forward.1} parent=1 // pred_check_branch
      %61 = sbr.rel (0) target = $region65
    $region64: #{dscnn_forward.1} parent=1 // pred_region
      _
    $region65: #{dscnn_forward.1} parent=1 // pred_fallthru
      _
    // Predicated region
    $region66: #{dscnn_forward.1} parent=1 // pred_check
      _
    $region67: #{dscnn_forward.1} parent=1 // pred_check_branch
      %63 = sbr.rel (0) target = $region69
    $region68: #{dscnn_forward.1} parent=1 // pred_region
      _
    $region69: #{dscnn_forward.1} parent=1 // pred_fallthru
      _
    // Predicated region
    $region70: #{dscnn_forward.1} parent=1 // pred_check
      _
    $region71: #{dscnn_forward.1} parent=1 // pred_check_branch
      %65 = sbr.rel (0) target = $region73
    $region72: #{dscnn_forward.1} parent=1 // pred_region
      _
    $region73: #{dscnn_forward.1} parent=1 // pred_fallthru
      _
    // Predicated region
    $region74: #{dscnn_forward.1} parent=1 // pred_check
      _
    $region75: #{dscnn_forward.1} parent=1 // pred_check_branch
      %67 = sbr.rel (0) target = $region77
    $region76: #{dscnn_forward.1} parent=1 // pred_region
      _
    $region77: #{dscnn_forward.1} parent=1 // pred_fallthru
      _
    // Predicated region
    $region78: #{dscnn_forward.1} parent=1 // pred_check
      _
    $region79: #{dscnn_forward.1} parent=1 // pred_check_branch
      %69 = sbr.rel (0) target = $region81
    $region80: #{dscnn_forward.1} parent=1 // pred_region
      _
    $region81: #{dscnn_forward.1} parent=1 // pred_fallthru
      _
    // Predicated region
    $region82: #{dscnn_forward.1} parent=1 // pred_check
      _
    $region83: #{dscnn_forward.1} parent=1 // pred_check_branch
      %71 = sbr.rel (0) target = $region85
    $region84: #{dscnn_forward.1} parent=1 // pred_region
      _
    $region85: #{dscnn_forward.1} parent=1 // pred_fallthru
      _
    // Predicated region
    $region86: #{dscnn_forward.1} parent=1 // pred_check
      _
    $region87: #{dscnn_forward.1} parent=1 // pred_check_branch
      %73 = sbr.rel (0) target = $region89
    $region88: #{dscnn_forward.1} parent=1 // pred_region
      _
    $region89: #{dscnn_forward.1} parent=1 // pred_fallthru
      _
    // Predicated region
    $region90: #{dscnn_forward.1} parent=1 // pred_check
      _
    $region91: #{dscnn_forward.1} parent=1 // pred_check_branch
      %75 = sbr.rel (0) target = $region93
    $region92: #{dscnn_forward.1} parent=1 // pred_region
      _
    $region93: #{dscnn_forward.1} parent=1 // pred_fallthru
      _
    // Predicated region
    $region94: #{dscnn_forward.1} parent=1 // pred_check
      _
    $region95: #{dscnn_forward.1} parent=1 // pred_check_branch
      %77 = sbr.rel (0) target = $region97
    $region96: #{dscnn_forward.1} parent=1 // pred_region
      _
    $region97: #{dscnn_forward.1} parent=1 // pred_fallthru
      _
    %v78 = vld [vmem:[%s0] sm:$0xff]
    %v79 = vld [vmem:[%s0 + $0x8] sm:$0xff]
    %v80 = vld [vmem:[%s0 + $0x10] sm:$0xff]
    %v81 = vld [vmem:[%s0 + $0x18] sm:$0xff]
    %v82 = vld [vmem:[%s0 + $0x20] sm:$0xff]
    %v83 = vld [vmem:[%s0 + $0x28] sm:$0xff]
    %v84 = vld [vmem:[%s0 + $0x30] sm:$0xff]
    %v85 = vld [vmem:[%s0 + $0x38] sm:$0xff]
    %v86 = vld [vmem:[%s0 + $0x40] sm:$0xff]
    %v87 = vld [vmem:[%s0 + $0x48] sm:$0xff]
    %v88 = vld [vmem:[%s2] sm:$0xff]
    %v89 = vld [vmem:[%s2 + $0x8] sm:$0xff]
    %v90 = vld [vmem:[%s2 + $0x10] sm:$0xff]
    %v91 = vld [vmem:[%s2 + $0x18] sm:$0xff]
    %v92 = vld [vmem:[%s2 + $0x20] sm:$0xff]
    %v93 = vld [vmem:[%s2 + $0x28] sm:$0xff]
    %v94 = vld [vmem:[%s2 + $0x30] sm:$0xff]
    %v95 = vld [vmem:[%s2 + $0x38] sm:$0xff]
    %v96 = vld [vmem:[%s2 + $0x40] sm:$0xff]
    %v97 = vld [vmem:[%s2 + $0x48] sm:$0xff]
    %v98 = vld [vmem:[%s2 + $0x50] sm:$0xff]
    %v99 = vld [vmem:[%s2 + $0x58] sm:$0xff]
    %v100 = vld [vmem:[%s2 + $0x60] sm:$0xff]
    %v101 = vld [vmem:[%s2 + $0x68] sm:$0xff]
    %v102 = vld [vmem:[%s2 + $0x70] sm:$0xff]
    %v103 = vld [vmem:[%s2 + $0x78] sm:$0xff]
    %v104 = vld [vmem:[%s2 + $0x80] sm:$0xff]
    %v105 = vld [vmem:[%s2 + $0x88] sm:$0xff]
    %v106 = vld [vmem:[%s2 + $0x90] sm:$0xff]
    %v107 = vld [vmem:[%s2 + $0x98] sm:$0xff]
    %v108 = vld [vmem:[%s2 + $0xa0] sm:$0xff]
    %v109 = vld [vmem:[%s2 + $0xa8] sm:$0xff]
    %v110 = vld [vmem:[%s2 + $0xb0] sm:$0xff]
    %v111 = vld [vmem:[%s2 + $0xb8] sm:$0xff]
    %v112 = vld [vmem:[%s2 + $0xc0] sm:$0xff]
    %v113 = vld [vmem:[%s2 + $0xc8] sm:$0xff]
    %v114 = vld [vmem:[%s2 + $0xd0] sm:$0xff]
    %v115 = vld [vmem:[%s2 + $0xd8] sm:$0xff]
    %v116 = vld [vmem:[%s2 + $0xe0] sm:$0xff]
    %v117 = vld [vmem:[%s2 + $0xe8] sm:$0xff]
    %v118 = vld [vmem:[%s2 + $0xf0] sm:$0xff]
    %v119 = vld [vmem:[%s2 + $0xf8] sm:$0xff]
    %v120 = vld [vmem:[%s2 + $0x100] sm:$0xff]
    %v121 = vld [vmem:[%s2 + $0x108] sm:$0xff]
    %v122 = vld [vmem:[%s2 + $0x110] sm:$0xff]
    %v123 = vld [vmem:[%s2 + $0x118] sm:$0xff]
    %v124 = vld [vmem:[%s2 + $0x120] sm:$0xff]
    %v125 = vld [vmem:[%s2 + $0x128] sm:$0xff]
    %v126 = vld [vmem:[%s2 + $0x130] sm:$0xff]
    %v127 = vld [vmem:[%s2 + $0x138] sm:$0xff]
    %v128 = vld [vmem:[%s3] sm:$0x3]
    %v130 = vlaneseq
    %v131 = vshrl.u32 %v130, 7
    %v132 = vsub.s32 0, %v131
    %v133 = vrot.slane %v128, %v132
    %v134 = vlaneseq
    %v135 = vshrl.u32 %v134, 7
    %v136 = vsub.s32 1, %v135
    %v137 = vrot.slane %v128, %v136
    %vm140 = vcmask 261120
    %v142 = vsel %vm140, %v79, 0
    %v145 = vsel %vm140, %v81, 0
    %v148 = vsel %vm140, %v83, 0
    %v151 = vsel %vm140, %v85, 0
    %v154 = vsel %vm140, %v87, 0
    %156 = vmatprep.subr.mxu0 %v119
    %157 = vmatpush1.msra.mxu0 %v118
    %158 = vmatprep.subr.mxu0 %v117
    %159 = vmatpush1.msra.mxu0 %v116
    %160 = vmatprep.subr.mxu0 %v115
    %161 = vmatpush1.msra.mxu0 %v114
    %162 = vmatprep.subr.mxu0 %v113
    %163 = vmatpush1.msra.mxu0 %v112
    %164 = vmatprep.subr.mxu0 %v111
    %165 = vmatpush1.msra.mxu0 %v110
    %166 = vmatprep.subr.mxu0 %v109
    %167 = vmatpush1.msra.mxu0 %v108
    %168 = vmatprep.subr.mxu0 %v107
    %169 = vmatpush1.msra.mxu0 %v106
    %170 = vmatprep.subr.mxu0 %v105
    %171 = vmatpush1.msra.mxu0 %v104
    %172 = vmatprep.subr.mxu0 %v103
    %173 = vmatpush1.msra.mxu0 %v102
    %174 = vmatprep.subr.mxu0 %v101
    %175 = vmatpush1.msra.mxu0 %v100
    %176 = vmatprep.subr.mxu0 %v99
    %177 = vmatpush1.msra.mxu0 %v98
    %178 = vmatprep.subr.mxu0 %v97
    %179 = vmatpush1.msra.mxu0 %v96
    %180 = vmatprep.subr.mxu0 %v95
    %181 = vmatpush1.msra.mxu0 %v94
    %182 = vmatprep.subr.mxu0 %v93
    %183 = vmatpush1.msra.mxu0 %v92
    %184 = vmatprep.subr.mxu0 %v91
    %185 = vmatpush1.msra.mxu0 %v90
    %186 = vmatprep.subr.mxu0 %v89
    %187 = vmatpush1.msra.mxu0 %v88
    %188 = vmatprep.subr.mxu0 0.0
    %189 = vmatpush2.msra.mxu0 0.0
    %190 = vmatprep.subr.mxu0 0.0
    %191 = vmatpush2.msra.mxu0 0.0
    %192 = vmatprep.subr.mxu0 0.0
    %193 = vmatpush2.msra.mxu0 0.0
    %194 = vmatprep.subr.mxu0 0.0
    %195 = vmatpush2.msra.mxu0 0.0
    %196 = vmatprep.subr.mxu0 0.0
    %197 = vmatpush2.msra.mxu0 0.0
    %198 = vmatprep.subr.mxu0 0.0
    %199 = vmatpush2.msra.mxu0 0.0
    %200 = vmatprep.subr.mxu0 0.0
    %201 = vmatpush2.msra.mxu0 0.0
    %202 = vmatprep.subr.mxu0 0.0
    %203 = vmatpush2.msra.mxu0 0.0
    %204 = vmatprep.subr.mxu0 0.0
    %205 = vmatpush2.msra.mxu0 0.0
    %206 = vmatprep.subr.mxu0 0.0
    %207 = vmatpush2.msra.mxu0 0.0
    %208 = vmatprep.subr.mxu0 0.0
    %209 = vmatpush2.msra.mxu0 0.0
    %210 = vmatprep.subr.mxu0 0.0
    %211 = vmatpush2.msra.mxu0 0.0
    %212 = vmatprep.subr.mxu0 %v127
    %213 = vmatpush2.msra.mxu0 %v126
    %214 = vmatprep.subr.mxu0 %v125
    %215 = vmatpush2.msra.mxu0 %v124
    %216 = vmatprep.subr.mxu0 %v123
    %217 = vmatpush2.msra.mxu0 %v122
    %218 = vmatprep.subr.mxu0 %v121
    %219 = vmatpush2.msra.mxu0 %v120
    %220 = vmatprep.mubr.f32.mxu0 %v142
    %221 = vmatmul.mubr.f32.gmra.mxu0 %v78
    %v222 = vpop.f32.mrf.mxu0
    %v223 = vadd.f32 %v133, %v222
    %v224 = vpop.f32.mrf.mxu0
    %v225 = vadd.f32 %v137, %v224
    %226 = vmatprep.mubr.f32.mxu0 %v145
    %227 = vmatmul.mubr.f32.gmra.mxu0 %v80
    %v228 = vpop.f32.mrf.mxu0
    %v229 = vadd.f32 %v133, %v228
    %v230 = vpop.f32.mrf.mxu0
    %v231 = vadd.f32 %v137, %v230
    %232 = vmatprep.mubr.f32.mxu0 %v148
    %233 = vmatmul.mubr.f32.gmra.mxu0 %v82
    %v234 = vpop.f32.mrf.mxu0
    %v235 = vadd.f32 %v133, %v234
    %v236 = vpop.f32.mrf.mxu0
    %v237 = vadd.f32 %v137, %v236
    %238 = vmatprep.mubr.f32.mxu0 %v151
    %239 = vmatmul.mubr.f32.gmra.mxu0 %v84
    %v240 = vpop.f32.mrf.mxu0
    %v241 = vadd.f32 %v133, %v240
    %v242 = vpop.f32.mrf.mxu0
    %v243 = vadd.f32 %v137, %v242
    %244 = vmatprep.mubr.f32.mxu0 %v154
    %245 = vmatmul.mubr.f32.gmra.mxu0 %v86
    %v246 = vpop.f32.mrf.mxu0
    %v247 = vadd.f32 %v133, %v246
    %v248 = vpop.f32.mrf.mxu0
    %v249 = vadd.f32 %v137, %v248
    %250 = vdwg.mxu0
    %v251 = vmax.f32 %v223, 0.0
    %v252 = vmax.f32 %v225, 0.0
    %v253 = vmax.f32 %v229, 0.0
    %v254 = vmax.f32 %v231, 0.0
    %v255 = vmax.f32 %v235, 0.0
    %v256 = vmax.f32 %v237, 0.0
    %v257 = vmax.f32 %v241, 0.0
    %v258 = vmax.f32 %v243, 0.0
    %v259 = vmax.f32 %v247, 0.0
    %v260 = vmax.f32 %v249, 0.0
    %v261 = vlaneseq
    %v262 = vshrl.u32 %v261, 7
    %v263 = vadd.s32 %v262, 8
    %v264 = vadd.s32 %v262, 16
    %v265 = vadd.s32 %v262, 24
    %v266 = vadd.s32 %v262, 32
    %vm267 = vcmp.lt.s32.totalorder %v262, 0
    %v268 = vsub.s32 0, %v262
    %v269 = vsel %vm267, %v268, %v262
    %v270 = vmul.u32.u64.compose %v269, 3435973837
    %v271 = vextract.low.u32 %v270
    %v272 = vextract.high.u32 %v270
    %v273 = vshrl.u32 %v272, 4
    %v274 = vmul.u32 %v273, 20
    %v275 = vsub.s32 %v269, %v274
    %v276 = vsub.s32 0, %v275
    %v277 = vsel %vm267, %v276, %v275
    %vm278 = vcmp.lt.s32.totalorder %v263, 0
    %v279 = vsub.s32 0, %v263
    %v280 = vsel %vm278, %v279, %v263
    %v281 = vmul.u32.u64.compose %v280, 3435973837
    %v282 = vextract.low.u32 %v281
    %v283 = vextract.high.u32 %v281
    %v284 = vshrl.u32 %v283, 4
    %v285 = vmul.u32 %v284, 20
    %v286 = vsub.s32 %v280, %v285
    %v287 = vsub.s32 0, %v286
    %v288 = vsel %vm278, %v287, %v286
    %vm289 = vcmp.lt.s32.totalorder %v264, 0
    %v290 = vsub.s32 0, %v264
    %v291 = vsel %vm289, %v290, %v264
    %v292 = vmul.u32.u64.compose %v291, 3435973837
    %v293 = vextract.low.u32 %v292
    %v294 = vextract.high.u32 %v292
    %v295 = vshrl.u32 %v294, 4
    %v296 = vmul.u32 %v295, 20
    %v297 = vsub.s32 %v291, %v296
    %v298 = vsub.s32 0, %v297
    %v299 = vsel %vm289, %v298, %v297
    %vm300 = vcmp.lt.s32.totalorder %v265, 0
    %v301 = vsub.s32 0, %v265
    %v302 = vsel %vm300, %v301, %v265
    %v303 = vmul.u32.u64.compose %v302, 3435973837
    %v304 = vextract.low.u32 %v303
    %v305 = vextract.high.u32 %v303
    %v306 = vshrl.u32 %v305, 4
    %v307 = vmul.u32 %v306, 20
    %v308 = vsub.s32 %v302, %v307
    %v309 = vsub.s32 0, %v308
    %v310 = vsel %vm300, %v309, %v308
    %vm311 = vcmp.lt.s32.totalorder %v266, 0
    %v312 = vsub.s32 0, %v266
    %v313 = vsel %vm311, %v312, %v266
    %v314 = vmul.u32.u64.compose %v313, 3435973837
    %v315 = vextract.low.u32 %v314
    %v316 = vextract.high.u32 %v314
    %v317 = vshrl.u32 %v316, 4
    %v318 = vmul.u32 %v317, 20
    %v319 = vsub.s32 %v313, %v318
    %v320 = vsub.s32 0, %v319
    %v321 = vsel %vm311, %v320, %v319
    %vm322 = vcmp.ne.s32.totalorder %v277, 0
    %vm323 = vcmp.ne.s32.totalorder %v288, 0
    %vm324 = vcmp.ne.s32.totalorder %v299, 0
    %vm325 = vcmp.ne.s32.totalorder %v310, 0
    %vm326 = vcmp.ne.s32.totalorder %v321, 0
    %vm327 = vcmp.lt.s32.totalorder %v277, 0
    %vm328 = vcmp.lt.s32.totalorder %v288, 0
    %vm329 = vcmp.lt.s32.totalorder %v299, 0
    %vm330 = vcmp.lt.s32.totalorder %v310, 0
    %vm331 = vcmp.lt.s32.totalorder %v321, 0
    %vm332 = vmand %vm327, %vm322
    %vm333 = vmand %vm328, %vm323
    %vm334 = vmand %vm329, %vm324
    %vm335 = vmand %vm330, %vm325
    %vm336 = vmand %vm331, %vm326
    %v337 = vadd.s32 %v277, 20
    %v338 = vadd.s32 %v288, 20
    %v339 = vadd.s32 %v299, 20
    %v340 = vadd.s32 %v310, 20
    %v341 = vadd.s32 %v321, 20
    %v342 = vsel %vm332, %v337, %v277
    %v343 = vsel %vm333, %v338, %v288
    %v344 = vsel %vm334, %v339, %v299
    %v345 = vsel %vm335, %v340, %v310
    %v346 = vsel %vm336, %v341, %v321
    %vm347 = vcmp.gt.s32.totalorder %v342, 0
    %vm348 = vcmp.gt.s32.totalorder %v343, 0
    %vm349 = vcmp.gt.s32.totalorder %v344, 0
    %vm350 = vcmp.gt.s32.totalorder %v345, 0
    %vm351 = vcmp.gt.s32.totalorder %v346, 0
    %vm352 = vcmp.lt.s32.totalorder %v342, 19
    %vm353 = vcmp.lt.s32.totalorder %v343, 19
    %vm354 = vcmp.lt.s32.totalorder %v344, 19
    %vm355 = vcmp.lt.s32.totalorder %v345, 19
    %vm356 = vcmp.lt.s32.totalorder %v346, 19
    %357 = vst [vmem:[#allocation2] sm:$0xff] 0.0
    %358 = vst [vmem:[#allocation2 + $0x8] sm:$0xff] 0.0
    %359 = vst [vmem:[#allocation2 + $0x10] sm:$0xff] 0.0
    %vm360 = vcmask 523264
    %361 = vst.msk [vmem:[#allocation2 + $0x18] sm:$0xff] %vm360, 0.0
    %362 = vst [vmem:[#allocation2 + $0x20] sm:$0xff] 0.0
    %363 = vst [vmem:[#allocation2 + $0x28] sm:$0xff] 0.0
    %364 = vst [vmem:[#allocation2 + $0x30] sm:$0xff] 0.0
    %365 = vst.msk [vmem:[#allocation2 + $0x38] sm:$0xff] %vm360, 0.0
    %366 = vst [vmem:[#allocation2 + $0x40] sm:$0xff] 0.0
    %367 = vst [vmem:[#allocation2 + $0x48] sm:$0xff] 0.0
    %368 = vst [vmem:[#allocation2 + $0x50] sm:$0xff] 0.0
    %369 = vst.msk [vmem:[#allocation2 + $0x58] sm:$0xff] %vm360, 0.0
    %370 = vst [vmem:[#allocation2 + $0x60] sm:$0xff] 0.0
    %371 = vst [vmem:[#allocation2 + $0x68] sm:$0xff] 0.0
    %372 = vst [vmem:[#allocation2 + $0x70] sm:$0xff] 0.0
    %373 = vst.msk [vmem:[#allocation2 + $0x78] sm:$0xff] %vm360, 0.0
    %374 = vst [vmem:[#allocation2 + $0x80] sm:$0xff] 0.0
    %375 = vst [vmem:[#allocation2 + $0x88] sm:$0xff] 0.0
    %376 = vst [vmem:[#allocation2 + $0x90] sm:$0xff] 0.0
    %377 = vst.msk [vmem:[#allocation2 + $0x98] sm:$0xff] %vm360, 0.0
    %378 = vst [vmem:[#allocation2 + $0xa0] sm:$0xff] 0.0
    %379 = vst [vmem:[#allocation2 + $0xa8] sm:$0xff] 0.0
    %380 = vst [vmem:[#allocation2 + $0xb0] sm:$0xff] 0.0
    %381 = vst.msk [vmem:[#allocation2 + $0xb8] sm:$0xff] %vm360, 0.0
    %382 = vst [vmem:[#allocation2 + $0xc0] sm:$0xff] 0.0
    %383 = vst [vmem:[#allocation2 + $0xc8] sm:$0xff] 0.0
    %384 = vst [vmem:[#allocation2 + $0xd0] sm:$0xff] 0.0
    %385 = vst.msk [vmem:[#allocation2 + $0xd8] sm:$0xff] %vm360, 0.0
    %386 = vst [vmem:[#allocation2 + $0x28] sm:$0xff] %v251
    %387 = vst [vmem:[#allocation2 + $0x30] sm:$0xff] %v252
    %388 = vst [vmem:[#allocation2 + $0x48] sm:$0xff] %v253
    %389 = vst [vmem:[#allocation2 + $0x50] sm:$0xff] %v254
    %390 = vst [vmem:[#allocation2 + $0x68] sm:$0xff] %v255
    %391 = vst [vmem:[#allocation2 + $0x70] sm:$0xff] %v256
    %392 = vst [vmem:[#allocation2 + $0x88] sm:$0xff] %v257
    %393 = vst [vmem:[#allocation2 + $0x90] sm:$0xff] %v258
    %394 = vst [vmem:[#allocation2 + $0xa8] sm:$0xff] %v259
    %395 = vst [vmem:[#allocation2 + $0xb0] sm:$0xff] %v260
    %v396 = vld [vmem:[#allocation2] sm:$0x80]
    %v397 = vld [vmem:[#allocation2 + $0x8] sm:$0x80]
    %v398 = vld [vmem:[#allocation2 + $0x10] sm:$0x80]
    %v399 = vld [vmem:[#allocation2 + $0x20] sm:$0xff]
    %v400 = vld [vmem:[#allocation2 + $0x28] sm:$0xff]
    %v401 = vld [vmem:[#allocation2 + $0x30] sm:$0xff]
    %v402 = vld [vmem:[#allocation2 + $0x40] sm:$0xff]
    %v403 = vld [vmem:[#allocation2 + $0x48] sm:$0xff]
    %v404 = vld [vmem:[#allocation2 + $0x50] sm:$0xff]
    %v405 = vld [vmem:[#allocation2 + $0x60] sm:$0xff]
    %v406 = vld [vmem:[#allocation2 + $0x68] sm:$0xff]
    %v407 = vld [vmem:[#allocation2 + $0x70] sm:$0xff]
    %v408 = vld [vmem:[#allocation2 + $0x80] sm:$0xff]
    %v409 = vld [vmem:[#allocation2 + $0x88] sm:$0xff]
    %v410 = vld [vmem:[#allocation2 + $0x90] sm:$0xff]
    %v411 = vld [vmem:[#allocation2 + $0xa0] sm:$0x7f]
    %v412 = vld [vmem:[#allocation2 + $0xa8] sm:$0x7f]
    %v413 = vld [vmem:[#allocation2 + $0xb0] sm:$0x7f]
    %v414 = vsel %vm347, 1, 0
    %v415 = vsel %vm348, 1, 0
    %v416 = vsel %vm349, 1, 0
    %v417 = vsel %vm350, 1, 0
    %v418 = vsel %vm351, 1, 0
    %vm419 = vcmp.eq.s32.totalorder %v414, 1
    %vm420 = vcmp.eq.s32.totalorder %v415, 1
    %vm421 = vcmp.eq.s32.totalorder %v416, 1
    %vm422 = vcmp.eq.s32.totalorder %v417, 1
    %vm423 = vcmp.eq.s32.totalorder %v418, 1
    %vm442 = vcmask 1040384
    %v443 = vrot.slane %v396, 7
    %v444 = vrot.slane %v399, 7
    %v445 = vsel %vm442, %v443, %v444
    %v446 = vrot.slane %v397, 7
    %v447 = vrot.slane %v400, 7
    %v448 = vsel %vm442, %v446, %v447
    %v449 = vrot.slane %v398, 7
    %v450 = vrot.slane %v401, 7
    %v451 = vsel %vm442, %v449, %v450
    %v452 = vrot.slane %v402, 7
    %v453 = vsel %vm442, %v444, %v452
    %v454 = vrot.slane %v403, 7
    %v455 = vsel %vm442, %v447, %v454
    %v456 = vrot.slane %v404, 7
    %v457 = vsel %vm442, %v450, %v456
    %v458 = vrot.slane %v405, 7
    %v459 = vsel %vm442, %v452, %v458
    %v460 = vrot.slane %v406, 7
    %v461 = vsel %vm442, %v454, %v460
    %v462 = vrot.slane %v407, 7
    %v463 = vsel %vm442, %v456, %v462
    %v464 = vrot.slane %v408, 7
    %v465 = vsel %vm442, %v458, %v464
    %v466 = vrot.slane %v409, 7
    %v467 = vsel %vm442, %v460, %v466
    %v468 = vrot.slane %v410, 7
    %v469 = vsel %vm442, %v462, %v468
    %v470 = vrot.slane %v411, 7
    %v471 = vsel %vm442, %v464, %v470
    %v472 = vrot.slane %v412, 7
    %v473 = vsel %vm442, %v466, %v472
    %v474 = vrot.slane %v413, 7
    %v475 = vsel %vm442, %v468, %v474
    %476 = vrot.lane.b32.xlu0 %v445, 64
    %v477 = vpop.permute.xlu0 %476
    %478 = vrot.lane.b32.xlu0 %v448, 64
    %v479 = vpop.permute.xlu0 %478
    %480 = vrot.lane.b32.xlu0 %v451, 64
    %v481 = vpop.permute.xlu0 %480
    %482 = vrot.lane.b32.xlu0 %v453, 64
    %v483 = vpop.permute.xlu0 %482
    %484 = vrot.lane.b32.xlu0 %v455, 64
    %v485 = vpop.permute.xlu0 %484
    %486 = vrot.lane.b32.xlu0 %v457, 64
    %v487 = vpop.permute.xlu0 %486
    %488 = vrot.lane.b32.xlu0 %v459, 64
    %v489 = vpop.permute.xlu0 %488
    %490 = vrot.lane.b32.xlu0 %v461, 64
    %v491 = vpop.permute.xlu0 %490
    %492 = vrot.lane.b32.xlu0 %v463, 64
    %v493 = vpop.permute.xlu0 %492
    %494 = vrot.lane.b32.xlu0 %v465, 64
    %v495 = vpop.permute.xlu0 %494
    %496 = vrot.lane.b32.xlu0 %v467, 64
    %v497 = vpop.permute.xlu0 %496
    %498 = vrot.lane.b32.xlu0 %v469, 64
    %v499 = vpop.permute.xlu0 %498
    %500 = vrot.lane.b32.xlu0 %v471, 64
    %v501 = vpop.permute.xlu0 %500
    %502 = vrot.lane.b32.xlu0 %v473, 64
    %v503 = vpop.permute.xlu0 %502
    %504 = vrot.lane.b32.xlu0 %v475, 64
    %v505 = vpop.permute.xlu0 %504
    %v506 = vsel %vm360, %v477, %v479
    %v507 = vsel %vm360, %v479, %v481
    %v508 = vsel %vm360, %v483, %v485
    %v509 = vsel %vm360, %v485, %v487
    %v510 = vsel %vm360, %v489, %v491
    %v511 = vsel %vm360, %v491, %v493
    %v512 = vsel %vm360, %v495, %v497
    %v513 = vsel %vm360, %v497, %v499
    %v514 = vsel %vm360, %v501, %v503
    %v515 = vsel %vm360, %v503, %v505
    %v526 = vsel %vm419, %v506, 0.0
    %v527 = vsel %vm419, %v507, 0.0
    %v528 = vsel %vm420, %v508, 0.0
    %v529 = vsel %vm420, %v509, 0.0
    %v530 = vsel %vm421, %v510, 0.0
    %v531 = vsel %vm421, %v511, 0.0
    %v532 = vsel %vm422, %v512, 0.0
    %v533 = vsel %vm422, %v513, 0.0
    %v534 = vsel %vm423, %v514, 0.0
    %v535 = vsel %vm423, %v515, 0.0
    %v536 = vld [vmem:[%s4] ss:$8 sm:$0x3]
    %v538 = vlaneseq
    %v539 = vshrl.u32 %v538, 7
    %v540 = vsub.s32 0, %v539
    %v541 = vrot.slane %v536, %v540
    %v542 = vlaneseq
    %v543 = vshrl.u32 %v542, 7
    %v544 = vsub.s32 1, %v543
    %v545 = vrot.slane %v536, %v544
    %v548 = vmul.f32 %v526, %v541
    %v549 = vmul.f32 %v527, %v545
    %v550 = vmul.f32 %v528, %v541
    %v551 = vmul.f32 %v529, %v545
    %v552 = vmul.f32 %v530, %v541
    %v553 = vmul.f32 %v531, %v545
    %v554 = vmul.f32 %v532, %v541
    %v555 = vmul.f32 %v533, %v545
    %v556 = vmul.f32 %v534, %v541
    %v557 = vmul.f32 %v535, %v545
    %v558 = vadd.f32 %v548, 0.0
    %v559 = vadd.f32 %v549, 0.0
    %v560 = vadd.f32 %v550, 0.0
    %v561 = vadd.f32 %v551, 0.0
    %v562 = vadd.f32 %v552, 0.0
    %v563 = vadd.f32 %v553, 0.0
    %v564 = vadd.f32 %v554, 0.0
    %v565 = vadd.f32 %v555, 0.0
    %v566 = vadd.f32 %v556, 0.0
    %v567 = vadd.f32 %v557, 0.0
    %v578 = vsel %vm419, %v448, 0.0
    %v579 = vsel %vm419, %v451, 0.0
    %v580 = vsel %vm420, %v455, 0.0
    %v581 = vsel %vm420, %v457, 0.0
    %v582 = vsel %vm421, %v461, 0.0
    %v583 = vsel %vm421, %v463, 0.0
    %v584 = vsel %vm422, %v467, 0.0
    %v585 = vsel %vm422, %v469, 0.0
    %v586 = vsel %vm423, %v473, 0.0
    %v587 = vsel %vm423, %v475, 0.0
    %s588 = scalar_lea.vmem %s4, 1
    %v589 = vld [vmem:[%s588] ss:$8 sm:$0x3]
    %v591 = vlaneseq
    %v592 = vshrl.u32 %v591, 7
    %v593 = vsub.s32 0, %v592
    %v594 = vrot.slane %v589, %v593
    %v595 = vlaneseq
    %v596 = vshrl.u32 %v595, 7
    %v597 = vsub.s32 1, %v596
    %v598 = vrot.slane %v589, %v597
    %v601 = vmul.f32 %v578, %v594
    %v602 = vmul.f32 %v579, %v598
    %v603 = vmul.f32 %v580, %v594
    %v604 = vmul.f32 %v581, %v598
    %v605 = vmul.f32 %v582, %v594
    %v606 = vmul.f32 %v583, %v598
    %v607 = vmul.f32 %v584, %v594
    %v608 = vmul.f32 %v585, %v598
    %v609 = vmul.f32 %v586, %v594
    %v610 = vmul.f32 %v587, %v598
    %v611 = vadd.f32 %v558, %v601
    %v612 = vadd.f32 %v559, %v602
    %v613 = vadd.f32 %v560, %v603
    %v614 = vadd.f32 %v561, %v604
    %v615 = vadd.f32 %v562, %v605
    %v616 = vadd.f32 %v563, %v606
    %v617 = vadd.f32 %v564, %v607
    %v618 = vadd.f32 %v565, %v608
    %v619 = vadd.f32 %v566, %v609
    %v620 = vadd.f32 %v567, %v610
    %v621 = vld [vmem:[#allocation2 + $0x18] sm:$0x80]
    %v622 = vld [vmem:[#allocation2 + $0x38] sm:$0xff]
    %v623 = vld [vmem:[#allocation2 + $0x58] sm:$0xff]
    %v624 = vld [vmem:[#allocation2 + $0x78] sm:$0xff]
    %v625 = vld [vmem:[#allocation2 + $0x98] sm:$0xff]
    %v626 = vld [vmem:[#allocation2 + $0xb8] sm:$0x7f]
    %v633 = vrot.slane %v621, 7
    %v634 = vrot.slane %v622, 7
    %v635 = vsel %vm442, %v633, %v634
    %v636 = vrot.slane %v623, 7
    %v637 = vsel %vm442, %v634, %v636
    %v638 = vrot.slane %v624, 7
    %v639 = vsel %vm442, %v636, %v638
    %v640 = vrot.slane %v625, 7
    %v641 = vsel %vm442, %v638, %v640
    %v642 = vrot.slane %v626, 7
    %v643 = vsel %vm442, %v640, %v642
    %644 = vrot.lane.b32.xlu0 %v635, 64
    %v645 = vpop.permute.xlu0 %644
    %646 = vrot.lane.b32.xlu0 %v637, 64
    %v647 = vpop.permute.xlu0 %646
    %648 = vrot.lane.b32.xlu0 %v639, 64
    %v649 = vpop.permute.xlu0 %648
    %650 = vrot.lane.b32.xlu0 %v641, 64
    %v651 = vpop.permute.xlu0 %650
    %652 = vrot.lane.b32.xlu0 %v643, 64
    %v653 = vpop.permute.xlu0 %652
    %v654 = vsel %vm360, %v481, %v645
    %v655 = vsel %vm360, %v487, %v647
    %v656 = vsel %vm360, %v493, %v649
    %v657 = vsel %vm360, %v499, %v651
    %v658 = vsel %vm360, %v505, %v653
    %v664 = vsel %vm419, %v654, 0.0
    %v665 = vsel %vm420, %v655, 0.0
    %v666 = vsel %vm421, %v656, 0.0
    %v667 = vsel %vm422, %v657, 0.0
    %v668 = vsel %vm423, %v658, 0.0
    %s669 = scalar_lea.vmem %s4, 2
    %v670 = vld [vmem:[%s669] ss:$8 sm:$0x3]
    %v672 = vlaneseq
    %v673 = vshrl.u32 %v672, 7
    %v674 = vsub.s32 0, %v673
    %v675 = vrot.slane %v670, %v674
    %v676 = vlaneseq
    %v677 = vshrl.u32 %v676, 7
    %v678 = vsub.s32 1, %v677
    %v679 = vrot.slane %v670, %v678
    %v682 = vmul.f32 %v527, %v675
    %v683 = vmul.f32 %v664, %v679
    %v684 = vmul.f32 %v529, %v675
    %v685 = vmul.f32 %v665, %v679
    %v686 = vmul.f32 %v531, %v675
    %v687 = vmul.f32 %v666, %v679
    %v688 = vmul.f32 %v533, %v675
    %v689 = vmul.f32 %v667, %v679
    %v690 = vmul.f32 %v535, %v675
    %v691 = vmul.f32 %v668, %v679
    %v692 = vadd.f32 %v611, %v682
    %v693 = vadd.f32 %v612, %v683
    %v694 = vadd.f32 %v613, %v684
    %v695 = vadd.f32 %v614, %v685
    %v696 = vadd.f32 %v615, %v686
    %v697 = vadd.f32 %v616, %v687
    %v698 = vadd.f32 %v617, %v688
    %v699 = vadd.f32 %v618, %v689
    %v700 = vadd.f32 %v619, %v690
    %v701 = vadd.f32 %v620, %v691
    %v702 = vld [vmem:[#allocation2 + $0xa0] sm:$0xff]
    %v703 = vld [vmem:[#allocation2 + $0xa8] sm:$0xff]
    %v704 = vld [vmem:[#allocation2 + $0xb0] sm:$0xff]
    %s705 = scalar_lea.vmem %s4, 3
    %v706 = vld [vmem:[%s705] ss:$8 sm:$0x3]
    %v708 = vlaneseq
    %v709 = vshrl.u32 %v708, 7
    %v710 = vsub.s32 0, %v709
    %v711 = vrot.slane %v706, %v710
    %v712 = vlaneseq
    %v713 = vshrl.u32 %v712, 7
    %v714 = vsub.s32 1, %v713
    %v715 = vrot.slane %v706, %v714
    %716 = vrot.lane.b32.xlu0 %v711, 64
    %v717 = vpop.permute.xlu0 %716
    %718 = vrot.lane.b32.xlu0 %v715, 64
    %v719 = vpop.permute.xlu0 %718
    %v720 = vsel %vm360, %v717, %v719
    %v724 = vmul.f32 %v399, %v717
    %v725 = vmul.f32 %v400, %v720
    %v726 = vmul.f32 %v401, %v719
    %v727 = vmul.f32 %v402, %v717
    %v728 = vmul.f32 %v403, %v720
    %v729 = vmul.f32 %v404, %v719
    %v730 = vmul.f32 %v405, %v717
    %v731 = vmul.f32 %v406, %v720
    %v732 = vmul.f32 %v407, %v719
    %v733 = vmul.f32 %v408, %v717
    %v734 = vmul.f32 %v409, %v720
    %v735 = vmul.f32 %v410, %v719
    %v736 = vmul.f32 %v702, %v717
    %v737 = vmul.f32 %v703, %v720
    %v738 = vmul.f32 %v704, %v719
    %754 = vrot.lane.b32.xlu0 %v724, 64
    %v755 = vpop.permute.xlu0 %754
    %756 = vrot.lane.b32.xlu0 %v725, 64
    %v757 = vpop.permute.xlu0 %756
    %758 = vrot.lane.b32.xlu0 %v726, 64
    %v759 = vpop.permute.xlu0 %758
    %760 = vrot.lane.b32.xlu0 %v727, 64
    %v761 = vpop.permute.xlu0 %760
    %762 = vrot.lane.b32.xlu0 %v728, 64
    %v763 = vpop.permute.xlu0 %762
    %764 = vrot.lane.b32.xlu0 %v729, 64
    %v765 = vpop.permute.xlu0 %764
    %766 = vrot.lane.b32.xlu0 %v730, 64
    %v767 = vpop.permute.xlu0 %766
    %768 = vrot.lane.b32.xlu0 %v731, 64
    %v769 = vpop.permute.xlu0 %768
    %770 = vrot.lane.b32.xlu0 %v732, 64
    %v771 = vpop.permute.xlu0 %770
    %772 = vrot.lane.b32.xlu0 %v733, 64
    %v773 = vpop.permute.xlu0 %772
    %774 = vrot.lane.b32.xlu0 %v734, 64
    %v775 = vpop.permute.xlu0 %774
    %776 = vrot.lane.b32.xlu0 %v735, 64
    %v777 = vpop.permute.xlu0 %776
    %778 = vrot.lane.b32.xlu0 %v736, 64
    %v779 = vpop.permute.xlu0 %778
    %780 = vrot.lane.b32.xlu0 %v737, 64
    %v781 = vpop.permute.xlu0 %780
    %782 = vrot.lane.b32.xlu0 %v738, 64
    %v783 = vpop.permute.xlu0 %782
    %v784 = vsel %vm360, %v755, %v757
    %v785 = vsel %vm360, %v757, %v759
    %v786 = vsel %vm360, %v761, %v763
    %v787 = vsel %vm360, %v763, %v765
    %v788 = vsel %vm360, %v767, %v769
    %v789 = vsel %vm360, %v769, %v771
    %v790 = vsel %vm360, %v773, %v775
    %v791 = vsel %vm360, %v775, %v777
    %v792 = vsel %vm360, %v779, %v781
    %v793 = vsel %vm360, %v781, %v783
    %v804 = vadd.f32 %v692, %v784
    %v805 = vadd.f32 %v693, %v785
    %v806 = vadd.f32 %v694, %v786
    %v807 = vadd.f32 %v695, %v787
    %v808 = vadd.f32 %v696, %v788
    %v809 = vadd.f32 %v697, %v789
    %v810 = vadd.f32 %v698, %v790
    %v811 = vadd.f32 %v699, %v791
    %v812 = vadd.f32 %v700, %v792
    %v813 = vadd.f32 %v701, %v793
    %s814 = scalar_lea.vmem %s4, 4
    %v815 = vld [vmem:[%s814] ss:$8 sm:$0x3]
    %v817 = vlaneseq
    %v818 = vshrl.u32 %v817, 7
    %v819 = vsub.s32 0, %v818
    %v820 = vrot.slane %v815, %v819
    %v821 = vlaneseq
    %v822 = vshrl.u32 %v821, 7
    %v823 = vsub.s32 1, %v822
    %v824 = vrot.slane %v815, %v823
    %v827 = vmul.f32 %v400, %v820
    %v828 = vmul.f32 %v401, %v824
    %v829 = vmul.f32 %v403, %v820
    %v830 = vmul.f32 %v404, %v824
    %v831 = vmul.f32 %v406, %v820
    %v832 = vmul.f32 %v407, %v824
    %v833 = vmul.f32 %v409, %v820
    %v834 = vmul.f32 %v410, %v824
    %v835 = vmul.f32 %v703, %v820
    %v836 = vmul.f32 %v704, %v824
    %v837 = vadd.f32 %v804, %v827
    %v838 = vadd.f32 %v805, %v828
    %v839 = vadd.f32 %v806, %v829
    %v840 = vadd.f32 %v807, %v830
    %v841 = vadd.f32 %v808, %v831
    %v842 = vadd.f32 %v809, %v832
    %v843 = vadd.f32 %v810, %v833
    %v844 = vadd.f32 %v811, %v834
    %v845 = vadd.f32 %v812, %v835
    %v846 = vadd.f32 %v813, %v836
    %v847 = vld [vmem:[#allocation2 + $0xb8] sm:$0xff]
    %s848 = scalar_lea.vmem %s4, 5
    %v849 = vld [vmem:[%s848] ss:$8 sm:$0x3]
    %v851 = vlaneseq
    %v852 = vshrl.u32 %v851, 7
    %v853 = vsub.s32 0, %v852
    %v854 = vrot.slane %v849, %v853
    %v855 = vlaneseq
    %v856 = vshrl.u32 %v855, 7
    %v857 = vsub.s32 1, %v856
    %v858 = vrot.slane %v849, %v857
    %859 = vrot.lane.b32.xlu0 %v854, 64
    %v860 = vpop.permute.xlu0 %859
    %861 = vrot.lane.b32.xlu0 %v858, 64
    %v862 = vpop.permute.xlu0 %861
    %v863 = vsel %vm360, %v860, %v862
    %v867 = vmul.f32 %v400, %v860
    %v868 = vmul.f32 %v401, %v863
    %v869 = vmul.f32 %v622, %v862
    %v870 = vmul.f32 %v403, %v860
    %v871 = vmul.f32 %v404, %v863
    %v872 = vmul.f32 %v623, %v862
    %v873 = vmul.f32 %v406, %v860
    %v874 = vmul.f32 %v407, %v863
    %v875 = vmul.f32 %v624, %v862
    %v876 = vmul.f32 %v409, %v860
    %v877 = vmul.f32 %v410, %v863
    %v878 = vmul.f32 %v625, %v862
    %v879 = vmul.f32 %v703, %v860
    %v880 = vmul.f32 %v704, %v863
    %v881 = vmul.f32 %v847, %v862
    %897 = vrot.lane.b32.xlu0 %v867, 64
    %v898 = vpop.permute.xlu0 %897
    %899 = vrot.lane.b32.xlu0 %v868, 64
    %v900 = vpop.permute.xlu0 %899
    %901 = vrot.lane.b32.xlu0 %v869, 64
    %v902 = vpop.permute.xlu0 %901
    %903 = vrot.lane.b32.xlu0 %v870, 64
    %v904 = vpop.permute.xlu0 %903
    %905 = vrot.lane.b32.xlu0 %v871, 64
    %v906 = vpop.permute.xlu0 %905
    %907 = vrot.lane.b32.xlu0 %v872, 64
    %v908 = vpop.permute.xlu0 %907
    %909 = vrot.lane.b32.xlu0 %v873, 64
    %v910 = vpop.permute.xlu0 %909
    %911 = vrot.lane.b32.xlu0 %v874, 64
    %v912 = vpop.permute.xlu0 %911
    %913 = vrot.lane.b32.xlu0 %v875, 64
    %v914 = vpop.permute.xlu0 %913
    %915 = vrot.lane.b32.xlu0 %v876, 64
    %v916 = vpop.permute.xlu0 %915
    %917 = vrot.lane.b32.xlu0 %v877, 64
    %v918 = vpop.permute.xlu0 %917
    %919 = vrot.lane.b32.xlu0 %v878, 64
    %v920 = vpop.permute.xlu0 %919
    %921 = vrot.lane.b32.xlu0 %v879, 64
    %v922 = vpop.permute.xlu0 %921
    %923 = vrot.lane.b32.xlu0 %v880, 64
    %v924 = vpop.permute.xlu0 %923
    %925 = vrot.lane.b32.xlu0 %v881, 64
    %v926 = vpop.permute.xlu0 %925
    %v927 = vsel %vm360, %v898, %v900
    %v928 = vsel %vm360, %v900, %v902
    %v929 = vsel %vm360, %v904, %v906
    %v930 = vsel %vm360, %v906, %v908
    %v931 = vsel %vm360, %v910, %v912
    %v932 = vsel %vm360, %v912, %v914
    %v933 = vsel %vm360, %v916, %v918
    %v934 = vsel %vm360, %v918, %v920
    %v935 = vsel %vm360, %v922, %v924
    %v936 = vsel %vm360, %v924, %v926
    %v947 = vadd.f32 %v837, %v927
    %v948 = vadd.f32 %v838, %v928
    %v949 = vadd.f32 %v839, %v929
    %v950 = vadd.f32 %v840, %v930
    %v951 = vadd.f32 %v841, %v931
    %v952 = vadd.f32 %v842, %v932
    %v953 = vadd.f32 %v843, %v933
    %v954 = vadd.f32 %v844, %v934
    %v955 = vadd.f32 %v845, %v935
    %v956 = vadd.f32 %v846, %v936
    %v957 = vld [vmem:[#allocation2 + $0x20] sm:$0xfe]
    %v958 = vld [vmem:[#allocation2 + $0x28] sm:$0xfe]
    %v959 = vld [vmem:[#allocation2 + $0x30] sm:$0xfe]
    %v960 = vld [vmem:[#allocation2 + $0xc0] sm:$0x1]
    %v961 = vld [vmem:[#allocation2 + $0xc8] sm:$0x1]
    %v962 = vld [vmem:[#allocation2 + $0xd0] sm:$0x1]
    %v963 = vsel %vm352, 1, 0
    %v964 = vsel %vm353, 1, 0
    %v965 = vsel %vm354, 1, 0
    %v966 = vsel %vm355, 1, 0
    %v967 = vsel %vm356, 1, 0
    %vm968 = vcmp.eq.s32.totalorder %v963, 1
    %vm969 = vcmp.eq.s32.totalorder %v964, 1
    %vm970 = vcmp.eq.s32.totalorder %v965, 1
    %vm971 = vcmp.eq.s32.totalorder %v966, 1
    %vm972 = vcmp.eq.s32.totalorder %v967, 1
    %vm982 = vcmask 1046528
    %v983 = vrot.slane %v957, 1
    %v984 = vrot.slane %v402, 1
    %v985 = vsel %vm982, %v983, %v984
    %v986 = vrot.slane %v958, 1
    %v987 = vrot.slane %v403, 1
    %v988 = vsel %vm982, %v986, %v987
    %v989 = vrot.slane %v959, 1
    %v990 = vrot.slane %v404, 1
    %v991 = vsel %vm982, %v989, %v990
    %v992 = vrot.slane %v405, 1
    %v993 = vsel %vm982, %v984, %v992
    %v994 = vrot.slane %v406, 1
    %v995 = vsel %vm982, %v987, %v994
    %v996 = vrot.slane %v407, 1
    %v997 = vsel %vm982, %v990, %v996
    %v998 = vrot.slane %v408, 1
    %v999 = vsel %vm982, %v992, %v998
    %v1000 = vrot.slane %v409, 1
    %v1001 = vsel %vm982, %v994, %v1000
    %v1002 = vrot.slane %v410, 1
    %v1003 = vsel %vm982, %v996, %v1002
    %v1004 = vrot.slane %v702, 1
    %v1005 = vsel %vm982, %v998, %v1004
    %v1006 = vrot.slane %v703, 1
    %v1007 = vsel %vm982, %v1000, %v1006
    %v1008 = vrot.slane %v704, 1
    %v1009 = vsel %vm982, %v1002, %v1008
    %v1010 = vrot.slane %v960, 1
    %v1011 = vsel %vm982, %v1004, %v1010
    %v1012 = vrot.slane %v961, 1
    %v1013 = vsel %vm982, %v1006, %v1012
    %v1014 = vrot.slane %v962, 1
    %v1015 = vsel %vm982, %v1008, %v1014
    %1016 = vrot.lane.b32.xlu0 %v985, 64
    %v1017 = vpop.permute.xlu0 %1016
    %1018 = vrot.lane.b32.xlu0 %v988, 64
    %v1019 = vpop.permute.xlu0 %1018
    %1020 = vrot.lane.b32.xlu0 %v991, 64
    %v1021 = vpop.permute.xlu0 %1020
    %1022 = vrot.lane.b32.xlu0 %v993, 64
    %v1023 = vpop.permute.xlu0 %1022
    %1024 = vrot.lane.b32.xlu0 %v995, 64
    %v1025 = vpop.permute.xlu0 %1024
    %1026 = vrot.lane.b32.xlu0 %v997, 64
    %v1027 = vpop.permute.xlu0 %1026
    %1028 = vrot.lane.b32.xlu0 %v999, 64
    %v1029 = vpop.permute.xlu0 %1028
    %1030 = vrot.lane.b32.xlu0 %v1001, 64
    %v1031 = vpop.permute.xlu0 %1030
    %1032 = vrot.lane.b32.xlu0 %v1003, 64
    %v1033 = vpop.permute.xlu0 %1032
    %1034 = vrot.lane.b32.xlu0 %v1005, 64
    %v1035 = vpop.permute.xlu0 %1034
    %1036 = vrot.lane.b32.xlu0 %v1007, 64
    %v1037 = vpop.permute.xlu0 %1036
    %1038 = vrot.lane.b32.xlu0 %v1009, 64
    %v1039 = vpop.permute.xlu0 %1038
    %1040 = vrot.lane.b32.xlu0 %v1011, 64
    %v1041 = vpop.permute.xlu0 %1040
    %1042 = vrot.lane.b32.xlu0 %v1013, 64
    %v1043 = vpop.permute.xlu0 %1042
    %1044 = vrot.lane.b32.xlu0 %v1015, 64
    %v1045 = vpop.permute.xlu0 %1044
    %v1046 = vsel %vm360, %v1017, %v1019
    %v1047 = vsel %vm360, %v1019, %v1021
    %v1048 = vsel %vm360, %v1023, %v1025
    %v1049 = vsel %vm360, %v1025, %v1027
    %v1050 = vsel %vm360, %v1029, %v1031
    %v1051 = vsel %vm360, %v1031, %v1033
    %v1052 = vsel %vm360, %v1035, %v1037
    %v1053 = vsel %vm360, %v1037, %v1039
    %v1054 = vsel %vm360, %v1041, %v1043
    %v1055 = vsel %vm360, %v1043, %v1045
    %v1066 = vsel %vm968, %v1046, 0.0
    %v1067 = vsel %vm968, %v1047, 0.0
    %v1068 = vsel %vm969, %v1048, 0.0
    %v1069 = vsel %vm969, %v1049, 0.0
    %v1070 = vsel %vm970, %v1050, 0.0
    %v1071 = vsel %vm970, %v1051, 0.0
    %v1072 = vsel %vm971, %v1052, 0.0
    %v1073 = vsel %vm971, %v1053, 0.0
    %v1074 = vsel %vm972, %v1054, 0.0
    %v1075 = vsel %vm972, %v1055, 0.0
    %s1076 = scalar_lea.vmem %s4, 6
    %v1077 = vld [vmem:[%s1076] ss:$8 sm:$0x3]
    %v1079 = vlaneseq
    %v1080 = vshrl.u32 %v1079, 7
    %v1081 = vsub.s32 0, %v1080
    %v1082 = vrot.slane %v1077, %v1081
    %v1083 = vlaneseq
    %v1084 = vshrl.u32 %v1083, 7
    %v1085 = vsub.s32 1, %v1084
    %v1086 = vrot.slane %v1077, %v1085
    %v1089 = vmul.f32 %v1066, %v1082
    %v1090 = vmul.f32 %v1067, %v1086
    %v1091 = vmul.f32 %v1068, %v1082
    %v1092 = vmul.f32 %v1069, %v1086
    %v1093 = vmul.f32 %v1070, %v1082
    %v1094 = vmul.f32 %v1071, %v1086
    %v1095 = vmul.f32 %v1072, %v1082
    %v1096 = vmul.f32 %v1073, %v1086
    %v1097 = vmul.f32 %v1074, %v1082
    %v1098 = vmul.f32 %v1075, %v1086
    %v1099 = vadd.f32 %v947, %v1089
    %v1100 = vadd.f32 %v948, %v1090
    %v1101 = vadd.f32 %v949, %v1091
    %v1102 = vadd.f32 %v950, %v1092
    %v1103 = vadd.f32 %v951, %v1093
    %v1104 = vadd.f32 %v952, %v1094
    %v1105 = vadd.f32 %v953, %v1095
    %v1106 = vadd.f32 %v954, %v1096
    %v1107 = vadd.f32 %v955, %v1097
    %v1108 = vadd.f32 %v956, %v1098
    %v1119 = vsel %vm968, %v988, 0.0
    %v1120 = vsel %vm968, %v991, 0.0
    %v1121 = vsel %vm969, %v995, 0.0
    %v1122 = vsel %vm969, %v997, 0.0
    %v1123 = vsel %vm970, %v1001, 0.0
    %v1124 = vsel %vm970, %v1003, 0.0
    %v1125 = vsel %vm971, %v1007, 0.0
    %v1126 = vsel %vm971, %v1009, 0.0
    %v1127 = vsel %vm972, %v1013, 0.0
    %v1128 = vsel %vm972, %v1015, 0.0
    %s1129 = scalar_lea.vmem %s4, 7
    %v1130 = vld [vmem:[%s1129] ss:$8 sm:$0x3]
    %v1132 = vlaneseq
    %v1133 = vshrl.u32 %v1132, 7
    %v1134 = vsub.s32 0, %v1133
    %v1135 = vrot.slane %v1130, %v1134
    %v1136 = vlaneseq
    %v1137 = vshrl.u32 %v1136, 7
    %v1138 = vsub.s32 1, %v1137
    %v1139 = vrot.slane %v1130, %v1138
    %v1142 = vmul.f32 %v1119, %v1135
    %v1143 = vmul.f32 %v1120, %v1139
    %v1144 = vmul.f32 %v1121, %v1135
    %v1145 = vmul.f32 %v1122, %v1139
    %v1146 = vmul.f32 %v1123, %v1135
    %v1147 = vmul.f32 %v1124, %v1139
    %v1148 = vmul.f32 %v1125, %v1135
    %v1149 = vmul.f32 %v1126, %v1139
    %v1150 = vmul.f32 %v1127, %v1135
    %v1151 = vmul.f32 %v1128, %v1139
    %v1152 = vadd.f32 %v1099, %v1142
    %v1153 = vadd.f32 %v1100, %v1143
    %v1154 = vadd.f32 %v1101, %v1144
    %v1155 = vadd.f32 %v1102, %v1145
    %v1156 = vadd.f32 %v1103, %v1146
    %v1157 = vadd.f32 %v1104, %v1147
    %v1158 = vadd.f32 %v1105, %v1148
    %v1159 = vadd.f32 %v1106, %v1149
    %v1160 = vadd.f32 %v1107, %v1150
    %v1161 = vadd.f32 %v1108, %v1151
    %v1162 = vld [vmem:[#allocation2 + $0x38] sm:$0xfe]
    %v1163 = vld [vmem:[#allocation2 + $0xd8] sm:$0x1]
    %v1167 = vrot.slane %v1162, 1
    %v1168 = vrot.slane %v623, 1
    %v1169 = vsel %vm982, %v1167, %v1168
    %v1170 = vrot.slane %v624, 1
    %v1171 = vsel %vm982, %v1168, %v1170
    %v1172 = vrot.slane %v625, 1
    %v1173 = vsel %vm982, %v1170, %v1172
    %v1174 = vrot.slane %v847, 1
    %v1175 = vsel %vm982, %v1172, %v1174
    %v1176 = vrot.slane %v1163, 1
    %v1177 = vsel %vm982, %v1174, %v1176
    %1178 = vrot.lane.b32.xlu0 %v1169, 64
    %v1179 = vpop.permute.xlu0 %1178
    %1180 = vrot.lane.b32.xlu0 %v1171, 64
    %v1181 = vpop.permute.xlu0 %1180
    %1182 = vrot.lane.b32.xlu0 %v1173, 64
    %v1183 = vpop.permute.xlu0 %1182
    %1184 = vrot.lane.b32.xlu0 %v1175, 64
    %v1185 = vpop.permute.xlu0 %1184
    %1186 = vrot.lane.b32.xlu0 %v1177, 64
    %v1187 = vpop.permute.xlu0 %1186
    %v1188 = vsel %vm360, %v1021, %v1179
    %v1189 = vsel %vm360, %v1027, %v1181
    %v1190 = vsel %vm360, %v1033, %v1183
    %v1191 = vsel %vm360, %v1039, %v1185
    %v1192 = vsel %vm360, %v1045, %v1187
    %v1198 = vsel %vm968, %v1188, 0.0
    %v1199 = vsel %vm969, %v1189, 0.0
    %v1200 = vsel %vm970, %v1190, 0.0
    %v1201 = vsel %vm971, %v1191, 0.0
    %v1202 = vsel %vm972, %v1192, 0.0
    %s1203 = scalar_lea.vmem %s4, 16
    %v1204 = vld [vmem:[%s1203] ss:$8 sm:$0x3]
    %v1206 = vlaneseq
    %v1207 = vshrl.u32 %v1206, 7
    %v1208 = vsub.s32 0, %v1207
    %v1209 = vrot.slane %v1204, %v1208
    %v1210 = vlaneseq
    %v1211 = vshrl.u32 %v1210, 7
    %v1212 = vsub.s32 1, %v1211
    %v1213 = vrot.slane %v1204, %v1212
    %v1216 = vmul.f32 %v1067, %v1209
    %v1217 = vmul.f32 %v1198, %v1213
    %v1218 = vmul.f32 %v1069, %v1209
    %v1219 = vmul.f32 %v1199, %v1213
    %v1220 = vmul.f32 %v1071, %v1209
    %v1221 = vmul.f32 %v1200, %v1213
    %v1222 = vmul.f32 %v1073, %v1209
    %v1223 = vmul.f32 %v1201, %v1213
    %v1224 = vmul.f32 %v1075, %v1209
    %v1225 = vmul.f32 %v1202, %v1213
    %v1226 = vadd.f32 %v1152, %v1216
    %v1227 = vadd.f32 %v1153, %v1217
    %v1228 = vadd.f32 %v1154, %v1218
    %v1229 = vadd.f32 %v1155, %v1219
    %v1230 = vadd.f32 %v1156, %v1220
    %v1231 = vadd.f32 %v1157, %v1221
    %v1232 = vadd.f32 %v1158, %v1222
    %v1233 = vadd.f32 %v1159, %v1223
    %v1234 = vadd.f32 %v1160, %v1224
    %v1235 = vadd.f32 %v1161, %v1225
    %v1236 = vld [vmem:[%s5] sm:$0x3]
    %v1238 = vlaneseq
    %v1239 = vshrl.u32 %v1238, 7
    %v1240 = vsub.s32 0, %v1239
    %v1241 = vrot.slane %v1236, %v1240
    %v1242 = vlaneseq
    %v1243 = vshrl.u32 %v1242, 7
    %v1244 = vsub.s32 1, %v1243
    %v1245 = vrot.slane %v1236, %v1244
    %v1248 = vadd.f32 %v1226, %v1241
    %v1249 = vadd.f32 %v1227, %v1245
    %v1250 = vadd.f32 %v1228, %v1241
    %v1251 = vadd.f32 %v1229, %v1245
    %v1252 = vadd.f32 %v1230, %v1241
    %v1253 = vadd.f32 %v1231, %v1245
    %v1254 = vadd.f32 %v1232, %v1241
    %v1255 = vadd.f32 %v1233, %v1245
    %v1256 = vadd.f32 %v1234, %v1241
    %v1257 = vadd.f32 %v1235, %v1245
    %v1258 = vmax.f32 %v1248, 0.0
    %v1259 = vmax.f32 %v1249, 0.0
    %v1260 = vmax.f32 %v1250, 0.0
    %v1261 = vmax.f32 %v1251, 0.0
    %v1262 = vmax.f32 %v1252, 0.0
    %v1263 = vmax.f32 %v1253, 0.0
    %v1264 = vmax.f32 %v1254, 0.0
    %v1265 = vmax.f32 %v1255, 0.0
    %v1266 = vmax.f32 %v1256, 0.0
    %v1267 = vmax.f32 %v1257, 0.0
    %v1268 = vld [vmem:[%s6] sm:$0xff]
    %v1269 = vld [vmem:[%s6 + $0x8] sm:$0xff]
    %v1270 = vld [vmem:[%s6 + $0x10] sm:$0xff]
    %v1271 = vld [vmem:[%s6 + $0x18] sm:$0xff]
    %v1272 = vld [vmem:[%s6 + $0x20] sm:$0xff]
    %v1273 = vld [vmem:[%s6 + $0x28] sm:$0xff]
    %v1274 = vld [vmem:[%s6 + $0x30] sm:$0xff]
    %v1275 = vld [vmem:[%s6 + $0x38] sm:$0xff]
    %v1276 = vld [vmem:[%s6 + $0x40] sm:$0xff]
    %v1277 = vld [vmem:[%s6 + $0x48] sm:$0xff]
    %v1278 = vld [vmem:[%s6 + $0x50] sm:$0xff]
    %v1279 = vld [vmem:[%s6 + $0x58] sm:$0xff]
    %v1280 = vld [vmem:[%s6 + $0x60] sm:$0xff]
    %v1281 = vld [vmem:[%s6 + $0x68] sm:$0xff]
    %v1282 = vld [vmem:[%s6 + $0x70] sm:$0xff]
    %v1283 = vld [vmem:[%s6 + $0x78] sm:$0xff]
    %v1284 = vld [vmem:[%s6 + $0x80] sm:$0xff]
    %v1285 = vld [vmem:[%s6 + $0x88] sm:$0xff]
    %v1286 = vld [vmem:[%s6 + $0x90] sm:$0xff]
    %v1287 = vld [vmem:[%s6 + $0x98] sm:$0xff]
    %v1288 = vld [vmem:[%s6 + $0xa0] sm:$0xff]
    %v1289 = vld [vmem:[%s6 + $0xa8] sm:$0xff]
    %v1290 = vld [vmem:[%s6 + $0xb0] sm:$0xff]
    %v1291 = vld [vmem:[%s6 + $0xb8] sm:$0xff]
    %v1292 = vld [vmem:[%s6 + $0xc0] sm:$0xff]
    %v1293 = vld [vmem:[%s6 + $0xc8] sm:$0xff]
    %v1294 = vld [vmem:[%s6 + $0xd0] sm:$0xff]
    %v1295 = vld [vmem:[%s6 + $0xd8] sm:$0xff]
    %v1296 = vld [vmem:[%s6 + $0xe0] sm:$0xff]
    %v1297 = vld [vmem:[%s6 + $0xe8] sm:$0xff]
    %v1298 = vld [vmem:[%s6 + $0xf0] sm:$0xff]
    %v1299 = vld [vmem:[%s6 + $0xf8] sm:$0xff]
    %v1300 = vld [vmem:[%s6 + $0x100] sm:$0xff]
    %v1301 = vld [vmem:[%s6 + $0x108] sm:$0xff]
    %v1302 = vld [vmem:[%s6 + $0x110] sm:$0xff]
    %v1303 = vld [vmem:[%s6 + $0x118] sm:$0xff]
    %v1304 = vld [vmem:[%s6 + $0x120] sm:$0xff]
    %v1305 = vld [vmem:[%s6 + $0x128] sm:$0xff]
    %v1306 = vld [vmem:[%s6 + $0x130] sm:$0xff]
    %v1307 = vld [vmem:[%s6 + $0x138] sm:$0xff]
    %v1308 = vld [vmem:[%s6 + $0x140] sm:$0xff]
    %v1309 = vld [vmem:[%s6 + $0x148] sm:$0xff]
    %v1310 = vld [vmem:[%s6 + $0x150] sm:$0xff]
    %v1311 = vld [vmem:[%s6 + $0x158] sm:$0xff]
    %v1312 = vld [vmem:[%s6 + $0x160] sm:$0xff]
    %v1313 = vld [vmem:[%s6 + $0x168] sm:$0xff]
    %v1314 = vld [vmem:[%s6 + $0x170] sm:$0xff]
    %v1315 = vld [vmem:[%s6 + $0x178] sm:$0xff]
    %v1316 = vld [vmem:[%s6 + $0x180] sm:$0xff]
    %v1317 = vld [vmem:[%s6 + $0x188] sm:$0xff]
    %v1318 = vld [vmem:[%s6 + $0x190] sm:$0xff]
    %v1319 = vld [vmem:[%s6 + $0x198] sm:$0xff]
    %v1320 = vld [vmem:[%s6 + $0x1a0] sm:$0xff]
    %v1321 = vld [vmem:[%s6 + $0x1a8] sm:$0xff]
    %v1322 = vld [vmem:[%s6 + $0x1b0] sm:$0xff]
    %v1323 = vld [vmem:[%s6 + $0x1b8] sm:$0xff]
    %v1324 = vld [vmem:[%s6 + $0x1c0] sm:$0xff]
    %v1325 = vld [vmem:[%s6 + $0x1c8] sm:$0xff]
    %v1326 = vld [vmem:[%s6 + $0x1d0] sm:$0xff]
    %v1327 = vld [vmem:[%s6 + $0x1d8] sm:$0xff]
    %v1328 = vld [vmem:[%s6 + $0x1e0] sm:$0xff]
    %v1329 = vld [vmem:[%s6 + $0x1e8] sm:$0xff]
    %v1330 = vld [vmem:[%s6 + $0x1f0] sm:$0xff]
    %v1331 = vld [vmem:[%s6 + $0x1f8] sm:$0xff]
    %v1332 = vld [vmem:[%s7] sm:$0x3]
    %v1334 = vlaneseq
    %v1335 = vshrl.u32 %v1334, 7
    %v1336 = vsub.s32 0, %v1335
    %v1337 = vrot.slane %v1332, %v1336
    %v1338 = vlaneseq
    %v1339 = vshrl.u32 %v1338, 7
    %v1340 = vsub.s32 1, %v1339
    %v1341 = vrot.slane %v1332, %v1340
    %1344 = vmatprep.subr.mxu0 %v1299
    %1345 = vmatpush1.msra.mxu0 %v1298
    %1346 = vmatprep.subr.mxu0 %v1297
    %1347 = vmatpush1.msra.mxu0 %v1296
    %1348 = vmatprep.subr.mxu0 %v1295
    %1349 = vmatpush1.msra.mxu0 %v1294
    %1350 = vmatprep.subr.mxu0 %v1293
    %1351 = vmatpush1.msra.mxu0 %v1292
    %1352 = vmatprep.subr.mxu0 %v1291
    %1353 = vmatpush1.msra.mxu0 %v1290
    %1354 = vmatprep.subr.mxu0 %v1289
    %1355 = vmatpush1.msra.mxu0 %v1288
    %1356 = vmatprep.subr.mxu0 %v1287
    %1357 = vmatpush1.msra.mxu0 %v1286
    %1358 = vmatprep.subr.mxu0 %v1285
    %1359 = vmatpush1.msra.mxu0 %v1284
    %1360 = vmatprep.subr.mxu0 %v1283
    %1361 = vmatpush1.msra.mxu0 %v1282
    %1362 = vmatprep.subr.mxu0 %v1281
    %1363 = vmatpush1.msra.mxu0 %v1280
    %1364 = vmatprep.subr.mxu0 %v1279
    %1365 = vmatpush1.msra.mxu0 %v1278
    %1366 = vmatprep.subr.mxu0 %v1277
    %1367 = vmatpush1.msra.mxu0 %v1276
    %1368 = vmatprep.subr.mxu0 %v1275
    %1369 = vmatpush1.msra.mxu0 %v1274
    %1370 = vmatprep.subr.mxu0 %v1273
    %1371 = vmatpush1.msra.mxu0 %v1272
    %1372 = vmatprep.subr.mxu0 %v1271
    %1373 = vmatpush1.msra.mxu0 %v1270
    %1374 = vmatprep.subr.mxu0 %v1269
    %1375 = vmatpush1.msra.mxu0 %v1268
    %1376 = vmatprep.subr.mxu0 %v1331
    %1377 = vmatpush2.msra.mxu0 %v1330
    %1378 = vmatprep.subr.mxu0 %v1329
    %1379 = vmatpush2.msra.mxu0 %v1328
    %1380 = vmatprep.subr.mxu0 %v1327
    %1381 = vmatpush2.msra.mxu0 %v1326
    %1382 = vmatprep.subr.mxu0 %v1325
    %1383 = vmatpush2.msra.mxu0 %v1324
    %1384 = vmatprep.subr.mxu0 %v1323
    %1385 = vmatpush2.msra.mxu0 %v1322
    %1386 = vmatprep.subr.mxu0 %v1321
    %1387 = vmatpush2.msra.mxu0 %v1320
    %1388 = vmatprep.subr.mxu0 %v1319
    %1389 = vmatpush2.msra.mxu0 %v1318
    %1390 = vmatprep.subr.mxu0 %v1317
    %1391 = vmatpush2.msra.mxu0 %v1316
    %1392 = vmatprep.subr.mxu0 %v1315
    %1393 = vmatpush2.msra.mxu0 %v1314
    %1394 = vmatprep.subr.mxu0 %v1313
    %1395 = vmatpush2.msra.mxu0 %v1312
    %1396 = vmatprep.subr.mxu0 %v1311
    %1397 = vmatpush2.msra.mxu0 %v1310
    %1398 = vmatprep.subr.mxu0 %v1309
    %1399 = vmatpush2.msra.mxu0 %v1308
    %1400 = vmatprep.subr.mxu0 %v1307
    %1401 = vmatpush2.msra.mxu0 %v1306
    %1402 = vmatprep.subr.mxu0 %v1305
    %1403 = vmatpush2.msra.mxu0 %v1304
    %1404 = vmatprep.subr.mxu0 %v1303
    %1405 = vmatpush2.msra.mxu0 %v1302
    %1406 = vmatprep.subr.mxu0 %v1301
    %1407 = vmatpush2.msra.mxu0 %v1300
    %1408 = vmatprep.mubr.f32.mxu0 %v1259
    %1409 = vmatmul.mubr.f32.gmra.mxu0 %v1258
    %v1410 = vpop.f32.mrf.mxu0
    %v1411 = vadd.f32 %v1337, %v1410
    %v1412 = vpop.f32.mrf.mxu0
    %v1413 = vadd.f32 %v1341, %v1412
    %1414 = vmatprep.mubr.f32.mxu0 %v1261
    %1415 = vmatmul.mubr.f32.gmra.mxu0 %v1260
    %v1416 = vpop.f32.mrf.mxu0
    %v1417 = vadd.f32 %v1337, %v1416
    %v1418 = vpop.f32.mrf.mxu0
    %v1419 = vadd.f32 %v1341, %v1418
    %1420 = vmatprep.mubr.f32.mxu0 %v1263
    %1421 = vmatmul.mubr.f32.gmra.mxu0 %v1262
    %v1422 = vpop.f32.mrf.mxu0
    %v1423 = vadd.f32 %v1337, %v1422
    %v1424 = vpop.f32.mrf.mxu0
    %v1425 = vadd.f32 %v1341, %v1424
    %1426 = vmatprep.mubr.f32.mxu0 %v1265
    %1427 = vmatmul.mubr.f32.gmra.mxu0 %v1264
    %v1428 = vpop.f32.mrf.mxu0
    %v1429 = vadd.f32 %v1337, %v1428
    %v1430 = vpop.f32.mrf.mxu0
    %v1431 = vadd.f32 %v1341, %v1430
    %1432 = vmatprep.mubr.f32.mxu0 %v1267
    %1433 = vmatmul.mubr.f32.gmra.mxu0 %v1266
    %v1434 = vpop.f32.mrf.mxu0
    %v1435 = vadd.f32 %v1337, %v1434
    %v1436 = vpop.f32.mrf.mxu0
    %v1437 = vadd.f32 %v1341, %v1436
    %1438 = vdwg.mxu0
    %v1439 = vmax.f32 %v1411, 0.0
    %v1440 = vmax.f32 %v1413, 0.0
    %v1441 = vmax.f32 %v1417, 0.0
    %v1442 = vmax.f32 %v1419, 0.0
    %v1443 = vmax.f32 %v1423, 0.0
    %v1444 = vmax.f32 %v1425, 0.0
    %v1445 = vmax.f32 %v1429, 0.0
    %v1446 = vmax.f32 %v1431, 0.0
    %v1447 = vmax.f32 %v1435, 0.0
    %v1448 = vmax.f32 %v1437, 0.0
    %1449 = vst [vmem:[#allocation2] sm:$0xff] 0.0
    %1450 = vst [vmem:[#allocation2 + $0x8] sm:$0xff] 0.0
    %1451 = vst [vmem:[#allocation2 + $0x10] sm:$0xff] 0.0
    %1452 = vst.msk [vmem:[#allocation2 + $0x18] sm:$0xff] %vm360, 0.0
    %1453 = vst [vmem:[#allocation2 + $0x20] sm:$0xff] 0.0
    %1454 = vst [vmem:[#allocation2 + $0x28] sm:$0xff] 0.0
    %1455 = vst [vmem:[#allocation2 + $0x30] sm:$0xff] 0.0
    %1456 = vst.msk [vmem:[#allocation2 + $0x38] sm:$0xff] %vm360, 0.0
    %1457 = vst [vmem:[#allocation2 + $0x40] sm:$0xff] 0.0
    %1458 = vst [vmem:[#allocation2 + $0x48] sm:$0xff] 0.0
    %1459 = vst [vmem:[#allocation2 + $0x50] sm:$0xff] 0.0
    %1460 = vst.msk [vmem:[#allocation2 + $0x58] sm:$0xff] %vm360, 0.0
    %1461 = vst [vmem:[#allocation2 + $0x60] sm:$0xff] 0.0
    %1462 = vst [vmem:[#allocation2 + $0x68] sm:$0xff] 0.0
    %1463 = vst [vmem:[#allocation2 + $0x70] sm:$0xff] 0.0
    %1464 = vst.msk [vmem:[#allocation2 + $0x78] sm:$0xff] %vm360, 0.0
    %1465 = vst [vmem:[#allocation2 + $0x80] sm:$0xff] 0.0
    %1466 = vst [vmem:[#allocation2 + $0x88] sm:$0xff] 0.0
    %1467 = vst [vmem:[#allocation2 + $0x90] sm:$0xff] 0.0
    %1468 = vst.msk [vmem:[#allocation2 + $0x98] sm:$0xff] %vm360, 0.0
    %1469 = vst [vmem:[#allocation2 + $0xa0] sm:$0xff] 0.0
    %1470 = vst [vmem:[#allocation2 + $0xa8] sm:$0xff] 0.0
    %1471 = vst [vmem:[#allocation2 + $0xb0] sm:$0xff] 0.0
    %1472 = vst.msk [vmem:[#allocation2 + $0xb8] sm:$0xff] %vm360, 0.0
    %1473 = vst [vmem:[#allocation2 + $0xc0] sm:$0xff] 0.0
    %1474 = vst [vmem:[#allocation2 + $0xc8] sm:$0xff] 0.0
    %1475 = vst [vmem:[#allocation2 + $0xd0] sm:$0xff] 0.0
    %1476 = vst.msk [vmem:[#allocation2 + $0xd8] sm:$0xff] %vm360, 0.0
    %1477 = vst [vmem:[#allocation2 + $0x28] sm:$0xff] %v1439
    %1478 = vst [vmem:[#allocation2 + $0x30] sm:$0xff] %v1440
    %1479 = vst [vmem:[#allocation2 + $0x48] sm:$0xff] %v1441
    %1480 = vst [vmem:[#allocation2 + $0x50] sm:$0xff] %v1442
    %1481 = vst [vmem:[#allocation2 + $0x68] sm:$0xff] %v1443
    %1482 = vst [vmem:[#allocation2 + $0x70] sm:$0xff] %v1444
    %1483 = vst [vmem:[#allocation2 + $0x88] sm:$0xff] %v1445
    %1484 = vst [vmem:[#allocation2 + $0x90] sm:$0xff] %v1446
    %1485 = vst [vmem:[#allocation2 + $0xa8] sm:$0xff] %v1447
    %1486 = vst [vmem:[#allocation2 + $0xb0] sm:$0xff] %v1448
    %v1487 = vld [vmem:[#allocation2] sm:$0x80]
    %v1488 = vld [vmem:[#allocation2 + $0x8] sm:$0x80]
    %v1489 = vld [vmem:[#allocation2 + $0x10] sm:$0x80]
    %v1490 = vld [vmem:[#allocation2 + $0x20] sm:$0xff]
    %v1491 = vld [vmem:[#allocation2 + $0x28] sm:$0xff]
    %v1492 = vld [vmem:[#allocation2 + $0x30] sm:$0xff]
    %v1493 = vld [vmem:[#allocation2 + $0x40] sm:$0xff]
    %v1494 = vld [vmem:[#allocation2 + $0x48] sm:$0xff]
    %v1495 = vld [vmem:[#allocation2 + $0x50] sm:$0xff]
    %v1496 = vld [vmem:[#allocation2 + $0x60] sm:$0xff]
    %v1497 = vld [vmem:[#allocation2 + $0x68] sm:$0xff]
    %v1498 = vld [vmem:[#allocation2 + $0x70] sm:$0xff]
    %v1499 = vld [vmem:[#allocation2 + $0x80] sm:$0xff]
    %v1500 = vld [vmem:[#allocation2 + $0x88] sm:$0xff]
    %v1501 = vld [vmem:[#allocation2 + $0x90] sm:$0xff]
    %v1502 = vld [vmem:[#allocation2 + $0xa0] sm:$0x7f]
    %v1503 = vld [vmem:[#allocation2 + $0xa8] sm:$0x7f]
    %v1504 = vld [vmem:[#allocation2 + $0xb0] sm:$0x7f]
    %v1523 = vrot.slane %v1487, 7
    %v1524 = vrot.slane %v1490, 7
    %v1525 = vsel %vm442, %v1523, %v1524
    %v1526 = vrot.slane %v1488, 7
    %v1527 = vrot.slane %v1491, 7
    %v1528 = vsel %vm442, %v1526, %v1527
    %v1529 = vrot.slane %v1489, 7
    %v1530 = vrot.slane %v1492, 7
    %v1531 = vsel %vm442, %v1529, %v1530
    %v1532 = vrot.slane %v1493, 7
    %v1533 = vsel %vm442, %v1524, %v1532
    %v1534 = vrot.slane %v1494, 7
    %v1535 = vsel %vm442, %v1527, %v1534
    %v1536 = vrot.slane %v1495, 7
    %v1537 = vsel %vm442, %v1530, %v1536
    %v1538 = vrot.slane %v1496, 7
    %v1539 = vsel %vm442, %v1532, %v1538
    %v1540 = vrot.slane %v1497, 7
    %v1541 = vsel %vm442, %v1534, %v1540
    %v1542 = vrot.slane %v1498, 7
    %v1543 = vsel %vm442, %v1536, %v1542
    %v1544 = vrot.slane %v1499, 7
    %v1545 = vsel %vm442, %v1538, %v1544
    %v1546 = vrot.slane %v1500, 7
    %v1547 = vsel %vm442, %v1540, %v1546
    %v1548 = vrot.slane %v1501, 7
    %v1549 = vsel %vm442, %v1542, %v1548
    %v1550 = vrot.slane %v1502, 7
    %v1551 = vsel %vm442, %v1544, %v1550
    %v1552 = vrot.slane %v1503, 7
    %v1553 = vsel %vm442, %v1546, %v1552
    %v1554 = vrot.slane %v1504, 7
    %v1555 = vsel %vm442, %v1548, %v1554
    %1556 = vrot.lane.b32.xlu0 %v1525, 64
    %v1557 = vpop.permute.xlu0 %1556
    %1558 = vrot.lane.b32.xlu0 %v1528, 64
    %v1559 = vpop.permute.xlu0 %1558
    %1560 = vrot.lane.b32.xlu0 %v1531, 64
    %v1561 = vpop.permute.xlu0 %1560
    %1562 = vrot.lane.b32.xlu0 %v1533, 64
    %v1563 = vpop.permute.xlu0 %1562
    %1564 = vrot.lane.b32.xlu0 %v1535, 64
    %v1565 = vpop.permute.xlu0 %1564
    %1566 = vrot.lane.b32.xlu0 %v1537, 64
    %v1567 = vpop.permute.xlu0 %1566
    %1568 = vrot.lane.b32.xlu0 %v1539, 64
    %v1569 = vpop.permute.xlu0 %1568
    %1570 = vrot.lane.b32.xlu0 %v1541, 64
    %v1571 = vpop.permute.xlu0 %1570
    %1572 = vrot.lane.b32.xlu0 %v1543, 64
    %v1573 = vpop.permute.xlu0 %1572
    %1574 = vrot.lane.b32.xlu0 %v1545, 64
    %v1575 = vpop.permute.xlu0 %1574
    %1576 = vrot.lane.b32.xlu0 %v1547, 64
    %v1577 = vpop.permute.xlu0 %1576
    %1578 = vrot.lane.b32.xlu0 %v1549, 64
    %v1579 = vpop.permute.xlu0 %1578
    %1580 = vrot.lane.b32.xlu0 %v1551, 64
    %v1581 = vpop.permute.xlu0 %1580
    %1582 = vrot.lane.b32.xlu0 %v1553, 64
    %v1583 = vpop.permute.xlu0 %1582
    %1584 = vrot.lane.b32.xlu0 %v1555, 64
    %v1585 = vpop.permute.xlu0 %1584
    %v1586 = vsel %vm360, %v1557, %v1559
    %v1587 = vsel %vm360, %v1559, %v1561
    %v1588 = vsel %vm360, %v1563, %v1565
    %v1589 = vsel %vm360, %v1565, %v1567
    %v1590 = vsel %vm360, %v1569, %v1571
    %v1591 = vsel %vm360, %v1571, %v1573
    %v1592 = vsel %vm360, %v1575, %v1577
    %v1593 = vsel %vm360, %v1577, %v1579
    %v1594 = vsel %vm360, %v1581, %v1583
    %v1595 = vsel %vm360, %v1583, %v1585
    %v1606 = vsel %vm419, %v1586, 0.0
    %v1607 = vsel %vm419, %v1587, 0.0
    %v1608 = vsel %vm420, %v1588, 0.0
    %v1609 = vsel %vm420, %v1589, 0.0
    %v1610 = vsel %vm421, %v1590, 0.0
    %v1611 = vsel %vm421, %v1591, 0.0
    %v1612 = vsel %vm422, %v1592, 0.0
    %v1613 = vsel %vm422, %v1593, 0.0
    %v1614 = vsel %vm423, %v1594, 0.0
    %v1615 = vsel %vm423, %v1595, 0.0
    %v1616 = vld [vmem:[%s8] ss:$8 sm:$0x3]
    %v1618 = vlaneseq
    %v1619 = vshrl.u32 %v1618, 7
    %v1620 = vsub.s32 0, %v1619
    %v1621 = vrot.slane %v1616, %v1620
    %v1622 = vlaneseq
    %v1623 = vshrl.u32 %v1622, 7
    %v1624 = vsub.s32 1, %v1623
    %v1625 = vrot.slane %v1616, %v1624
    %v1628 = vmul.f32 %v1606, %v1621
    %v1629 = vmul.f32 %v1607, %v1625
    %v1630 = vmul.f32 %v1608, %v1621
    %v1631 = vmul.f32 %v1609, %v1625
    %v1632 = vmul.f32 %v1610, %v1621
    %v1633 = vmul.f32 %v1611, %v1625
    %v1634 = vmul.f32 %v1612, %v1621
    %v1635 = vmul.f32 %v1613, %v1625
    %v1636 = vmul.f32 %v1614, %v1621
    %v1637 = vmul.f32 %v1615, %v1625
    %v1638 = vadd.f32 %v1628, 0.0
    %v1639 = vadd.f32 %v1629, 0.0
    %v1640 = vadd.f32 %v1630, 0.0
    %v1641 = vadd.f32 %v1631, 0.0
    %v1642 = vadd.f32 %v1632, 0.0
    %v1643 = vadd.f32 %v1633, 0.0
    %v1644 = vadd.f32 %v1634, 0.0
    %v1645 = vadd.f32 %v1635, 0.0
    %v1646 = vadd.f32 %v1636, 0.0
    %v1647 = vadd.f32 %v1637, 0.0
    %v1658 = vsel %vm419, %v1528, 0.0
    %v1659 = vsel %vm419, %v1531, 0.0
    %v1660 = vsel %vm420, %v1535, 0.0
    %v1661 = vsel %vm420, %v1537, 0.0
    %v1662 = vsel %vm421, %v1541, 0.0
    %v1663 = vsel %vm421, %v1543, 0.0
    %v1664 = vsel %vm422, %v1547, 0.0
    %v1665 = vsel %vm422, %v1549, 0.0
    %v1666 = vsel %vm423, %v1553, 0.0
    %v1667 = vsel %vm423, %v1555, 0.0
    %s1668 = scalar_lea.vmem %s8, 1
    %v1669 = vld [vmem:[%s1668] ss:$8 sm:$0x3]
    %v1671 = vlaneseq
    %v1672 = vshrl.u32 %v1671, 7
    %v1673 = vsub.s32 0, %v1672
    %v1674 = vrot.slane %v1669, %v1673
    %v1675 = vlaneseq
    %v1676 = vshrl.u32 %v1675, 7
    %v1677 = vsub.s32 1, %v1676
    %v1678 = vrot.slane %v1669, %v1677
    %v1681 = vmul.f32 %v1658, %v1674
    %v1682 = vmul.f32 %v1659, %v1678
    %v1683 = vmul.f32 %v1660, %v1674
    %v1684 = vmul.f32 %v1661, %v1678
    %v1685 = vmul.f32 %v1662, %v1674
    %v1686 = vmul.f32 %v1663, %v1678
    %v1687 = vmul.f32 %v1664, %v1674
    %v1688 = vmul.f32 %v1665, %v1678
    %v1689 = vmul.f32 %v1666, %v1674
    %v1690 = vmul.f32 %v1667, %v1678
    %v1691 = vadd.f32 %v1638, %v1681
    %v1692 = vadd.f32 %v1639, %v1682
    %v1693 = vadd.f32 %v1640, %v1683
    %v1694 = vadd.f32 %v1641, %v1684
    %v1695 = vadd.f32 %v1642, %v1685
    %v1696 = vadd.f32 %v1643, %v1686
    %v1697 = vadd.f32 %v1644, %v1687
    %v1698 = vadd.f32 %v1645, %v1688
    %v1699 = vadd.f32 %v1646, %v1689
    %v1700 = vadd.f32 %v1647, %v1690
    %v1701 = vld [vmem:[#allocation2 + $0x18] sm:$0x80]
    %v1702 = vld [vmem:[#allocation2 + $0x38] sm:$0xff]
    %v1703 = vld [vmem:[#allocation2 + $0x58] sm:$0xff]
    %v1704 = vld [vmem:[#allocation2 + $0x78] sm:$0xff]
    %v1705 = vld [vmem:[#allocation2 + $0x98] sm:$0xff]
    %v1706 = vld [vmem:[#allocation2 + $0xb8] sm:$0x7f]
    %v1713 = vrot.slane %v1701, 7
    %v1714 = vrot.slane %v1702, 7
    %v1715 = vsel %vm442, %v1713, %v1714
    %v1716 = vrot.slane %v1703, 7
    %v1717 = vsel %vm442, %v1714, %v1716
    %v1718 = vrot.slane %v1704, 7
    %v1719 = vsel %vm442, %v1716, %v1718
    %v1720 = vrot.slane %v1705, 7
    %v1721 = vsel %vm442, %v1718, %v1720
    %v1722 = vrot.slane %v1706, 7
    %v1723 = vsel %vm442, %v1720, %v1722
    %1724 = vrot.lane.b32.xlu0 %v1715, 64
    %v1725 = vpop.permute.xlu0 %1724
    %1726 = vrot.lane.b32.xlu0 %v1717, 64
    %v1727 = vpop.permute.xlu0 %1726
    %1728 = vrot.lane.b32.xlu0 %v1719, 64
    %v1729 = vpop.permute.xlu0 %1728
    %1730 = vrot.lane.b32.xlu0 %v1721, 64
    %v1731 = vpop.permute.xlu0 %1730
    %1732 = vrot.lane.b32.xlu0 %v1723, 64
    %v1733 = vpop.permute.xlu0 %1732
    %v1734 = vsel %vm360, %v1561, %v1725
    %v1735 = vsel %vm360, %v1567, %v1727
    %v1736 = vsel %vm360, %v1573, %v1729
    %v1737 = vsel %vm360, %v1579, %v1731
    %v1738 = vsel %vm360, %v1585, %v1733
    %v1744 = vsel %vm419, %v1734, 0.0
    %v1745 = vsel %vm420, %v1735, 0.0
    %v1746 = vsel %vm421, %v1736, 0.0
    %v1747 = vsel %vm422, %v1737, 0.0
    %v1748 = vsel %vm423, %v1738, 0.0
    %s1749 = scalar_lea.vmem %s8, 2
    %v1750 = vld [vmem:[%s1749] ss:$8 sm:$0x3]
    %v1752 = vlaneseq
    %v1753 = vshrl.u32 %v1752, 7
    %v1754 = vsub.s32 0, %v1753
    %v1755 = vrot.slane %v1750, %v1754
    %v1756 = vlaneseq
    %v1757 = vshrl.u32 %v1756, 7
    %v1758 = vsub.s32 1, %v1757
    %v1759 = vrot.slane %v1750, %v1758
    %v1762 = vmul.f32 %v1607, %v1755
    %v1763 = vmul.f32 %v1744, %v1759
    %v1764 = vmul.f32 %v1609, %v1755
    %v1765 = vmul.f32 %v1745, %v1759
    %v1766 = vmul.f32 %v1611, %v1755
    %v1767 = vmul.f32 %v1746, %v1759
    %v1768 = vmul.f32 %v1613, %v1755
    %v1769 = vmul.f32 %v1747, %v1759
    %v1770 = vmul.f32 %v1615, %v1755
    %v1771 = vmul.f32 %v1748, %v1759
    %v1772 = vadd.f32 %v1691, %v1762
    %v1773 = vadd.f32 %v1692, %v1763
    %v1774 = vadd.f32 %v1693, %v1764
    %v1775 = vadd.f32 %v1694, %v1765
    %v1776 = vadd.f32 %v1695, %v1766
    %v1777 = vadd.f32 %v1696, %v1767
    %v1778 = vadd.f32 %v1697, %v1768
    %v1779 = vadd.f32 %v1698, %v1769
    %v1780 = vadd.f32 %v1699, %v1770
    %v1781 = vadd.f32 %v1700, %v1771
    %v1782 = vld [vmem:[#allocation2 + $0xa0] sm:$0xff]
    %v1783 = vld [vmem:[#allocation2 + $0xa8] sm:$0xff]
    %v1784 = vld [vmem:[#allocation2 + $0xb0] sm:$0xff]
    %s1785 = scalar_lea.vmem %s8, 3
    %v1786 = vld [vmem:[%s1785] ss:$8 sm:$0x3]
    %v1788 = vlaneseq
    %v1789 = vshrl.u32 %v1788, 7
    %v1790 = vsub.s32 0, %v1789
    %v1791 = vrot.slane %v1786, %v1790
    %v1792 = vlaneseq
    %v1793 = vshrl.u32 %v1792, 7
    %v1794 = vsub.s32 1, %v1793
    %v1795 = vrot.slane %v1786, %v1794
    %1796 = vrot.lane.b32.xlu0 %v1791, 64
    %v1797 = vpop.permute.xlu0 %1796
    %1798 = vrot.lane.b32.xlu0 %v1795, 64
    %v1799 = vpop.permute.xlu0 %1798
    %v1800 = vsel %vm360, %v1797, %v1799
    %v1804 = vmul.f32 %v1490, %v1797
    %v1805 = vmul.f32 %v1491, %v1800
    %v1806 = vmul.f32 %v1492, %v1799
    %v1807 = vmul.f32 %v1493, %v1797
    %v1808 = vmul.f32 %v1494, %v1800
    %v1809 = vmul.f32 %v1495, %v1799
    %v1810 = vmul.f32 %v1496, %v1797
    %v1811 = vmul.f32 %v1497, %v1800
    %v1812 = vmul.f32 %v1498, %v1799
    %v1813 = vmul.f32 %v1499, %v1797
    %v1814 = vmul.f32 %v1500, %v1800
    %v1815 = vmul.f32 %v1501, %v1799
    %v1816 = vmul.f32 %v1782, %v1797
    %v1817 = vmul.f32 %v1783, %v1800
    %v1818 = vmul.f32 %v1784, %v1799
    %1834 = vrot.lane.b32.xlu0 %v1804, 64
    %v1835 = vpop.permute.xlu0 %1834
    %1836 = vrot.lane.b32.xlu0 %v1805, 64
    %v1837 = vpop.permute.xlu0 %1836
    %1838 = vrot.lane.b32.xlu0 %v1806, 64
    %v1839 = vpop.permute.xlu0 %1838
    %1840 = vrot.lane.b32.xlu0 %v1807, 64
    %v1841 = vpop.permute.xlu0 %1840
    %1842 = vrot.lane.b32.xlu0 %v1808, 64
    %v1843 = vpop.permute.xlu0 %1842
    %1844 = vrot.lane.b32.xlu0 %v1809, 64
    %v1845 = vpop.permute.xlu0 %1844
    %1846 = vrot.lane.b32.xlu0 %v1810, 64
    %v1847 = vpop.permute.xlu0 %1846
    %1848 = vrot.lane.b32.xlu0 %v1811, 64
    %v1849 = vpop.permute.xlu0 %1848
    %1850 = vrot.lane.b32.xlu0 %v1812, 64
    %v1851 = vpop.permute.xlu0 %1850
    %1852 = vrot.lane.b32.xlu0 %v1813, 64
    %v1853 = vpop.permute.xlu0 %1852
    %1854 = vrot.lane.b32.xlu0 %v1814, 64
    %v1855 = vpop.permute.xlu0 %1854
    %1856 = vrot.lane.b32.xlu0 %v1815, 64
    %v1857 = vpop.permute.xlu0 %1856
    %1858 = vrot.lane.b32.xlu0 %v1816, 64
    %v1859 = vpop.permute.xlu0 %1858
    %1860 = vrot.lane.b32.xlu0 %v1817, 64
    %v1861 = vpop.permute.xlu0 %1860
    %1862 = vrot.lane.b32.xlu0 %v1818, 64
    %v1863 = vpop.permute.xlu0 %1862
    %v1864 = vsel %vm360, %v1835, %v1837
    %v1865 = vsel %vm360, %v1837, %v1839
    %v1866 = vsel %vm360, %v1841, %v1843
    %v1867 = vsel %vm360, %v1843, %v1845
    %v1868 = vsel %vm360, %v1847, %v1849
    %v1869 = vsel %vm360, %v1849, %v1851
    %v1870 = vsel %vm360, %v1853, %v1855
    %v1871 = vsel %vm360, %v1855, %v1857
    %v1872 = vsel %vm360, %v1859, %v1861
    %v1873 = vsel %vm360, %v1861, %v1863
    %v1884 = vadd.f32 %v1772, %v1864
    %v1885 = vadd.f32 %v1773, %v1865
    %v1886 = vadd.f32 %v1774, %v1866
    %v1887 = vadd.f32 %v1775, %v1867
    %v1888 = vadd.f32 %v1776, %v1868
    %v1889 = vadd.f32 %v1777, %v1869
    %v1890 = vadd.f32 %v1778, %v1870
    %v1891 = vadd.f32 %v1779, %v1871
    %v1892 = vadd.f32 %v1780, %v1872
    %v1893 = vadd.f32 %v1781, %v1873
    %s1894 = scalar_lea.vmem %s8, 4
    %v1895 = vld [vmem:[%s1894] ss:$8 sm:$0x3]
    %v1897 = vlaneseq
    %v1898 = vshrl.u32 %v1897, 7
    %v1899 = vsub.s32 0, %v1898
    %v1900 = vrot.slane %v1895, %v1899
    %v1901 = vlaneseq
    %v1902 = vshrl.u32 %v1901, 7
    %v1903 = vsub.s32 1, %v1902
    %v1904 = vrot.slane %v1895, %v1903
    %v1907 = vmul.f32 %v1491, %v1900
    %v1908 = vmul.f32 %v1492, %v1904
    %v1909 = vmul.f32 %v1494, %v1900
    %v1910 = vmul.f32 %v1495, %v1904
    %v1911 = vmul.f32 %v1497, %v1900
    %v1912 = vmul.f32 %v1498, %v1904
    %v1913 = vmul.f32 %v1500, %v1900
    %v1914 = vmul.f32 %v1501, %v1904
    %v1915 = vmul.f32 %v1783, %v1900
    %v1916 = vmul.f32 %v1784, %v1904
    %v1917 = vadd.f32 %v1884, %v1907
    %v1918 = vadd.f32 %v1885, %v1908
    %v1919 = vadd.f32 %v1886, %v1909
    %v1920 = vadd.f32 %v1887, %v1910
    %v1921 = vadd.f32 %v1888, %v1911
    %v1922 = vadd.f32 %v1889, %v1912
    %v1923 = vadd.f32 %v1890, %v1913
    %v1924 = vadd.f32 %v1891, %v1914
    %v1925 = vadd.f32 %v1892, %v1915
    %v1926 = vadd.f32 %v1893, %v1916
    %v1927 = vld [vmem:[#allocation2 + $0xb8] sm:$0xff]
    %s1928 = scalar_lea.vmem %s8, 5
    %v1929 = vld [vmem:[%s1928] ss:$8 sm:$0x3]
    %v1931 = vlaneseq
    %v1932 = vshrl.u32 %v1931, 7
    %v1933 = vsub.s32 0, %v1932
    %v1934 = vrot.slane %v1929, %v1933
    %v1935 = vlaneseq
    %v1936 = vshrl.u32 %v1935, 7
    %v1937 = vsub.s32 1, %v1936
    %v1938 = vrot.slane %v1929, %v1937
    %1939 = vrot.lane.b32.xlu0 %v1934, 64
    %v1940 = vpop.permute.xlu0 %1939
    %1941 = vrot.lane.b32.xlu0 %v1938, 64
    %v1942 = vpop.permute.xlu0 %1941
    %v1943 = vsel %vm360, %v1940, %v1942
    %v1947 = vmul.f32 %v1491, %v1940
    %v1948 = vmul.f32 %v1492, %v1943
    %v1949 = vmul.f32 %v1702, %v1942
    %v1950 = vmul.f32 %v1494, %v1940
    %v1951 = vmul.f32 %v1495, %v1943
    %v1952 = vmul.f32 %v1703, %v1942
    %v1953 = vmul.f32 %v1497, %v1940
    %v1954 = vmul.f32 %v1498, %v1943
    %v1955 = vmul.f32 %v1704, %v1942
    %v1956 = vmul.f32 %v1500, %v1940
    %v1957 = vmul.f32 %v1501, %v1943
    %v1958 = vmul.f32 %v1705, %v1942
    %v1959 = vmul.f32 %v1783, %v1940
    %v1960 = vmul.f32 %v1784, %v1943
    %v1961 = vmul.f32 %v1927, %v1942
    %1977 = vrot.lane.b32.xlu0 %v1947, 64
    %v1978 = vpop.permute.xlu0 %1977
    %1979 = vrot.lane.b32.xlu0 %v1948, 64
    %v1980 = vpop.permute.xlu0 %1979
    %1981 = vrot.lane.b32.xlu0 %v1949, 64
    %v1982 = vpop.permute.xlu0 %1981
    %1983 = vrot.lane.b32.xlu0 %v1950, 64
    %v1984 = vpop.permute.xlu0 %1983
    %1985 = vrot.lane.b32.xlu0 %v1951, 64
    %v1986 = vpop.permute.xlu0 %1985
    %1987 = vrot.lane.b32.xlu0 %v1952, 64
    %v1988 = vpop.permute.xlu0 %1987
    %1989 = vrot.lane.b32.xlu0 %v1953, 64
    %v1990 = vpop.permute.xlu0 %1989
    %1991 = vrot.lane.b32.xlu0 %v1954, 64
    %v1992 = vpop.permute.xlu0 %1991
    %1993 = vrot.lane.b32.xlu0 %v1955, 64
    %v1994 = vpop.permute.xlu0 %1993
    %1995 = vrot.lane.b32.xlu0 %v1956, 64
    %v1996 = vpop.permute.xlu0 %1995
    %1997 = vrot.lane.b32.xlu0 %v1957, 64
    %v1998 = vpop.permute.xlu0 %1997
    %1999 = vrot.lane.b32.xlu0 %v1958, 64
    %v2000 = vpop.permute.xlu0 %1999
    %2001 = vrot.lane.b32.xlu0 %v1959, 64
    %v2002 = vpop.permute.xlu0 %2001
    %2003 = vrot.lane.b32.xlu0 %v1960, 64
    %v2004 = vpop.permute.xlu0 %2003
    %2005 = vrot.lane.b32.xlu0 %v1961, 64
    %v2006 = vpop.permute.xlu0 %2005
    %v2007 = vsel %vm360, %v1978, %v1980
    %v2008 = vsel %vm360, %v1980, %v1982
    %v2009 = vsel %vm360, %v1984, %v1986
    %v2010 = vsel %vm360, %v1986, %v1988
    %v2011 = vsel %vm360, %v1990, %v1992
    %v2012 = vsel %vm360, %v1992, %v1994
    %v2013 = vsel %vm360, %v1996, %v1998
    %v2014 = vsel %vm360, %v1998, %v2000
    %v2015 = vsel %vm360, %v2002, %v2004
    %v2016 = vsel %vm360, %v2004, %v2006
    %v2027 = vadd.f32 %v1917, %v2007
    %v2028 = vadd.f32 %v1918, %v2008
    %v2029 = vadd.f32 %v1919, %v2009
    %v2030 = vadd.f32 %v1920, %v2010
    %v2031 = vadd.f32 %v1921, %v2011
    %v2032 = vadd.f32 %v1922, %v2012
    %v2033 = vadd.f32 %v1923, %v2013
    %v2034 = vadd.f32 %v1924, %v2014
    %v2035 = vadd.f32 %v1925, %v2015
    %v2036 = vadd.f32 %v1926, %v2016
    %v2037 = vld [vmem:[#allocation2 + $0x20] sm:$0xfe]
    %v2038 = vld [vmem:[#allocation2 + $0x28] sm:$0xfe]
    %v2039 = vld [vmem:[#allocation2 + $0x30] sm:$0xfe]
    %v2040 = vld [vmem:[#allocation2 + $0xc0] sm:$0x1]
    %v2041 = vld [vmem:[#allocation2 + $0xc8] sm:$0x1]
    %v2042 = vld [vmem:[#allocation2 + $0xd0] sm:$0x1]
    %v2052 = vrot.slane %v2037, 1
    %v2053 = vrot.slane %v1493, 1
    %v2054 = vsel %vm982, %v2052, %v2053
    %v2055 = vrot.slane %v2038, 1
    %v2056 = vrot.slane %v1494, 1
    %v2057 = vsel %vm982, %v2055, %v2056
    %v2058 = vrot.slane %v2039, 1
    %v2059 = vrot.slane %v1495, 1
    %v2060 = vsel %vm982, %v2058, %v2059
    %v2061 = vrot.slane %v1496, 1
    %v2062 = vsel %vm982, %v2053, %v2061
    %v2063 = vrot.slane %v1497, 1
    %v2064 = vsel %vm982, %v2056, %v2063
    %v2065 = vrot.slane %v1498, 1
    %v2066 = vsel %vm982, %v2059, %v2065
    %v2067 = vrot.slane %v1499, 1
    %v2068 = vsel %vm982, %v2061, %v2067
    %v2069 = vrot.slane %v1500, 1
    %v2070 = vsel %vm982, %v2063, %v2069
    %v2071 = vrot.slane %v1501, 1
    %v2072 = vsel %vm982, %v2065, %v2071
    %v2073 = vrot.slane %v1782, 1
    %v2074 = vsel %vm982, %v2067, %v2073
    %v2075 = vrot.slane %v1783, 1
    %v2076 = vsel %vm982, %v2069, %v2075
    %v2077 = vrot.slane %v1784, 1
    %v2078 = vsel %vm982, %v2071, %v2077
    %v2079 = vrot.slane %v2040, 1
    %v2080 = vsel %vm982, %v2073, %v2079
    %v2081 = vrot.slane %v2041, 1
    %v2082 = vsel %vm982, %v2075, %v2081
    %v2083 = vrot.slane %v2042, 1
    %v2084 = vsel %vm982, %v2077, %v2083
    %2085 = vrot.lane.b32.xlu0 %v2054, 64
    %v2086 = vpop.permute.xlu0 %2085
    %2087 = vrot.lane.b32.xlu0 %v2057, 64
    %v2088 = vpop.permute.xlu0 %2087
    %2089 = vrot.lane.b32.xlu0 %v2060, 64
    %v2090 = vpop.permute.xlu0 %2089
    %2091 = vrot.lane.b32.xlu0 %v2062, 64
    %v2092 = vpop.permute.xlu0 %2091
    %2093 = vrot.lane.b32.xlu0 %v2064, 64
    %v2094 = vpop.permute.xlu0 %2093
    %2095 = vrot.lane.b32.xlu0 %v2066, 64
    %v2096 = vpop.permute.xlu0 %2095
    %2097 = vrot.lane.b32.xlu0 %v2068, 64
    %v2098 = vpop.permute.xlu0 %2097
    %2099 = vrot.lane.b32.xlu0 %v2070, 64
    %v2100 = vpop.permute.xlu0 %2099
    %2101 = vrot.lane.b32.xlu0 %v2072, 64
    %v2102 = vpop.permute.xlu0 %2101
    %2103 = vrot.lane.b32.xlu0 %v2074, 64
    %v2104 = vpop.permute.xlu0 %2103
    %2105 = vrot.lane.b32.xlu0 %v2076, 64
    %v2106 = vpop.permute.xlu0 %2105
    %2107 = vrot.lane.b32.xlu0 %v2078, 64
    %v2108 = vpop.permute.xlu0 %2107
    %2109 = vrot.lane.b32.xlu0 %v2080, 64
    %v2110 = vpop.permute.xlu0 %2109
    %2111 = vrot.lane.b32.xlu0 %v2082, 64
    %v2112 = vpop.permute.xlu0 %2111
    %2113 = vrot.lane.b32.xlu0 %v2084, 64
    %v2114 = vpop.permute.xlu0 %2113
    %v2115 = vsel %vm360, %v2086, %v2088
    %v2116 = vsel %vm360, %v2088, %v2090
    %v2117 = vsel %vm360, %v2092, %v2094
    %v2118 = vsel %vm360, %v2094, %v2096
    %v2119 = vsel %vm360, %v2098, %v2100
    %v2120 = vsel %vm360, %v2100, %v2102
    %v2121 = vsel %vm360, %v2104, %v2106
    %v2122 = vsel %vm360, %v2106, %v2108
    %v2123 = vsel %vm360, %v2110, %v2112
    %v2124 = vsel %vm360, %v2112, %v2114
    %v2135 = vsel %vm968, %v2115, 0.0
    %v2136 = vsel %vm968, %v2116, 0.0
    %v2137 = vsel %vm969, %v2117, 0.0
    %v2138 = vsel %vm969, %v2118, 0.0
    %v2139 = vsel %vm970, %v2119, 0.0
    %v2140 = vsel %vm970, %v2120, 0.0
    %v2141 = vsel %vm971, %v2121, 0.0
    %v2142 = vsel %vm971, %v2122, 0.0
    %v2143 = vsel %vm972, %v2123, 0.0
    %v2144 = vsel %vm972, %v2124, 0.0
    %s2145 = scalar_lea.vmem %s8, 6
    %v2146 = vld [vmem:[%s2145] ss:$8 sm:$0x3]
    %v2148 = vlaneseq
    %v2149 = vshrl.u32 %v2148, 7
    %v2150 = vsub.s32 0, %v2149
    %v2151 = vrot.slane %v2146, %v2150
    %v2152 = vlaneseq
    %v2153 = vshrl.u32 %v2152, 7
    %v2154 = vsub.s32 1, %v2153
    %v2155 = vrot.slane %v2146, %v2154
    %v2158 = vmul.f32 %v2135, %v2151
    %v2159 = vmul.f32 %v2136, %v2155
    %v2160 = vmul.f32 %v2137, %v2151
    %v2161 = vmul.f32 %v2138, %v2155
    %v2162 = vmul.f32 %v2139, %v2151
    %v2163 = vmul.f32 %v2140, %v2155
    %v2164 = vmul.f32 %v2141, %v2151
    %v2165 = vmul.f32 %v2142, %v2155
    %v2166 = vmul.f32 %v2143, %v2151
    %v2167 = vmul.f32 %v2144, %v2155
    %v2168 = vadd.f32 %v2027, %v2158
    %v2169 = vadd.f32 %v2028, %v2159
    %v2170 = vadd.f32 %v2029, %v2160
    %v2171 = vadd.f32 %v2030, %v2161
    %v2172 = vadd.f32 %v2031, %v2162
    %v2173 = vadd.f32 %v2032, %v2163
    %v2174 = vadd.f32 %v2033, %v2164
    %v2175 = vadd.f32 %v2034, %v2165
    %v2176 = vadd.f32 %v2035, %v2166
    %v2177 = vadd.f32 %v2036, %v2167
    %v2188 = vsel %vm968, %v2057, 0.0
    %v2189 = vsel %vm968, %v2060, 0.0
    %v2190 = vsel %vm969, %v2064, 0.0
    %v2191 = vsel %vm969, %v2066, 0.0
    %v2192 = vsel %vm970, %v2070, 0.0
    %v2193 = vsel %vm970, %v2072, 0.0
    %v2194 = vsel %vm971, %v2076, 0.0
    %v2195 = vsel %vm971, %v2078, 0.0
    %v2196 = vsel %vm972, %v2082, 0.0
    %v2197 = vsel %vm972, %v2084, 0.0
    %s2198 = scalar_lea.vmem %s8, 7
    %v2199 = vld [vmem:[%s2198] ss:$8 sm:$0x3]
    %v2201 = vlaneseq
    %v2202 = vshrl.u32 %v2201, 7
    %v2203 = vsub.s32 0, %v2202
    %v2204 = vrot.slane %v2199, %v2203
    %v2205 = vlaneseq
    %v2206 = vshrl.u32 %v2205, 7
    %v2207 = vsub.s32 1, %v2206
    %v2208 = vrot.slane %v2199, %v2207
    %v2211 = vmul.f32 %v2188, %v2204
    %v2212 = vmul.f32 %v2189, %v2208
    %v2213 = vmul.f32 %v2190, %v2204
    %v2214 = vmul.f32 %v2191, %v2208
    %v2215 = vmul.f32 %v2192, %v2204
    %v2216 = vmul.f32 %v2193, %v2208
    %v2217 = vmul.f32 %v2194, %v2204
    %v2218 = vmul.f32 %v2195, %v2208
    %v2219 = vmul.f32 %v2196, %v2204
    %v2220 = vmul.f32 %v2197, %v2208
    %v2221 = vadd.f32 %v2168, %v2211
    %v2222 = vadd.f32 %v2169, %v2212
    %v2223 = vadd.f32 %v2170, %v2213
    %v2224 = vadd.f32 %v2171, %v2214
    %v2225 = vadd.f32 %v2172, %v2215
    %v2226 = vadd.f32 %v2173, %v2216
    %v2227 = vadd.f32 %v2174, %v2217
    %v2228 = vadd.f32 %v2175, %v2218
    %v2229 = vadd.f32 %v2176, %v2219
    %v2230 = vadd.f32 %v2177, %v2220
    %v2231 = vld [vmem:[#allocation2 + $0x38] sm:$0xfe]
    %v2232 = vld [vmem:[#allocation2 + $0xd8] sm:$0x1]
    %v2236 = vrot.slane %v2231, 1
    %v2237 = vrot.slane %v1703, 1
    %v2238 = vsel %vm982, %v2236, %v2237
    %v2239 = vrot.slane %v1704, 1
    %v2240 = vsel %vm982, %v2237, %v2239
    %v2241 = vrot.slane %v1705, 1
    %v2242 = vsel %vm982, %v2239, %v2241
    %v2243 = vrot.slane %v1927, 1
    %v2244 = vsel %vm982, %v2241, %v2243
    %v2245 = vrot.slane %v2232, 1
    %v2246 = vsel %vm982, %v2243, %v2245
    %2247 = vrot.lane.b32.xlu0 %v2238, 64
    %v2248 = vpop.permute.xlu0 %2247
    %2249 = vrot.lane.b32.xlu0 %v2240, 64
    %v2250 = vpop.permute.xlu0 %2249
    %2251 = vrot.lane.b32.xlu0 %v2242, 64
    %v2252 = vpop.permute.xlu0 %2251
    %2253 = vrot.lane.b32.xlu0 %v2244, 64
    %v2254 = vpop.permute.xlu0 %2253
    %2255 = vrot.lane.b32.xlu0 %v2246, 64
    %v2256 = vpop.permute.xlu0 %2255
    %v2257 = vsel %vm360, %v2090, %v2248
    %v2258 = vsel %vm360, %v2096, %v2250
    %v2259 = vsel %vm360, %v2102, %v2252
    %v2260 = vsel %vm360, %v2108, %v2254
    %v2261 = vsel %vm360, %v2114, %v2256
    %v2267 = vsel %vm968, %v2257, 0.0
    %v2268 = vsel %vm969, %v2258, 0.0
    %v2269 = vsel %vm970, %v2259, 0.0
    %v2270 = vsel %vm971, %v2260, 0.0
    %v2271 = vsel %vm972, %v2261, 0.0
    %s2272 = scalar_lea.vmem %s8, 16
    %v2273 = vld [vmem:[%s2272] ss:$8 sm:$0x3]
    %v2275 = vlaneseq
    %v2276 = vshrl.u32 %v2275, 7
    %v2277 = vsub.s32 0, %v2276
    %v2278 = vrot.slane %v2273, %v2277
    %v2279 = vlaneseq
    %v2280 = vshrl.u32 %v2279, 7
    %v2281 = vsub.s32 1, %v2280
    %v2282 = vrot.slane %v2273, %v2281
    %v2285 = vmul.f32 %v2136, %v2278
    %v2286 = vmul.f32 %v2267, %v2282
    %v2287 = vmul.f32 %v2138, %v2278
    %v2288 = vmul.f32 %v2268, %v2282
    %v2289 = vmul.f32 %v2140, %v2278
    %v2290 = vmul.f32 %v2269, %v2282
    %v2291 = vmul.f32 %v2142, %v2278
    %v2292 = vmul.f32 %v2270, %v2282
    %v2293 = vmul.f32 %v2144, %v2278
    %v2294 = vmul.f32 %v2271, %v2282
    %v2295 = vadd.f32 %v2221, %v2285
    %v2296 = vadd.f32 %v2222, %v2286
    %v2297 = vadd.f32 %v2223, %v2287
    %v2298 = vadd.f32 %v2224, %v2288
    %v2299 = vadd.f32 %v2225, %v2289
    %v2300 = vadd.f32 %v2226, %v2290
    %v2301 = vadd.f32 %v2227, %v2291
    %v2302 = vadd.f32 %v2228, %v2292
    %v2303 = vadd.f32 %v2229, %v2293
    %v2304 = vadd.f32 %v2230, %v2294
    %v2305 = vld [vmem:[%s9] sm:$0x3]
    %v2307 = vlaneseq
    %v2308 = vshrl.u32 %v2307, 7
    %v2309 = vsub.s32 0, %v2308
    %v2310 = vrot.slane %v2305, %v2309
    %v2311 = vlaneseq
    %v2312 = vshrl.u32 %v2311, 7
    %v2313 = vsub.s32 1, %v2312
    %v2314 = vrot.slane %v2305, %v2313
    %v2317 = vadd.f32 %v2295, %v2310
    %v2318 = vadd.f32 %v2296, %v2314
    %v2319 = vadd.f32 %v2297, %v2310
    %v2320 = vadd.f32 %v2298, %v2314
    %v2321 = vadd.f32 %v2299, %v2310
    %v2322 = vadd.f32 %v2300, %v2314
    %v2323 = vadd.f32 %v2301, %v2310
    %v2324 = vadd.f32 %v2302, %v2314
    %v2325 = vadd.f32 %v2303, %v2310
    %v2326 = vadd.f32 %v2304, %v2314
    %v2327 = vmax.f32 %v2317, 0.0
    %v2328 = vmax.f32 %v2318, 0.0
    %v2329 = vmax.f32 %v2319, 0.0
    %v2330 = vmax.f32 %v2320, 0.0
    %v2331 = vmax.f32 %v2321, 0.0
    %v2332 = vmax.f32 %v2322, 0.0
    %v2333 = vmax.f32 %v2323, 0.0
    %v2334 = vmax.f32 %v2324, 0.0
    %v2335 = vmax.f32 %v2325, 0.0
    %v2336 = vmax.f32 %v2326, 0.0
    %v2337 = vld [vmem:[%s10] sm:$0xff]
    %v2338 = vld [vmem:[%s10 + $0x8] sm:$0xff]
    %v2339 = vld [vmem:[%s10 + $0x10] sm:$0xff]
    %v2340 = vld [vmem:[%s10 + $0x18] sm:$0xff]
    %v2341 = vld [vmem:[%s10 + $0x20] sm:$0xff]
    %v2342 = vld [vmem:[%s10 + $0x28] sm:$0xff]
    %v2343 = vld [vmem:[%s10 + $0x30] sm:$0xff]
    %v2344 = vld [vmem:[%s10 + $0x38] sm:$0xff]
    %v2345 = vld [vmem:[%s10 + $0x40] sm:$0xff]
    %v2346 = vld [vmem:[%s10 + $0x48] sm:$0xff]
    %v2347 = vld [vmem:[%s10 + $0x50] sm:$0xff]
    %v2348 = vld [vmem:[%s10 + $0x58] sm:$0xff]
    %v2349 = vld [vmem:[%s10 + $0x60] sm:$0xff]
    %v2350 = vld [vmem:[%s10 + $0x68] sm:$0xff]
    %v2351 = vld [vmem:[%s10 + $0x70] sm:$0xff]
    %v2352 = vld [vmem:[%s10 + $0x78] sm:$0xff]
    %v2353 = vld [vmem:[%s10 + $0x80] sm:$0xff]
    %v2354 = vld [vmem:[%s10 + $0x88] sm:$0xff]
    %v2355 = vld [vmem:[%s10 + $0x90] sm:$0xff]
    %v2356 = vld [vmem:[%s10 + $0x98] sm:$0xff]
    %v2357 = vld [vmem:[%s10 + $0xa0] sm:$0xff]
    %v2358 = vld [vmem:[%s10 + $0xa8] sm:$0xff]
    %v2359 = vld [vmem:[%s10 + $0xb0] sm:$0xff]
    %v2360 = vld [vmem:[%s10 + $0xb8] sm:$0xff]
    %v2361 = vld [vmem:[%s10 + $0xc0] sm:$0xff]
    %v2362 = vld [vmem:[%s10 + $0xc8] sm:$0xff]
    %v2363 = vld [vmem:[%s10 + $0xd0] sm:$0xff]
    %v2364 = vld [vmem:[%s10 + $0xd8] sm:$0xff]
    %v2365 = vld [vmem:[%s10 + $0xe0] sm:$0xff]
    %v2366 = vld [vmem:[%s10 + $0xe8] sm:$0xff]
    %v2367 = vld [vmem:[%s10 + $0xf0] sm:$0xff]
    %v2368 = vld [vmem:[%s10 + $0xf8] sm:$0xff]
    %v2369 = vld [vmem:[%s10 + $0x100] sm:$0xff]
    %v2370 = vld [vmem:[%s10 + $0x108] sm:$0xff]
    %v2371 = vld [vmem:[%s10 + $0x110] sm:$0xff]
    %v2372 = vld [vmem:[%s10 + $0x118] sm:$0xff]
    %v2373 = vld [vmem:[%s10 + $0x120] sm:$0xff]
    %v2374 = vld [vmem:[%s10 + $0x128] sm:$0xff]
    %v2375 = vld [vmem:[%s10 + $0x130] sm:$0xff]
    %v2376 = vld [vmem:[%s10 + $0x138] sm:$0xff]
    %v2377 = vld [vmem:[%s10 + $0x140] sm:$0xff]
    %v2378 = vld [vmem:[%s10 + $0x148] sm:$0xff]
    %v2379 = vld [vmem:[%s10 + $0x150] sm:$0xff]
    %v2380 = vld [vmem:[%s10 + $0x158] sm:$0xff]
    %v2381 = vld [vmem:[%s10 + $0x160] sm:$0xff]
    %v2382 = vld [vmem:[%s10 + $0x168] sm:$0xff]
    %v2383 = vld [vmem:[%s10 + $0x170] sm:$0xff]
    %v2384 = vld [vmem:[%s10 + $0x178] sm:$0xff]
    %v2385 = vld [vmem:[%s10 + $0x180] sm:$0xff]
    %v2386 = vld [vmem:[%s10 + $0x188] sm:$0xff]
    %v2387 = vld [vmem:[%s10 + $0x190] sm:$0xff]
    %v2388 = vld [vmem:[%s10 + $0x198] sm:$0xff]
    %v2389 = vld [vmem:[%s10 + $0x1a0] sm:$0xff]
    %v2390 = vld [vmem:[%s10 + $0x1a8] sm:$0xff]
    %v2391 = vld [vmem:[%s10 + $0x1b0] sm:$0xff]
    %v2392 = vld [vmem:[%s10 + $0x1b8] sm:$0xff]
    %v2393 = vld [vmem:[%s10 + $0x1c0] sm:$0xff]
    %v2394 = vld [vmem:[%s10 + $0x1c8] sm:$0xff]
    %v2395 = vld [vmem:[%s10 + $0x1d0] sm:$0xff]
    %v2396 = vld [vmem:[%s10 + $0x1d8] sm:$0xff]
    %v2397 = vld [vmem:[%s10 + $0x1e0] sm:$0xff]
    %v2398 = vld [vmem:[%s10 + $0x1e8] sm:$0xff]
    %v2399 = vld [vmem:[%s10 + $0x1f0] sm:$0xff]
    %v2400 = vld [vmem:[%s10 + $0x1f8] sm:$0xff]
    %v2401 = vld [vmem:[%s11] sm:$0x3]
    %v2403 = vlaneseq
    %v2404 = vshrl.u32 %v2403, 7
    %v2405 = vsub.s32 0, %v2404
    %v2406 = vrot.slane %v2401, %v2405
    %v2407 = vlaneseq
    %v2408 = vshrl.u32 %v2407, 7
    %v2409 = vsub.s32 1, %v2408
    %v2410 = vrot.slane %v2401, %v2409
    %2413 = vmatprep.subr.mxu0 %v2368
    %2414 = vmatpush1.msra.mxu0 %v2367
    %2415 = vmatprep.subr.mxu0 %v2366
    %2416 = vmatpush1.msra.mxu0 %v2365
    %2417 = vmatprep.subr.mxu0 %v2364
    %2418 = vmatpush1.msra.mxu0 %v2363
    %2419 = vmatprep.subr.mxu0 %v2362
    %2420 = vmatpush1.msra.mxu0 %v2361
    %2421 = vmatprep.subr.mxu0 %v2360
    %2422 = vmatpush1.msra.mxu0 %v2359
    %2423 = vmatprep.subr.mxu0 %v2358
    %2424 = vmatpush1.msra.mxu0 %v2357
    %2425 = vmatprep.subr.mxu0 %v2356
    %2426 = vmatpush1.msra.mxu0 %v2355
    %2427 = vmatprep.subr.mxu0 %v2354
    %2428 = vmatpush1.msra.mxu0 %v2353
    %2429 = vmatprep.subr.mxu0 %v2352
    %2430 = vmatpush1.msra.mxu0 %v2351
    %2431 = vmatprep.subr.mxu0 %v2350
    %2432 = vmatpush1.msra.mxu0 %v2349
    %2433 = vmatprep.subr.mxu0 %v2348
    %2434 = vmatpush1.msra.mxu0 %v2347
    %2435 = vmatprep.subr.mxu0 %v2346
    %2436 = vmatpush1.msra.mxu0 %v2345
    %2437 = vmatprep.subr.mxu0 %v2344
    %2438 = vmatpush1.msra.mxu0 %v2343
    %2439 = vmatprep.subr.mxu0 %v2342
    %2440 = vmatpush1.msra.mxu0 %v2341
    %2441 = vmatprep.subr.mxu0 %v2340
    %2442 = vmatpush1.msra.mxu0 %v2339
    %2443 = vmatprep.subr.mxu0 %v2338
    %2444 = vmatpush1.msra.mxu0 %v2337
    %2445 = vmatprep.subr.mxu0 %v2400
    %2446 = vmatpush2.msra.mxu0 %v2399
    %2447 = vmatprep.subr.mxu0 %v2398
    %2448 = vmatpush2.msra.mxu0 %v2397
    %2449 = vmatprep.subr.mxu0 %v2396
    %2450 = vmatpush2.msra.mxu0 %v2395
    %2451 = vmatprep.subr.mxu0 %v2394
    %2452 = vmatpush2.msra.mxu0 %v2393
    %2453 = vmatprep.subr.mxu0 %v2392
    %2454 = vmatpush2.msra.mxu0 %v2391
    %2455 = vmatprep.subr.mxu0 %v2390
    %2456 = vmatpush2.msra.mxu0 %v2389
    %2457 = vmatprep.subr.mxu0 %v2388
    %2458 = vmatpush2.msra.mxu0 %v2387
    %2459 = vmatprep.subr.mxu0 %v2386
    %2460 = vmatpush2.msra.mxu0 %v2385
    %2461 = vmatprep.subr.mxu0 %v2384
    %2462 = vmatpush2.msra.mxu0 %v2383
    %2463 = vmatprep.subr.mxu0 %v2382
    %2464 = vmatpush2.msra.mxu0 %v2381
    %2465 = vmatprep.subr.mxu0 %v2380
    %2466 = vmatpush2.msra.mxu0 %v2379
    %2467 = vmatprep.subr.mxu0 %v2378
    %2468 = vmatpush2.msra.mxu0 %v2377
    %2469 = vmatprep.subr.mxu0 %v2376
    %2470 = vmatpush2.msra.mxu0 %v2375
    %2471 = vmatprep.subr.mxu0 %v2374
    %2472 = vmatpush2.msra.mxu0 %v2373
    %2473 = vmatprep.subr.mxu0 %v2372
    %2474 = vmatpush2.msra.mxu0 %v2371
    %2475 = vmatprep.subr.mxu0 %v2370
    %2476 = vmatpush2.msra.mxu0 %v2369
    %2477 = vmatprep.mubr.f32.mxu0 %v2328
    %2478 = vmatmul.mubr.f32.gmra.mxu0 %v2327
    %v2479 = vpop.f32.mrf.mxu0
    %v2480 = vadd.f32 %v2406, %v2479
    %v2481 = vpop.f32.mrf.mxu0
    %v2482 = vadd.f32 %v2410, %v2481
    %2483 = vmatprep.mubr.f32.mxu0 %v2330
    %2484 = vmatmul.mubr.f32.gmra.mxu0 %v2329
    %v2485 = vpop.f32.mrf.mxu0
    %v2486 = vadd.f32 %v2406, %v2485
    %v2487 = vpop.f32.mrf.mxu0
    %v2488 = vadd.f32 %v2410, %v2487
    %2489 = vmatprep.mubr.f32.mxu0 %v2332
    %2490 = vmatmul.mubr.f32.gmra.mxu0 %v2331
    %v2491 = vpop.f32.mrf.mxu0
    %v2492 = vadd.f32 %v2406, %v2491
    %v2493 = vpop.f32.mrf.mxu0
    %v2494 = vadd.f32 %v2410, %v2493
    %2495 = vmatprep.mubr.f32.mxu0 %v2334
    %2496 = vmatmul.mubr.f32.gmra.mxu0 %v2333
    %v2497 = vpop.f32.mrf.mxu0
    %v2498 = vadd.f32 %v2406, %v2497
    %v2499 = vpop.f32.mrf.mxu0
    %v2500 = vadd.f32 %v2410, %v2499
    %2501 = vmatprep.mubr.f32.mxu0 %v2336
    %2502 = vmatmul.mubr.f32.gmra.mxu0 %v2335
    %v2503 = vpop.f32.mrf.mxu0
    %v2504 = vadd.f32 %v2406, %v2503
    %v2505 = vpop.f32.mrf.mxu0
    %v2506 = vadd.f32 %v2410, %v2505
    %2507 = vdwg.mxu0
    %v2508 = vmax.f32 %v2480, 0.0
    %v2509 = vmax.f32 %v2482, 0.0
    %v2510 = vmax.f32 %v2486, 0.0
    %v2511 = vmax.f32 %v2488, 0.0
    %v2512 = vmax.f32 %v2492, 0.0
    %v2513 = vmax.f32 %v2494, 0.0
    %v2514 = vmax.f32 %v2498, 0.0
    %v2515 = vmax.f32 %v2500, 0.0
    %v2516 = vmax.f32 %v2504, 0.0
    %v2517 = vmax.f32 %v2506, 0.0
    %2518 = vst [vmem:[#allocation2] sm:$0xff] 0.0
    %2519 = vst [vmem:[#allocation2 + $0x8] sm:$0xff] 0.0
    %2520 = vst [vmem:[#allocation2 + $0x10] sm:$0xff] 0.0
    %2521 = vst.msk [vmem:[#allocation2 + $0x18] sm:$0xff] %vm360, 0.0
    %2522 = vst [vmem:[#allocation2 + $0x20] sm:$0xff] 0.0
    %2523 = vst [vmem:[#allocation2 + $0x28] sm:$0xff] 0.0
    %2524 = vst [vmem:[#allocation2 + $0x30] sm:$0xff] 0.0
    %2525 = vst.msk [vmem:[#allocation2 + $0x38] sm:$0xff] %vm360, 0.0
    %2526 = vst [vmem:[#allocation2 + $0x40] sm:$0xff] 0.0
    %2527 = vst [vmem:[#allocation2 + $0x48] sm:$0xff] 0.0
    %2528 = vst [vmem:[#allocation2 + $0x50] sm:$0xff] 0.0
    %2529 = vst.msk [vmem:[#allocation2 + $0x58] sm:$0xff] %vm360, 0.0
    %2530 = vst [vmem:[#allocation2 + $0x60] sm:$0xff] 0.0
    %2531 = vst [vmem:[#allocation2 + $0x68] sm:$0xff] 0.0
    %2532 = vst [vmem:[#allocation2 + $0x70] sm:$0xff] 0.0
    %2533 = vst.msk [vmem:[#allocation2 + $0x78] sm:$0xff] %vm360, 0.0
    %2534 = vst [vmem:[#allocation2 + $0x80] sm:$0xff] 0.0
    %2535 = vst [vmem:[#allocation2 + $0x88] sm:$0xff] 0.0
    %2536 = vst [vmem:[#allocation2 + $0x90] sm:$0xff] 0.0
    %2537 = vst.msk [vmem:[#allocation2 + $0x98] sm:$0xff] %vm360, 0.0
    %2538 = vst [vmem:[#allocation2 + $0xa0] sm:$0xff] 0.0
    %2539 = vst [vmem:[#allocation2 + $0xa8] sm:$0xff] 0.0
    %2540 = vst [vmem:[#allocation2 + $0xb0] sm:$0xff] 0.0
    %2541 = vst.msk [vmem:[#allocation2 + $0xb8] sm:$0xff] %vm360, 0.0
    %2542 = vst [vmem:[#allocation2 + $0xc0] sm:$0xff] 0.0
    %2543 = vst [vmem:[#allocation2 + $0xc8] sm:$0xff] 0.0
    %2544 = vst [vmem:[#allocation2 + $0xd0] sm:$0xff] 0.0
    %2545 = vst.msk [vmem:[#allocation2 + $0xd8] sm:$0xff] %vm360, 0.0
    %2546 = vst [vmem:[#allocation2 + $0x28] sm:$0xff] %v2508
    %2547 = vst [vmem:[#allocation2 + $0x30] sm:$0xff] %v2509
    %2548 = vst [vmem:[#allocation2 + $0x48] sm:$0xff] %v2510
    %2549 = vst [vmem:[#allocation2 + $0x50] sm:$0xff] %v2511
    %2550 = vst [vmem:[#allocation2 + $0x68] sm:$0xff] %v2512
    %2551 = vst [vmem:[#allocation2 + $0x70] sm:$0xff] %v2513
    %2552 = vst [vmem:[#allocation2 + $0x88] sm:$0xff] %v2514
    %2553 = vst [vmem:[#allocation2 + $0x90] sm:$0xff] %v2515
    %2554 = vst [vmem:[#allocation2 + $0xa8] sm:$0xff] %v2516
    %2555 = vst [vmem:[#allocation2 + $0xb0] sm:$0xff] %v2517
    %v2556 = vld [vmem:[#allocation2] sm:$0x80]
    %v2557 = vld [vmem:[#allocation2 + $0x8] sm:$0x80]
    %v2558 = vld [vmem:[#allocation2 + $0x10] sm:$0x80]
    %v2559 = vld [vmem:[#allocation2 + $0x20] sm:$0xff]
    %v2560 = vld [vmem:[#allocation2 + $0x28] sm:$0xff]
    %v2561 = vld [vmem:[#allocation2 + $0x30] sm:$0xff]
    %v2562 = vld [vmem:[#allocation2 + $0x40] sm:$0xff]
    %v2563 = vld [vmem:[#allocation2 + $0x48] sm:$0xff]
    %v2564 = vld [vmem:[#allocation2 + $0x50] sm:$0xff]
    %v2565 = vld [vmem:[#allocation2 + $0x60] sm:$0xff]
    %v2566 = vld [vmem:[#allocation2 + $0x68] sm:$0xff]
    %v2567 = vld [vmem:[#allocation2 + $0x70] sm:$0xff]
    %v2568 = vld [vmem:[#allocation2 + $0x80] sm:$0xff]
    %v2569 = vld [vmem:[#allocation2 + $0x88] sm:$0xff]
    %v2570 = vld [vmem:[#allocation2 + $0x90] sm:$0xff]
    %v2571 = vld [vmem:[#allocation2 + $0xa0] sm:$0x7f]
    %v2572 = vld [vmem:[#allocation2 + $0xa8] sm:$0x7f]
    %v2573 = vld [vmem:[#allocation2 + $0xb0] sm:$0x7f]
    %v2592 = vrot.slane %v2556, 7
    %v2593 = vrot.slane %v2559, 7
    %v2594 = vsel %vm442, %v2592, %v2593
    %v2595 = vrot.slane %v2557, 7
    %v2596 = vrot.slane %v2560, 7
    %v2597 = vsel %vm442, %v2595, %v2596
    %v2598 = vrot.slane %v2558, 7
    %v2599 = vrot.slane %v2561, 7
    %v2600 = vsel %vm442, %v2598, %v2599
    %v2601 = vrot.slane %v2562, 7
    %v2602 = vsel %vm442, %v2593, %v2601
    %v2603 = vrot.slane %v2563, 7
    %v2604 = vsel %vm442, %v2596, %v2603
    %v2605 = vrot.slane %v2564, 7
    %v2606 = vsel %vm442, %v2599, %v2605
    %v2607 = vrot.slane %v2565, 7
    %v2608 = vsel %vm442, %v2601, %v2607
    %v2609 = vrot.slane %v2566, 7
    %v2610 = vsel %vm442, %v2603, %v2609
    %v2611 = vrot.slane %v2567, 7
    %v2612 = vsel %vm442, %v2605, %v2611
    %v2613 = vrot.slane %v2568, 7
    %v2614 = vsel %vm442, %v2607, %v2613
    %v2615 = vrot.slane %v2569, 7
    %v2616 = vsel %vm442, %v2609, %v2615
    %v2617 = vrot.slane %v2570, 7
    %v2618 = vsel %vm442, %v2611, %v2617
    %v2619 = vrot.slane %v2571, 7
    %v2620 = vsel %vm442, %v2613, %v2619
    %v2621 = vrot.slane %v2572, 7
    %v2622 = vsel %vm442, %v2615, %v2621
    %v2623 = vrot.slane %v2573, 7
    %v2624 = vsel %vm442, %v2617, %v2623
    %2625 = vrot.lane.b32.xlu0 %v2594, 64
    %v2626 = vpop.permute.xlu0 %2625
    %2627 = vrot.lane.b32.xlu0 %v2597, 64
    %v2628 = vpop.permute.xlu0 %2627
    %2629 = vrot.lane.b32.xlu0 %v2600, 64
    %v2630 = vpop.permute.xlu0 %2629
    %2631 = vrot.lane.b32.xlu0 %v2602, 64
    %v2632 = vpop.permute.xlu0 %2631
    %2633 = vrot.lane.b32.xlu0 %v2604, 64
    %v2634 = vpop.permute.xlu0 %2633
    %2635 = vrot.lane.b32.xlu0 %v2606, 64
    %v2636 = vpop.permute.xlu0 %2635
    %2637 = vrot.lane.b32.xlu0 %v2608, 64
    %v2638 = vpop.permute.xlu0 %2637
    %2639 = vrot.lane.b32.xlu0 %v2610, 64
    %v2640 = vpop.permute.xlu0 %2639
    %2641 = vrot.lane.b32.xlu0 %v2612, 64
    %v2642 = vpop.permute.xlu0 %2641
    %2643 = vrot.lane.b32.xlu0 %v2614, 64
    %v2644 = vpop.permute.xlu0 %2643
    %2645 = vrot.lane.b32.xlu0 %v2616, 64
    %v2646 = vpop.permute.xlu0 %2645
    %2647 = vrot.lane.b32.xlu0 %v2618, 64
    %v2648 = vpop.permute.xlu0 %2647
    %2649 = vrot.lane.b32.xlu0 %v2620, 64
    %v2650 = vpop.permute.xlu0 %2649
    %2651 = vrot.lane.b32.xlu0 %v2622, 64
    %v2652 = vpop.permute.xlu0 %2651
    %2653 = vrot.lane.b32.xlu0 %v2624, 64
    %v2654 = vpop.permute.xlu0 %2653
    %v2655 = vsel %vm360, %v2626, %v2628
    %v2656 = vsel %vm360, %v2628, %v2630
    %v2657 = vsel %vm360, %v2632, %v2634
    %v2658 = vsel %vm360, %v2634, %v2636
    %v2659 = vsel %vm360, %v2638, %v2640
    %v2660 = vsel %vm360, %v2640, %v2642
    %v2661 = vsel %vm360, %v2644, %v2646
    %v2662 = vsel %vm360, %v2646, %v2648
    %v2663 = vsel %vm360, %v2650, %v2652
    %v2664 = vsel %vm360, %v2652, %v2654
    %v2675 = vsel %vm419, %v2655, 0.0
    %v2676 = vsel %vm419, %v2656, 0.0
    %v2677 = vsel %vm420, %v2657, 0.0
    %v2678 = vsel %vm420, %v2658, 0.0
    %v2679 = vsel %vm421, %v2659, 0.0
    %v2680 = vsel %vm421, %v2660, 0.0
    %v2681 = vsel %vm422, %v2661, 0.0
    %v2682 = vsel %vm422, %v2662, 0.0
    %v2683 = vsel %vm423, %v2663, 0.0
    %v2684 = vsel %vm423, %v2664, 0.0
    %v2685 = vld [vmem:[%s12] ss:$8 sm:$0x3]
    %v2687 = vlaneseq
    %v2688 = vshrl.u32 %v2687, 7
    %v2689 = vsub.s32 0, %v2688
    %v2690 = vrot.slane %v2685, %v2689
    %v2691 = vlaneseq
    %v2692 = vshrl.u32 %v2691, 7
    %v2693 = vsub.s32 1, %v2692
    %v2694 = vrot.slane %v2685, %v2693
    %v2697 = vmul.f32 %v2675, %v2690
    %v2698 = vmul.f32 %v2676, %v2694
    %v2699 = vmul.f32 %v2677, %v2690
    %v2700 = vmul.f32 %v2678, %v2694
    %v2701 = vmul.f32 %v2679, %v2690
    %v2702 = vmul.f32 %v2680, %v2694
    %v2703 = vmul.f32 %v2681, %v2690
    %v2704 = vmul.f32 %v2682, %v2694
    %v2705 = vmul.f32 %v2683, %v2690
    %v2706 = vmul.f32 %v2684, %v2694
    %v2707 = vadd.f32 %v2697, 0.0
    %v2708 = vadd.f32 %v2698, 0.0
    %v2709 = vadd.f32 %v2699, 0.0
    %v2710 = vadd.f32 %v2700, 0.0
    %v2711 = vadd.f32 %v2701, 0.0
    %v2712 = vadd.f32 %v2702, 0.0
    %v2713 = vadd.f32 %v2703, 0.0
    %v2714 = vadd.f32 %v2704, 0.0
    %v2715 = vadd.f32 %v2705, 0.0
    %v2716 = vadd.f32 %v2706, 0.0
    %v2727 = vsel %vm419, %v2597, 0.0
    %v2728 = vsel %vm419, %v2600, 0.0
    %v2729 = vsel %vm420, %v2604, 0.0
    %v2730 = vsel %vm420, %v2606, 0.0
    %v2731 = vsel %vm421, %v2610, 0.0
    %v2732 = vsel %vm421, %v2612, 0.0
    %v2733 = vsel %vm422, %v2616, 0.0
    %v2734 = vsel %vm422, %v2618, 0.0
    %v2735 = vsel %vm423, %v2622, 0.0
    %v2736 = vsel %vm423, %v2624, 0.0
    %s2737 = scalar_lea.vmem %s12, 1
    %v2738 = vld [vmem:[%s2737] ss:$8 sm:$0x3]
    %v2740 = vlaneseq
    %v2741 = vshrl.u32 %v2740, 7
    %v2742 = vsub.s32 0, %v2741
    %v2743 = vrot.slane %v2738, %v2742
    %v2744 = vlaneseq
    %v2745 = vshrl.u32 %v2744, 7
    %v2746 = vsub.s32 1, %v2745
    %v2747 = vrot.slane %v2738, %v2746
    %v2750 = vmul.f32 %v2727, %v2743
    %v2751 = vmul.f32 %v2728, %v2747
    %v2752 = vmul.f32 %v2729, %v2743
    %v2753 = vmul.f32 %v2730, %v2747
    %v2754 = vmul.f32 %v2731, %v2743
    %v2755 = vmul.f32 %v2732, %v2747
    %v2756 = vmul.f32 %v2733, %v2743
    %v2757 = vmul.f32 %v2734, %v2747
    %v2758 = vmul.f32 %v2735, %v2743
    %v2759 = vmul.f32 %v2736, %v2747
    %v2760 = vadd.f32 %v2707, %v2750
    %v2761 = vadd.f32 %v2708, %v2751
    %v2762 = vadd.f32 %v2709, %v2752
    %v2763 = vadd.f32 %v2710, %v2753
    %v2764 = vadd.f32 %v2711, %v2754
    %v2765 = vadd.f32 %v2712, %v2755
    %v2766 = vadd.f32 %v2713, %v2756
    %v2767 = vadd.f32 %v2714, %v2757
    %v2768 = vadd.f32 %v2715, %v2758
    %v2769 = vadd.f32 %v2716, %v2759
    %v2770 = vld [vmem:[#allocation2 + $0x18] sm:$0x80]
    %v2771 = vld [vmem:[#allocation2 + $0x38] sm:$0xff]
    %v2772 = vld [vmem:[#allocation2 + $0x58] sm:$0xff]
    %v2773 = vld [vmem:[#allocation2 + $0x78] sm:$0xff]
    %v2774 = vld [vmem:[#allocation2 + $0x98] sm:$0xff]
    %v2775 = vld [vmem:[#allocation2 + $0xb8] sm:$0x7f]
    %v2782 = vrot.slane %v2770, 7
    %v2783 = vrot.slane %v2771, 7
    %v2784 = vsel %vm442, %v2782, %v2783
    %v2785 = vrot.slane %v2772, 7
    %v2786 = vsel %vm442, %v2783, %v2785
    %v2787 = vrot.slane %v2773, 7
    %v2788 = vsel %vm442, %v2785, %v2787
    %v2789 = vrot.slane %v2774, 7
    %v2790 = vsel %vm442, %v2787, %v2789
    %v2791 = vrot.slane %v2775, 7
    %v2792 = vsel %vm442, %v2789, %v2791
    %2793 = vrot.lane.b32.xlu0 %v2784, 64
    %v2794 = vpop.permute.xlu0 %2793
    %2795 = vrot.lane.b32.xlu0 %v2786, 64
    %v2796 = vpop.permute.xlu0 %2795
    %2797 = vrot.lane.b32.xlu0 %v2788, 64
    %v2798 = vpop.permute.xlu0 %2797
    %2799 = vrot.lane.b32.xlu0 %v2790, 64
    %v2800 = vpop.permute.xlu0 %2799
    %2801 = vrot.lane.b32.xlu0 %v2792, 64
    %v2802 = vpop.permute.xlu0 %2801
    %v2803 = vsel %vm360, %v2630, %v2794
    %v2804 = vsel %vm360, %v2636, %v2796
    %v2805 = vsel %vm360, %v2642, %v2798
    %v2806 = vsel %vm360, %v2648, %v2800
    %v2807 = vsel %vm360, %v2654, %v2802
    %v2813 = vsel %vm419, %v2803, 0.0
    %v2814 = vsel %vm420, %v2804, 0.0
    %v2815 = vsel %vm421, %v2805, 0.0
    %v2816 = vsel %vm422, %v2806, 0.0
    %v2817 = vsel %vm423, %v2807, 0.0
    %s2818 = scalar_lea.vmem %s12, 2
    %v2819 = vld [vmem:[%s2818] ss:$8 sm:$0x3]
    %v2821 = vlaneseq
    %v2822 = vshrl.u32 %v2821, 7
    %v2823 = vsub.s32 0, %v2822
    %v2824 = vrot.slane %v2819, %v2823
    %v2825 = vlaneseq
    %v2826 = vshrl.u32 %v2825, 7
    %v2827 = vsub.s32 1, %v2826
    %v2828 = vrot.slane %v2819, %v2827
    %v2831 = vmul.f32 %v2676, %v2824
    %v2832 = vmul.f32 %v2813, %v2828
    %v2833 = vmul.f32 %v2678, %v2824
    %v2834 = vmul.f32 %v2814, %v2828
    %v2835 = vmul.f32 %v2680, %v2824
    %v2836 = vmul.f32 %v2815, %v2828
    %v2837 = vmul.f32 %v2682, %v2824
    %v2838 = vmul.f32 %v2816, %v2828
    %v2839 = vmul.f32 %v2684, %v2824
    %v2840 = vmul.f32 %v2817, %v2828
    %v2841 = vadd.f32 %v2760, %v2831
    %v2842 = vadd.f32 %v2761, %v2832
    %v2843 = vadd.f32 %v2762, %v2833
    %v2844 = vadd.f32 %v2763, %v2834
    %v2845 = vadd.f32 %v2764, %v2835
    %v2846 = vadd.f32 %v2765, %v2836
    %v2847 = vadd.f32 %v2766, %v2837
    %v2848 = vadd.f32 %v2767, %v2838
    %v2849 = vadd.f32 %v2768, %v2839
    %v2850 = vadd.f32 %v2769, %v2840
    %v2851 = vld [vmem:[#allocation2 + $0xa0] sm:$0xff]
    %v2852 = vld [vmem:[#allocation2 + $0xa8] sm:$0xff]
    %v2853 = vld [vmem:[#allocation2 + $0xb0] sm:$0xff]
    %s2854 = scalar_lea.vmem %s12, 3
    %v2855 = vld [vmem:[%s2854] ss:$8 sm:$0x3]
    %v2857 = vlaneseq
    %v2858 = vshrl.u32 %v2857, 7
    %v2859 = vsub.s32 0, %v2858
    %v2860 = vrot.slane %v2855, %v2859
    %v2861 = vlaneseq
    %v2862 = vshrl.u32 %v2861, 7
    %v2863 = vsub.s32 1, %v2862
    %v2864 = vrot.slane %v2855, %v2863
    %2865 = vrot.lane.b32.xlu0 %v2860, 64
    %v2866 = vpop.permute.xlu0 %2865
    %2867 = vrot.lane.b32.xlu0 %v2864, 64
    %v2868 = vpop.permute.xlu0 %2867
    %v2869 = vsel %vm360, %v2866, %v2868
    %v2873 = vmul.f32 %v2559, %v2866
    %v2874 = vmul.f32 %v2560, %v2869
    %v2875 = vmul.f32 %v2561, %v2868
    %v2876 = vmul.f32 %v2562, %v2866
    %v2877 = vmul.f32 %v2563, %v2869
    %v2878 = vmul.f32 %v2564, %v2868
    %v2879 = vmul.f32 %v2565, %v2866
    %v2880 = vmul.f32 %v2566, %v2869
    %v2881 = vmul.f32 %v2567, %v2868
    %v2882 = vmul.f32 %v2568, %v2866
    %v2883 = vmul.f32 %v2569, %v2869
    %v2884 = vmul.f32 %v2570, %v2868
    %v2885 = vmul.f32 %v2851, %v2866
    %v2886 = vmul.f32 %v2852, %v2869
    %v2887 = vmul.f32 %v2853, %v2868
    %2903 = vrot.lane.b32.xlu0 %v2873, 64
    %v2904 = vpop.permute.xlu0 %2903
    %2905 = vrot.lane.b32.xlu0 %v2874, 64
    %v2906 = vpop.permute.xlu0 %2905
    %2907 = vrot.lane.b32.xlu0 %v2875, 64
    %v2908 = vpop.permute.xlu0 %2907
    %2909 = vrot.lane.b32.xlu0 %v2876, 64
    %v2910 = vpop.permute.xlu0 %2909
    %2911 = vrot.lane.b32.xlu0 %v2877, 64
    %v2912 = vpop.permute.xlu0 %2911
    %2913 = vrot.lane.b32.xlu0 %v2878, 64
    %v2914 = vpop.permute.xlu0 %2913
    %2915 = vrot.lane.b32.xlu0 %v2879, 64
    %v2916 = vpop.permute.xlu0 %2915
    %2917 = vrot.lane.b32.xlu0 %v2880, 64
    %v2918 = vpop.permute.xlu0 %2917
    %2919 = vrot.lane.b32.xlu0 %v2881, 64
    %v2920 = vpop.permute.xlu0 %2919
    %2921 = vrot.lane.b32.xlu0 %v2882, 64
    %v2922 = vpop.permute.xlu0 %2921
    %2923 = vrot.lane.b32.xlu0 %v2883, 64
    %v2924 = vpop.permute.xlu0 %2923
    %2925 = vrot.lane.b32.xlu0 %v2884, 64
    %v2926 = vpop.permute.xlu0 %2925
    %2927 = vrot.lane.b32.xlu0 %v2885, 64
    %v2928 = vpop.permute.xlu0 %2927
    %2929 = vrot.lane.b32.xlu0 %v2886, 64
    %v2930 = vpop.permute.xlu0 %2929
    %2931 = vrot.lane.b32.xlu0 %v2887, 64
    %v2932 = vpop.permute.xlu0 %2931
    %v2933 = vsel %vm360, %v2904, %v2906
    %v2934 = vsel %vm360, %v2906, %v2908
    %v2935 = vsel %vm360, %v2910, %v2912
    %v2936 = vsel %vm360, %v2912, %v2914
    %v2937 = vsel %vm360, %v2916, %v2918
    %v2938 = vsel %vm360, %v2918, %v2920
    %v2939 = vsel %vm360, %v2922, %v2924
    %v2940 = vsel %vm360, %v2924, %v2926
    %v2941 = vsel %vm360, %v2928, %v2930
    %v2942 = vsel %vm360, %v2930, %v2932
    %v2953 = vadd.f32 %v2841, %v2933
    %v2954 = vadd.f32 %v2842, %v2934
    %v2955 = vadd.f32 %v2843, %v2935
    %v2956 = vadd.f32 %v2844, %v2936
    %v2957 = vadd.f32 %v2845, %v2937
    %v2958 = vadd.f32 %v2846, %v2938
    %v2959 = vadd.f32 %v2847, %v2939
    %v2960 = vadd.f32 %v2848, %v2940
    %v2961 = vadd.f32 %v2849, %v2941
    %v2962 = vadd.f32 %v2850, %v2942
    %s2963 = scalar_lea.vmem %s12, 4
    %v2964 = vld [vmem:[%s2963] ss:$8 sm:$0x3]
    %v2966 = vlaneseq
    %v2967 = vshrl.u32 %v2966, 7
    %v2968 = vsub.s32 0, %v2967
    %v2969 = vrot.slane %v2964, %v2968
    %v2970 = vlaneseq
    %v2971 = vshrl.u32 %v2970, 7
    %v2972 = vsub.s32 1, %v2971
    %v2973 = vrot.slane %v2964, %v2972
    %v2976 = vmul.f32 %v2560, %v2969
    %v2977 = vmul.f32 %v2561, %v2973
    %v2978 = vmul.f32 %v2563, %v2969
    %v2979 = vmul.f32 %v2564, %v2973
    %v2980 = vmul.f32 %v2566, %v2969
    %v2981 = vmul.f32 %v2567, %v2973
    %v2982 = vmul.f32 %v2569, %v2969
    %v2983 = vmul.f32 %v2570, %v2973
    %v2984 = vmul.f32 %v2852, %v2969
    %v2985 = vmul.f32 %v2853, %v2973
    %v2986 = vadd.f32 %v2953, %v2976
    %v2987 = vadd.f32 %v2954, %v2977
    %v2988 = vadd.f32 %v2955, %v2978
    %v2989 = vadd.f32 %v2956, %v2979
    %v2990 = vadd.f32 %v2957, %v2980
    %v2991 = vadd.f32 %v2958, %v2981
    %v2992 = vadd.f32 %v2959, %v2982
    %v2993 = vadd.f32 %v2960, %v2983
    %v2994 = vadd.f32 %v2961, %v2984
    %v2995 = vadd.f32 %v2962, %v2985
    %v2996 = vld [vmem:[#allocation2 + $0xb8] sm:$0xff]
    %s2997 = scalar_lea.vmem %s12, 5
    %v2998 = vld [vmem:[%s2997] ss:$8 sm:$0x3]
    %v3000 = vlaneseq
    %v3001 = vshrl.u32 %v3000, 7
    %v3002 = vsub.s32 0, %v3001
    %v3003 = vrot.slane %v2998, %v3002
    %v3004 = vlaneseq
    %v3005 = vshrl.u32 %v3004, 7
    %v3006 = vsub.s32 1, %v3005
    %v3007 = vrot.slane %v2998, %v3006
    %3008 = vrot.lane.b32.xlu0 %v3003, 64
    %v3009 = vpop.permute.xlu0 %3008
    %3010 = vrot.lane.b32.xlu0 %v3007, 64
    %v3011 = vpop.permute.xlu0 %3010
    %v3012 = vsel %vm360, %v3009, %v3011
    %v3016 = vmul.f32 %v2560, %v3009
    %v3017 = vmul.f32 %v2561, %v3012
    %v3018 = vmul.f32 %v2771, %v3011
    %v3019 = vmul.f32 %v2563, %v3009
    %v3020 = vmul.f32 %v2564, %v3012
    %v3021 = vmul.f32 %v2772, %v3011
    %v3022 = vmul.f32 %v2566, %v3009
    %v3023 = vmul.f32 %v2567, %v3012
    %v3024 = vmul.f32 %v2773, %v3011
    %v3025 = vmul.f32 %v2569, %v3009
    %v3026 = vmul.f32 %v2570, %v3012
    %v3027 = vmul.f32 %v2774, %v3011
    %v3028 = vmul.f32 %v2852, %v3009
    %v3029 = vmul.f32 %v2853, %v3012
    %v3030 = vmul.f32 %v2996, %v3011
    %3046 = vrot.lane.b32.xlu0 %v3016, 64
    %v3047 = vpop.permute.xlu0 %3046
    %3048 = vrot.lane.b32.xlu0 %v3017, 64
    %v3049 = vpop.permute.xlu0 %3048
    %3050 = vrot.lane.b32.xlu0 %v3018, 64
    %v3051 = vpop.permute.xlu0 %3050
    %3052 = vrot.lane.b32.xlu0 %v3019, 64
    %v3053 = vpop.permute.xlu0 %3052
    %3054 = vrot.lane.b32.xlu0 %v3020, 64
    %v3055 = vpop.permute.xlu0 %3054
    %3056 = vrot.lane.b32.xlu0 %v3021, 64
    %v3057 = vpop.permute.xlu0 %3056
    %3058 = vrot.lane.b32.xlu0 %v3022, 64
    %v3059 = vpop.permute.xlu0 %3058
    %3060 = vrot.lane.b32.xlu0 %v3023, 64
    %v3061 = vpop.permute.xlu0 %3060
    %3062 = vrot.lane.b32.xlu0 %v3024, 64
    %v3063 = vpop.permute.xlu0 %3062
    %3064 = vrot.lane.b32.xlu0 %v3025, 64
    %v3065 = vpop.permute.xlu0 %3064
    %3066 = vrot.lane.b32.xlu0 %v3026, 64
    %v3067 = vpop.permute.xlu0 %3066
    %3068 = vrot.lane.b32.xlu0 %v3027, 64
    %v3069 = vpop.permute.xlu0 %3068
    %3070 = vrot.lane.b32.xlu0 %v3028, 64
    %v3071 = vpop.permute.xlu0 %3070
    %3072 = vrot.lane.b32.xlu0 %v3029, 64
    %v3073 = vpop.permute.xlu0 %3072
    %3074 = vrot.lane.b32.xlu0 %v3030, 64
    %v3075 = vpop.permute.xlu0 %3074
    %v3076 = vsel %vm360, %v3047, %v3049
    %v3077 = vsel %vm360, %v3049, %v3051
    %v3078 = vsel %vm360, %v3053, %v3055
    %v3079 = vsel %vm360, %v3055, %v3057
    %v3080 = vsel %vm360, %v3059, %v3061
    %v3081 = vsel %vm360, %v3061, %v3063
    %v3082 = vsel %vm360, %v3065, %v3067
    %v3083 = vsel %vm360, %v3067, %v3069
    %v3084 = vsel %vm360, %v3071, %v3073
    %v3085 = vsel %vm360, %v3073, %v3075
    %v3096 = vadd.f32 %v2986, %v3076
    %v3097 = vadd.f32 %v2987, %v3077
    %v3098 = vadd.f32 %v2988, %v3078
    %v3099 = vadd.f32 %v2989, %v3079
    %v3100 = vadd.f32 %v2990, %v3080
    %v3101 = vadd.f32 %v2991, %v3081
    %v3102 = vadd.f32 %v2992, %v3082
    %v3103 = vadd.f32 %v2993, %v3083
    %v3104 = vadd.f32 %v2994, %v3084
    %v3105 = vadd.f32 %v2995, %v3085
    %v3106 = vld [vmem:[#allocation2 + $0x20] sm:$0xfe]
    %v3107 = vld [vmem:[#allocation2 + $0x28] sm:$0xfe]
    %v3108 = vld [vmem:[#allocation2 + $0x30] sm:$0xfe]
    %v3109 = vld [vmem:[#allocation2 + $0xc0] sm:$0x1]
    %v3110 = vld [vmem:[#allocation2 + $0xc8] sm:$0x1]
    %v3111 = vld [vmem:[#allocation2 + $0xd0] sm:$0x1]
    %v3121 = vrot.slane %v3106, 1
    %v3122 = vrot.slane %v2562, 1
    %v3123 = vsel %vm982, %v3121, %v3122
    %v3124 = vrot.slane %v3107, 1
    %v3125 = vrot.slane %v2563, 1
    %v3126 = vsel %vm982, %v3124, %v3125
    %v3127 = vrot.slane %v3108, 1
    %v3128 = vrot.slane %v2564, 1
    %v3129 = vsel %vm982, %v3127, %v3128
    %v3130 = vrot.slane %v2565, 1
    %v3131 = vsel %vm982, %v3122, %v3130
    %v3132 = vrot.slane %v2566, 1
    %v3133 = vsel %vm982, %v3125, %v3132
    %v3134 = vrot.slane %v2567, 1
    %v3135 = vsel %vm982, %v3128, %v3134
    %v3136 = vrot.slane %v2568, 1
    %v3137 = vsel %vm982, %v3130, %v3136
    %v3138 = vrot.slane %v2569, 1
    %v3139 = vsel %vm982, %v3132, %v3138
    %v3140 = vrot.slane %v2570, 1
    %v3141 = vsel %vm982, %v3134, %v3140
    %v3142 = vrot.slane %v2851, 1
    %v3143 = vsel %vm982, %v3136, %v3142
    %v3144 = vrot.slane %v2852, 1
    %v3145 = vsel %vm982, %v3138, %v3144
    %v3146 = vrot.slane %v2853, 1
    %v3147 = vsel %vm982, %v3140, %v3146
    %v3148 = vrot.slane %v3109, 1
    %v3149 = vsel %vm982, %v3142, %v3148
    %v3150 = vrot.slane %v3110, 1
    %v3151 = vsel %vm982, %v3144, %v3150
    %v3152 = vrot.slane %v3111, 1
    %v3153 = vsel %vm982, %v3146, %v3152
    %3154 = vrot.lane.b32.xlu0 %v3123, 64
    %v3155 = vpop.permute.xlu0 %3154
    %3156 = vrot.lane.b32.xlu0 %v3126, 64
    %v3157 = vpop.permute.xlu0 %3156
    %3158 = vrot.lane.b32.xlu0 %v3129, 64
    %v3159 = vpop.permute.xlu0 %3158
    %3160 = vrot.lane.b32.xlu0 %v3131, 64
    %v3161 = vpop.permute.xlu0 %3160
    %3162 = vrot.lane.b32.xlu0 %v3133, 64
    %v3163 = vpop.permute.xlu0 %3162
    %3164 = vrot.lane.b32.xlu0 %v3135, 64
    %v3165 = vpop.permute.xlu0 %3164
    %3166 = vrot.lane.b32.xlu0 %v3137, 64
    %v3167 = vpop.permute.xlu0 %3166
    %3168 = vrot.lane.b32.xlu0 %v3139, 64
    %v3169 = vpop.permute.xlu0 %3168
    %3170 = vrot.lane.b32.xlu0 %v3141, 64
    %v3171 = vpop.permute.xlu0 %3170
    %3172 = vrot.lane.b32.xlu0 %v3143, 64
    %v3173 = vpop.permute.xlu0 %3172
    %3174 = vrot.lane.b32.xlu0 %v3145, 64
    %v3175 = vpop.permute.xlu0 %3174
    %3176 = vrot.lane.b32.xlu0 %v3147, 64
    %v3177 = vpop.permute.xlu0 %3176
    %3178 = vrot.lane.b32.xlu0 %v3149, 64
    %v3179 = vpop.permute.xlu0 %3178
    %3180 = vrot.lane.b32.xlu0 %v3151, 64
    %v3181 = vpop.permute.xlu0 %3180
    %3182 = vrot.lane.b32.xlu0 %v3153, 64
    %v3183 = vpop.permute.xlu0 %3182
    %v3184 = vsel %vm360, %v3155, %v3157
    %v3185 = vsel %vm360, %v3157, %v3159
    %v3186 = vsel %vm360, %v3161, %v3163
    %v3187 = vsel %vm360, %v3163, %v3165
    %v3188 = vsel %vm360, %v3167, %v3169
    %v3189 = vsel %vm360, %v3169, %v3171
    %v3190 = vsel %vm360, %v3173, %v3175
    %v3191 = vsel %vm360, %v3175, %v3177
    %v3192 = vsel %vm360, %v3179, %v3181
    %v3193 = vsel %vm360, %v3181, %v3183
    %v3204 = vsel %vm968, %v3184, 0.0
    %v3205 = vsel %vm968, %v3185, 0.0
    %v3206 = vsel %vm969, %v3186, 0.0
    %v3207 = vsel %vm969, %v3187, 0.0
    %v3208 = vsel %vm970, %v3188, 0.0
    %v3209 = vsel %vm970, %v3189, 0.0
    %v3210 = vsel %vm971, %v3190, 0.0
    %v3211 = vsel %vm971, %v3191, 0.0
    %v3212 = vsel %vm972, %v3192, 0.0
    %v3213 = vsel %vm972, %v3193, 0.0
    %s3214 = scalar_lea.vmem %s12, 6
    %v3215 = vld [vmem:[%s3214] ss:$8 sm:$0x3]
    %v3217 = vlaneseq
    %v3218 = vshrl.u32 %v3217, 7
    %v3219 = vsub.s32 0, %v3218
    %v3220 = vrot.slane %v3215, %v3219
    %v3221 = vlaneseq
    %v3222 = vshrl.u32 %v3221, 7
    %v3223 = vsub.s32 1, %v3222
    %v3224 = vrot.slane %v3215, %v3223
    %v3227 = vmul.f32 %v3204, %v3220
    %v3228 = vmul.f32 %v3205, %v3224
    %v3229 = vmul.f32 %v3206, %v3220
    %v3230 = vmul.f32 %v3207, %v3224
    %v3231 = vmul.f32 %v3208, %v3220
    %v3232 = vmul.f32 %v3209, %v3224
    %v3233 = vmul.f32 %v3210, %v3220
    %v3234 = vmul.f32 %v3211, %v3224
    %v3235 = vmul.f32 %v3212, %v3220
    %v3236 = vmul.f32 %v3213, %v3224
    %v3237 = vadd.f32 %v3096, %v3227
    %v3238 = vadd.f32 %v3097, %v3228
    %v3239 = vadd.f32 %v3098, %v3229
    %v3240 = vadd.f32 %v3099, %v3230
    %v3241 = vadd.f32 %v3100, %v3231
    %v3242 = vadd.f32 %v3101, %v3232
    %v3243 = vadd.f32 %v3102, %v3233
    %v3244 = vadd.f32 %v3103, %v3234
    %v3245 = vadd.f32 %v3104, %v3235
    %v3246 = vadd.f32 %v3105, %v3236
    %v3257 = vsel %vm968, %v3126, 0.0
    %v3258 = vsel %vm968, %v3129, 0.0
    %v3259 = vsel %vm969, %v3133, 0.0
    %v3260 = vsel %vm969, %v3135, 0.0
    %v3261 = vsel %vm970, %v3139, 0.0
    %v3262 = vsel %vm970, %v3141, 0.0
    %v3263 = vsel %vm971, %v3145, 0.0
    %v3264 = vsel %vm971, %v3147, 0.0
    %v3265 = vsel %vm972, %v3151, 0.0
    %v3266 = vsel %vm972, %v3153, 0.0
    %s3267 = scalar_lea.vmem %s12, 7
    %v3268 = vld [vmem:[%s3267] ss:$8 sm:$0x3]
    %v3270 = vlaneseq
    %v3271 = vshrl.u32 %v3270, 7
    %v3272 = vsub.s32 0, %v3271
    %v3273 = vrot.slane %v3268, %v3272
    %v3274 = vlaneseq
    %v3275 = vshrl.u32 %v3274, 7
    %v3276 = vsub.s32 1, %v3275
    %v3277 = vrot.slane %v3268, %v3276
    %v3280 = vmul.f32 %v3257, %v3273
    %v3281 = vmul.f32 %v3258, %v3277
    %v3282 = vmul.f32 %v3259, %v3273
    %v3283 = vmul.f32 %v3260, %v3277
    %v3284 = vmul.f32 %v3261, %v3273
    %v3285 = vmul.f32 %v3262, %v3277
    %v3286 = vmul.f32 %v3263, %v3273
    %v3287 = vmul.f32 %v3264, %v3277
    %v3288 = vmul.f32 %v3265, %v3273
    %v3289 = vmul.f32 %v3266, %v3277
    %v3290 = vadd.f32 %v3237, %v3280
    %v3291 = vadd.f32 %v3238, %v3281
    %v3292 = vadd.f32 %v3239, %v3282
    %v3293 = vadd.f32 %v3240, %v3283
    %v3294 = vadd.f32 %v3241, %v3284
    %v3295 = vadd.f32 %v3242, %v3285
    %v3296 = vadd.f32 %v3243, %v3286
    %v3297 = vadd.f32 %v3244, %v3287
    %v3298 = vadd.f32 %v3245, %v3288
    %v3299 = vadd.f32 %v3246, %v3289
    %v3300 = vld [vmem:[#allocation2 + $0x38] sm:$0xfe]
    %v3301 = vld [vmem:[#allocation2 + $0xd8] sm:$0x1]
    %v3305 = vrot.slane %v3300, 1
    %v3306 = vrot.slane %v2772, 1
    %v3307 = vsel %vm982, %v3305, %v3306
    %v3308 = vrot.slane %v2773, 1
    %v3309 = vsel %vm982, %v3306, %v3308
    %v3310 = vrot.slane %v2774, 1
    %v3311 = vsel %vm982, %v3308, %v3310
    %v3312 = vrot.slane %v2996, 1
    %v3313 = vsel %vm982, %v3310, %v3312
    %v3314 = vrot.slane %v3301, 1
    %v3315 = vsel %vm982, %v3312, %v3314
    %3316 = vrot.lane.b32.xlu0 %v3307, 64
    %v3317 = vpop.permute.xlu0 %3316
    %3318 = vrot.lane.b32.xlu0 %v3309, 64
    %v3319 = vpop.permute.xlu0 %3318
    %3320 = vrot.lane.b32.xlu0 %v3311, 64
    %v3321 = vpop.permute.xlu0 %3320
    %3322 = vrot.lane.b32.xlu0 %v3313, 64
    %v3323 = vpop.permute.xlu0 %3322
    %3324 = vrot.lane.b32.xlu0 %v3315, 64
    %v3325 = vpop.permute.xlu0 %3324
    %v3326 = vsel %vm360, %v3159, %v3317
    %v3327 = vsel %vm360, %v3165, %v3319
    %v3328 = vsel %vm360, %v3171, %v3321
    %v3329 = vsel %vm360, %v3177, %v3323
    %v3330 = vsel %vm360, %v3183, %v3325
    %v3336 = vsel %vm968, %v3326, 0.0
    %v3337 = vsel %vm969, %v3327, 0.0
    %v3338 = vsel %vm970, %v3328, 0.0
    %v3339 = vsel %vm971, %v3329, 0.0
    %v3340 = vsel %vm972, %v3330, 0.0
    %s3341 = scalar_lea.vmem %s12, 16
    %v3342 = vld [vmem:[%s3341] ss:$8 sm:$0x3]
    %v3344 = vlaneseq
    %v3345 = vshrl.u32 %v3344, 7
    %v3346 = vsub.s32 0, %v3345
    %v3347 = vrot.slane %v3342, %v3346
    %v3348 = vlaneseq
    %v3349 = vshrl.u32 %v3348, 7
    %v3350 = vsub.s32 1, %v3349
    %v3351 = vrot.slane %v3342, %v3350
    %v3354 = vmul.f32 %v3205, %v3347
    %v3355 = vmul.f32 %v3336, %v3351
    %v3356 = vmul.f32 %v3207, %v3347
    %v3357 = vmul.f32 %v3337, %v3351
    %v3358 = vmul.f32 %v3209, %v3347
    %v3359 = vmul.f32 %v3338, %v3351
    %v3360 = vmul.f32 %v3211, %v3347
    %v3361 = vmul.f32 %v3339, %v3351
    %v3362 = vmul.f32 %v3213, %v3347
    %v3363 = vmul.f32 %v3340, %v3351
    %v3364 = vadd.f32 %v3290, %v3354
    %v3365 = vadd.f32 %v3291, %v3355
    %v3366 = vadd.f32 %v3292, %v3356
    %v3367 = vadd.f32 %v3293, %v3357
    %v3368 = vadd.f32 %v3294, %v3358
    %v3369 = vadd.f32 %v3295, %v3359
    %v3370 = vadd.f32 %v3296, %v3360
    %v3371 = vadd.f32 %v3297, %v3361
    %v3372 = vadd.f32 %v3298, %v3362
    %v3373 = vadd.f32 %v3299, %v3363
    %v3374 = vld [vmem:[%s13] sm:$0x3]
    %v3376 = vlaneseq
    %v3377 = vshrl.u32 %v3376, 7
    %v3378 = vsub.s32 0, %v3377
    %v3379 = vrot.slane %v3374, %v3378
    %v3380 = vlaneseq
    %v3381 = vshrl.u32 %v3380, 7
    %v3382 = vsub.s32 1, %v3381
    %v3383 = vrot.slane %v3374, %v3382
    %v3386 = vadd.f32 %v3364, %v3379
    %v3387 = vadd.f32 %v3365, %v3383
    %v3388 = vadd.f32 %v3366, %v3379
    %v3389 = vadd.f32 %v3367, %v3383
    %v3390 = vadd.f32 %v3368, %v3379
    %v3391 = vadd.f32 %v3369, %v3383
    %v3392 = vadd.f32 %v3370, %v3379
    %v3393 = vadd.f32 %v3371, %v3383
    %v3394 = vadd.f32 %v3372, %v3379
    %v3395 = vadd.f32 %v3373, %v3383
    %v3396 = vmax.f32 %v3386, 0.0
    %v3397 = vmax.f32 %v3387, 0.0
    %v3398 = vmax.f32 %v3388, 0.0
    %v3399 = vmax.f32 %v3389, 0.0
    %v3400 = vmax.f32 %v3390, 0.0
    %v3401 = vmax.f32 %v3391, 0.0
    %v3402 = vmax.f32 %v3392, 0.0
    %v3403 = vmax.f32 %v3393, 0.0
    %v3404 = vmax.f32 %v3394, 0.0
    %v3405 = vmax.f32 %v3395, 0.0
    %v3406 = vld [vmem:[%s14] sm:$0xff]
    %v3407 = vld [vmem:[%s14 + $0x8] sm:$0xff]
    %v3408 = vld [vmem:[%s14 + $0x10] sm:$0xff]
    %v3409 = vld [vmem:[%s14 + $0x18] sm:$0xff]
    %v3410 = vld [vmem:[%s14 + $0x20] sm:$0xff]
    %v3411 = vld [vmem:[%s14 + $0x28] sm:$0xff]
    %v3412 = vld [vmem:[%s14 + $0x30] sm:$0xff]
    %v3413 = vld [vmem:[%s14 + $0x38] sm:$0xff]
    %v3414 = vld [vmem:[%s14 + $0x40] sm:$0xff]
    %v3415 = vld [vmem:[%s14 + $0x48] sm:$0xff]
    %v3416 = vld [vmem:[%s14 + $0x50] sm:$0xff]
    %v3417 = vld [vmem:[%s14 + $0x58] sm:$0xff]
    %v3418 = vld [vmem:[%s14 + $0x60] sm:$0xff]
    %v3419 = vld [vmem:[%s14 + $0x68] sm:$0xff]
    %v3420 = vld [vmem:[%s14 + $0x70] sm:$0xff]
    %v3421 = vld [vmem:[%s14 + $0x78] sm:$0xff]
    %v3422 = vld [vmem:[%s14 + $0x80] sm:$0xff]
    %v3423 = vld [vmem:[%s14 + $0x88] sm:$0xff]
    %v3424 = vld [vmem:[%s14 + $0x90] sm:$0xff]
    %v3425 = vld [vmem:[%s14 + $0x98] sm:$0xff]
    %v3426 = vld [vmem:[%s14 + $0xa0] sm:$0xff]
    %v3427 = vld [vmem:[%s14 + $0xa8] sm:$0xff]
    %v3428 = vld [vmem:[%s14 + $0xb0] sm:$0xff]
    %v3429 = vld [vmem:[%s14 + $0xb8] sm:$0xff]
    %v3430 = vld [vmem:[%s14 + $0xc0] sm:$0xff]
    %v3431 = vld [vmem:[%s14 + $0xc8] sm:$0xff]
    %v3432 = vld [vmem:[%s14 + $0xd0] sm:$0xff]
    %v3433 = vld [vmem:[%s14 + $0xd8] sm:$0xff]
    %v3434 = vld [vmem:[%s14 + $0xe0] sm:$0xff]
    %v3435 = vld [vmem:[%s14 + $0xe8] sm:$0xff]
    %v3436 = vld [vmem:[%s14 + $0xf0] sm:$0xff]
    %v3437 = vld [vmem:[%s14 + $0xf8] sm:$0xff]
    %v3438 = vld [vmem:[%s14 + $0x100] sm:$0xff]
    %v3439 = vld [vmem:[%s14 + $0x108] sm:$0xff]
    %v3440 = vld [vmem:[%s14 + $0x110] sm:$0xff]
    %v3441 = vld [vmem:[%s14 + $0x118] sm:$0xff]
    %v3442 = vld [vmem:[%s14 + $0x120] sm:$0xff]
    %v3443 = vld [vmem:[%s14 + $0x128] sm:$0xff]
    %v3444 = vld [vmem:[%s14 + $0x130] sm:$0xff]
    %v3445 = vld [vmem:[%s14 + $0x138] sm:$0xff]
    %v3446 = vld [vmem:[%s14 + $0x140] sm:$0xff]
    %v3447 = vld [vmem:[%s14 + $0x148] sm:$0xff]
    %v3448 = vld [vmem:[%s14 + $0x150] sm:$0xff]
    %v3449 = vld [vmem:[%s14 + $0x158] sm:$0xff]
    %v3450 = vld [vmem:[%s14 + $0x160] sm:$0xff]
    %v3451 = vld [vmem:[%s14 + $0x168] sm:$0xff]
    %v3452 = vld [vmem:[%s14 + $0x170] sm:$0xff]
    %v3453 = vld [vmem:[%s14 + $0x178] sm:$0xff]
    %v3454 = vld [vmem:[%s14 + $0x180] sm:$0xff]
    %v3455 = vld [vmem:[%s14 + $0x188] sm:$0xff]
    %v3456 = vld [vmem:[%s14 + $0x190] sm:$0xff]
    %v3457 = vld [vmem:[%s14 + $0x198] sm:$0xff]
    %v3458 = vld [vmem:[%s14 + $0x1a0] sm:$0xff]
    %v3459 = vld [vmem:[%s14 + $0x1a8] sm:$0xff]
    %v3460 = vld [vmem:[%s14 + $0x1b0] sm:$0xff]
    %v3461 = vld [vmem:[%s14 + $0x1b8] sm:$0xff]
    %v3462 = vld [vmem:[%s14 + $0x1c0] sm:$0xff]
    %v3463 = vld [vmem:[%s14 + $0x1c8] sm:$0xff]
    %v3464 = vld [vmem:[%s14 + $0x1d0] sm:$0xff]
    %v3465 = vld [vmem:[%s14 + $0x1d8] sm:$0xff]
    %v3466 = vld [vmem:[%s14 + $0x1e0] sm:$0xff]
    %v3467 = vld [vmem:[%s14 + $0x1e8] sm:$0xff]
    %v3468 = vld [vmem:[%s14 + $0x1f0] sm:$0xff]
    %v3469 = vld [vmem:[%s14 + $0x1f8] sm:$0xff]
    %v3470 = vld [vmem:[%s15] sm:$0x3]
    %v3472 = vlaneseq
    %v3473 = vshrl.u32 %v3472, 7
    %v3474 = vsub.s32 0, %v3473
    %v3475 = vrot.slane %v3470, %v3474
    %v3476 = vlaneseq
    %v3477 = vshrl.u32 %v3476, 7
    %v3478 = vsub.s32 1, %v3477
    %v3479 = vrot.slane %v3470, %v3478
    %3482 = vmatprep.subr.mxu0 %v3437
    %3483 = vmatpush1.msra.mxu0 %v3436
    %3484 = vmatprep.subr.mxu0 %v3435
    %3485 = vmatpush1.msra.mxu0 %v3434
    %3486 = vmatprep.subr.mxu0 %v3433
    %3487 = vmatpush1.msra.mxu0 %v3432
    %3488 = vmatprep.subr.mxu0 %v3431
    %3489 = vmatpush1.msra.mxu0 %v3430
    %3490 = vmatprep.subr.mxu0 %v3429
    %3491 = vmatpush1.msra.mxu0 %v3428
    %3492 = vmatprep.subr.mxu0 %v3427
    %3493 = vmatpush1.msra.mxu0 %v3426
    %3494 = vmatprep.subr.mxu0 %v3425
    %3495 = vmatpush1.msra.mxu0 %v3424
    %3496 = vmatprep.subr.mxu0 %v3423
    %3497 = vmatpush1.msra.mxu0 %v3422
    %3498 = vmatprep.subr.mxu0 %v3421
    %3499 = vmatpush1.msra.mxu0 %v3420
    %3500 = vmatprep.subr.mxu0 %v3419
    %3501 = vmatpush1.msra.mxu0 %v3418
    %3502 = vmatprep.subr.mxu0 %v3417
    %3503 = vmatpush1.msra.mxu0 %v3416
    %3504 = vmatprep.subr.mxu0 %v3415
    %3505 = vmatpush1.msra.mxu0 %v3414
    %3506 = vmatprep.subr.mxu0 %v3413
    %3507 = vmatpush1.msra.mxu0 %v3412
    %3508 = vmatprep.subr.mxu0 %v3411
    %3509 = vmatpush1.msra.mxu0 %v3410
    %3510 = vmatprep.subr.mxu0 %v3409
    %3511 = vmatpush1.msra.mxu0 %v3408
    %3512 = vmatprep.subr.mxu0 %v3407
    %3513 = vmatpush1.msra.mxu0 %v3406
    %3514 = vmatprep.subr.mxu0 %v3469
    %3515 = vmatpush2.msra.mxu0 %v3468
    %3516 = vmatprep.subr.mxu0 %v3467
    %3517 = vmatpush2.msra.mxu0 %v3466
    %3518 = vmatprep.subr.mxu0 %v3465
    %3519 = vmatpush2.msra.mxu0 %v3464
    %3520 = vmatprep.subr.mxu0 %v3463
    %3521 = vmatpush2.msra.mxu0 %v3462
    %3522 = vmatprep.subr.mxu0 %v3461
    %3523 = vmatpush2.msra.mxu0 %v3460
    %3524 = vmatprep.subr.mxu0 %v3459
    %3525 = vmatpush2.msra.mxu0 %v3458
    %3526 = vmatprep.subr.mxu0 %v3457
    %3527 = vmatpush2.msra.mxu0 %v3456
    %3528 = vmatprep.subr.mxu0 %v3455
    %3529 = vmatpush2.msra.mxu0 %v3454
    %3530 = vmatprep.subr.mxu0 %v3453
    %3531 = vmatpush2.msra.mxu0 %v3452
    %3532 = vmatprep.subr.mxu0 %v3451
    %3533 = vmatpush2.msra.mxu0 %v3450
    %3534 = vmatprep.subr.mxu0 %v3449
    %3535 = vmatpush2.msra.mxu0 %v3448
    %3536 = vmatprep.subr.mxu0 %v3447
    %3537 = vmatpush2.msra.mxu0 %v3446
    %3538 = vmatprep.subr.mxu0 %v3445
    %3539 = vmatpush2.msra.mxu0 %v3444
    %3540 = vmatprep.subr.mxu0 %v3443
    %3541 = vmatpush2.msra.mxu0 %v3442
    %3542 = vmatprep.subr.mxu0 %v3441
    %3543 = vmatpush2.msra.mxu0 %v3440
    %3544 = vmatprep.subr.mxu0 %v3439
    %3545 = vmatpush2.msra.mxu0 %v3438
    %3546 = vmatprep.mubr.f32.mxu0 %v3397
    %3547 = vmatmul.mubr.f32.gmra.mxu0 %v3396
    %v3548 = vpop.f32.mrf.mxu0
    %v3549 = vadd.f32 %v3475, %v3548
    %v3550 = vpop.f32.mrf.mxu0
    %v3551 = vadd.f32 %v3479, %v3550
    %3552 = vmatprep.mubr.f32.mxu0 %v3399
    %3553 = vmatmul.mubr.f32.gmra.mxu0 %v3398
    %v3554 = vpop.f32.mrf.mxu0
    %v3555 = vadd.f32 %v3475, %v3554
    %v3556 = vpop.f32.mrf.mxu0
    %v3557 = vadd.f32 %v3479, %v3556
    %3558 = vmatprep.mubr.f32.mxu0 %v3401
    %3559 = vmatmul.mubr.f32.gmra.mxu0 %v3400
    %v3560 = vpop.f32.mrf.mxu0
    %v3561 = vadd.f32 %v3475, %v3560
    %v3562 = vpop.f32.mrf.mxu0
    %v3563 = vadd.f32 %v3479, %v3562
    %3564 = vmatprep.mubr.f32.mxu0 %v3403
    %3565 = vmatmul.mubr.f32.gmra.mxu0 %v3402
    %v3566 = vpop.f32.mrf.mxu0
    %v3567 = vadd.f32 %v3475, %v3566
    %v3568 = vpop.f32.mrf.mxu0
    %v3569 = vadd.f32 %v3479, %v3568
    %3570 = vmatprep.mubr.f32.mxu0 %v3405
    %3571 = vmatmul.mubr.f32.gmra.mxu0 %v3404
    %v3572 = vpop.f32.mrf.mxu0
    %v3573 = vadd.f32 %v3475, %v3572
    %v3574 = vpop.f32.mrf.mxu0
    %v3575 = vadd.f32 %v3479, %v3574
    %3576 = vdwg.mxu0
    %v3577 = vmax.f32 %v3549, 0.0
    %v3578 = vmax.f32 %v3551, 0.0
    %v3579 = vmax.f32 %v3555, 0.0
    %v3580 = vmax.f32 %v3557, 0.0
    %v3581 = vmax.f32 %v3561, 0.0
    %v3582 = vmax.f32 %v3563, 0.0
    %v3583 = vmax.f32 %v3567, 0.0
    %v3584 = vmax.f32 %v3569, 0.0
    %v3585 = vmax.f32 %v3573, 0.0
    %v3586 = vmax.f32 %v3575, 0.0
    %3587 = vst [vmem:[#allocation2] sm:$0xff] 0.0
    %3588 = vst [vmem:[#allocation2 + $0x8] sm:$0xff] 0.0
    %3589 = vst [vmem:[#allocation2 + $0x10] sm:$0xff] 0.0
    %3590 = vst.msk [vmem:[#allocation2 + $0x18] sm:$0xff] %vm360, 0.0
    %3591 = vst [vmem:[#allocation2 + $0x20] sm:$0xff] 0.0
    %3592 = vst [vmem:[#allocation2 + $0x28] sm:$0xff] 0.0
    %3593 = vst [vmem:[#allocation2 + $0x30] sm:$0xff] 0.0
    %3594 = vst.msk [vmem:[#allocation2 + $0x38] sm:$0xff] %vm360, 0.0
    %3595 = vst [vmem:[#allocation2 + $0x40] sm:$0xff] 0.0
    %3596 = vst [vmem:[#allocation2 + $0x48] sm:$0xff] 0.0
    %3597 = vst [vmem:[#allocation2 + $0x50] sm:$0xff] 0.0
    %3598 = vst.msk [vmem:[#allocation2 + $0x58] sm:$0xff] %vm360, 0.0
    %3599 = vst [vmem:[#allocation2 + $0x60] sm:$0xff] 0.0
    %3600 = vst [vmem:[#allocation2 + $0x68] sm:$0xff] 0.0
    %3601 = vst [vmem:[#allocation2 + $0x70] sm:$0xff] 0.0
    %3602 = vst.msk [vmem:[#allocation2 + $0x78] sm:$0xff] %vm360, 0.0
    %3603 = vst [vmem:[#allocation2 + $0x80] sm:$0xff] 0.0
    %3604 = vst [vmem:[#allocation2 + $0x88] sm:$0xff] 0.0
    %3605 = vst [vmem:[#allocation2 + $0x90] sm:$0xff] 0.0
    %3606 = vst.msk [vmem:[#allocation2 + $0x98] sm:$0xff] %vm360, 0.0
    %3607 = vst [vmem:[#allocation2 + $0xa0] sm:$0xff] 0.0
    %3608 = vst [vmem:[#allocation2 + $0xa8] sm:$0xff] 0.0
    %3609 = vst [vmem:[#allocation2 + $0xb0] sm:$0xff] 0.0
    %3610 = vst.msk [vmem:[#allocation2 + $0xb8] sm:$0xff] %vm360, 0.0
    %3611 = vst [vmem:[#allocation2 + $0xc0] sm:$0xff] 0.0
    %3612 = vst [vmem:[#allocation2 + $0xc8] sm:$0xff] 0.0
    %3613 = vst [vmem:[#allocation2 + $0xd0] sm:$0xff] 0.0
    %3614 = vst.msk [vmem:[#allocation2 + $0xd8] sm:$0xff] %vm360, 0.0
    %3615 = vst [vmem:[#allocation2 + $0x28] sm:$0xff] %v3577
    %3616 = vst [vmem:[#allocation2 + $0x30] sm:$0xff] %v3578
    %3617 = vst [vmem:[#allocation2 + $0x48] sm:$0xff] %v3579
    %3618 = vst [vmem:[#allocation2 + $0x50] sm:$0xff] %v3580
    %3619 = vst [vmem:[#allocation2 + $0x68] sm:$0xff] %v3581
    %3620 = vst [vmem:[#allocation2 + $0x70] sm:$0xff] %v3582
    %3621 = vst [vmem:[#allocation2 + $0x88] sm:$0xff] %v3583
    %3622 = vst [vmem:[#allocation2 + $0x90] sm:$0xff] %v3584
    %3623 = vst [vmem:[#allocation2 + $0xa8] sm:$0xff] %v3585
    %3624 = vst [vmem:[#allocation2 + $0xb0] sm:$0xff] %v3586
    %v3625 = vld [vmem:[#allocation2] sm:$0x80]
    %v3626 = vld [vmem:[#allocation2 + $0x8] sm:$0x80]
    %v3627 = vld [vmem:[#allocation2 + $0x10] sm:$0x80]
    %v3628 = vld [vmem:[#allocation2 + $0x20] sm:$0xff]
    %v3629 = vld [vmem:[#allocation2 + $0x28] sm:$0xff]
    %v3630 = vld [vmem:[#allocation2 + $0x30] sm:$0xff]
    %v3631 = vld [vmem:[#allocation2 + $0x40] sm:$0xff]
    %v3632 = vld [vmem:[#allocation2 + $0x48] sm:$0xff]
    %v3633 = vld [vmem:[#allocation2 + $0x50] sm:$0xff]
    %v3634 = vld [vmem:[#allocation2 + $0x60] sm:$0xff]
    %v3635 = vld [vmem:[#allocation2 + $0x68] sm:$0xff]
    %v3636 = vld [vmem:[#allocation2 + $0x70] sm:$0xff]
    %v3637 = vld [vmem:[#allocation2 + $0x80] sm:$0xff]
    %v3638 = vld [vmem:[#allocation2 + $0x88] sm:$0xff]
    %v3639 = vld [vmem:[#allocation2 + $0x90] sm:$0xff]
    %v3640 = vld [vmem:[#allocation2 + $0xa0] sm:$0x7f]
    %v3641 = vld [vmem:[#allocation2 + $0xa8] sm:$0x7f]
    %v3642 = vld [vmem:[#allocation2 + $0xb0] sm:$0x7f]
    %v3661 = vrot.slane %v3625, 7
    %v3662 = vrot.slane %v3628, 7
    %v3663 = vsel %vm442, %v3661, %v3662
    %v3664 = vrot.slane %v3626, 7
    %v3665 = vrot.slane %v3629, 7
    %v3666 = vsel %vm442, %v3664, %v3665
    %v3667 = vrot.slane %v3627, 7
    %v3668 = vrot.slane %v3630, 7
    %v3669 = vsel %vm442, %v3667, %v3668
    %v3670 = vrot.slane %v3631, 7
    %v3671 = vsel %vm442, %v3662, %v3670
    %v3672 = vrot.slane %v3632, 7
    %v3673 = vsel %vm442, %v3665, %v3672
    %v3674 = vrot.slane %v3633, 7
    %v3675 = vsel %vm442, %v3668, %v3674
    %v3676 = vrot.slane %v3634, 7
    %v3677 = vsel %vm442, %v3670, %v3676
    %v3678 = vrot.slane %v3635, 7
    %v3679 = vsel %vm442, %v3672, %v3678
    %v3680 = vrot.slane %v3636, 7
    %v3681 = vsel %vm442, %v3674, %v3680
    %v3682 = vrot.slane %v3637, 7
    %v3683 = vsel %vm442, %v3676, %v3682
    %v3684 = vrot.slane %v3638, 7
    %v3685 = vsel %vm442, %v3678, %v3684
    %v3686 = vrot.slane %v3639, 7
    %v3687 = vsel %vm442, %v3680, %v3686
    %v3688 = vrot.slane %v3640, 7
    %v3689 = vsel %vm442, %v3682, %v3688
    %v3690 = vrot.slane %v3641, 7
    %v3691 = vsel %vm442, %v3684, %v3690
    %v3692 = vrot.slane %v3642, 7
    %v3693 = vsel %vm442, %v3686, %v3692
    %3694 = vrot.lane.b32.xlu0 %v3663, 64
    %v3695 = vpop.permute.xlu0 %3694
    %3696 = vrot.lane.b32.xlu0 %v3666, 64
    %v3697 = vpop.permute.xlu0 %3696
    %3698 = vrot.lane.b32.xlu0 %v3669, 64
    %v3699 = vpop.permute.xlu0 %3698
    %3700 = vrot.lane.b32.xlu0 %v3671, 64
    %v3701 = vpop.permute.xlu0 %3700
    %3702 = vrot.lane.b32.xlu0 %v3673, 64
    %v3703 = vpop.permute.xlu0 %3702
    %3704 = vrot.lane.b32.xlu0 %v3675, 64
    %v3705 = vpop.permute.xlu0 %3704
    %3706 = vrot.lane.b32.xlu0 %v3677, 64
    %v3707 = vpop.permute.xlu0 %3706
    %3708 = vrot.lane.b32.xlu0 %v3679, 64
    %v3709 = vpop.permute.xlu0 %3708
    %3710 = vrot.lane.b32.xlu0 %v3681, 64
    %v3711 = vpop.permute.xlu0 %3710
    %3712 = vrot.lane.b32.xlu0 %v3683, 64
    %v3713 = vpop.permute.xlu0 %3712
    %3714 = vrot.lane.b32.xlu0 %v3685, 64
    %v3715 = vpop.permute.xlu0 %3714
    %3716 = vrot.lane.b32.xlu0 %v3687, 64
    %v3717 = vpop.permute.xlu0 %3716
    %3718 = vrot.lane.b32.xlu0 %v3689, 64
    %v3719 = vpop.permute.xlu0 %3718
    %3720 = vrot.lane.b32.xlu0 %v3691, 64
    %v3721 = vpop.permute.xlu0 %3720
    %3722 = vrot.lane.b32.xlu0 %v3693, 64
    %v3723 = vpop.permute.xlu0 %3722
    %v3724 = vsel %vm360, %v3695, %v3697
    %v3725 = vsel %vm360, %v3697, %v3699
    %v3726 = vsel %vm360, %v3701, %v3703
    %v3727 = vsel %vm360, %v3703, %v3705
    %v3728 = vsel %vm360, %v3707, %v3709
    %v3729 = vsel %vm360, %v3709, %v3711
    %v3730 = vsel %vm360, %v3713, %v3715
    %v3731 = vsel %vm360, %v3715, %v3717
    %v3732 = vsel %vm360, %v3719, %v3721
    %v3733 = vsel %vm360, %v3721, %v3723
    %v3744 = vsel %vm419, %v3724, 0.0
    %v3745 = vsel %vm419, %v3725, 0.0
    %v3746 = vsel %vm420, %v3726, 0.0
    %v3747 = vsel %vm420, %v3727, 0.0
    %v3748 = vsel %vm421, %v3728, 0.0
    %v3749 = vsel %vm421, %v3729, 0.0
    %v3750 = vsel %vm422, %v3730, 0.0
    %v3751 = vsel %vm422, %v3731, 0.0
    %v3752 = vsel %vm423, %v3732, 0.0
    %v3753 = vsel %vm423, %v3733, 0.0
    %v3754 = vld [vmem:[%s16] ss:$8 sm:$0x3]
    %v3756 = vlaneseq
    %v3757 = vshrl.u32 %v3756, 7
    %v3758 = vsub.s32 0, %v3757
    %v3759 = vrot.slane %v3754, %v3758
    %v3760 = vlaneseq
    %v3761 = vshrl.u32 %v3760, 7
    %v3762 = vsub.s32 1, %v3761
    %v3763 = vrot.slane %v3754, %v3762
    %v3766 = vmul.f32 %v3744, %v3759
    %v3767 = vmul.f32 %v3745, %v3763
    %v3768 = vmul.f32 %v3746, %v3759
    %v3769 = vmul.f32 %v3747, %v3763
    %v3770 = vmul.f32 %v3748, %v3759
    %v3771 = vmul.f32 %v3749, %v3763
    %v3772 = vmul.f32 %v3750, %v3759
    %v3773 = vmul.f32 %v3751, %v3763
    %v3774 = vmul.f32 %v3752, %v3759
    %v3775 = vmul.f32 %v3753, %v3763
    %v3776 = vadd.f32 %v3766, 0.0
    %v3777 = vadd.f32 %v3767, 0.0
    %v3778 = vadd.f32 %v3768, 0.0
    %v3779 = vadd.f32 %v3769, 0.0
    %v3780 = vadd.f32 %v3770, 0.0
    %v3781 = vadd.f32 %v3771, 0.0
    %v3782 = vadd.f32 %v3772, 0.0
    %v3783 = vadd.f32 %v3773, 0.0
    %v3784 = vadd.f32 %v3774, 0.0
    %v3785 = vadd.f32 %v3775, 0.0
    %v3796 = vsel %vm419, %v3666, 0.0
    %v3797 = vsel %vm419, %v3669, 0.0
    %v3798 = vsel %vm420, %v3673, 0.0
    %v3799 = vsel %vm420, %v3675, 0.0
    %v3800 = vsel %vm421, %v3679, 0.0
    %v3801 = vsel %vm421, %v3681, 0.0
    %v3802 = vsel %vm422, %v3685, 0.0
    %v3803 = vsel %vm422, %v3687, 0.0
    %v3804 = vsel %vm423, %v3691, 0.0
    %v3805 = vsel %vm423, %v3693, 0.0
    %s3806 = scalar_lea.vmem %s16, 1
    %v3807 = vld [vmem:[%s3806] ss:$8 sm:$0x3]
    %v3809 = vlaneseq
    %v3810 = vshrl.u32 %v3809, 7
    %v3811 = vsub.s32 0, %v3810
    %v3812 = vrot.slane %v3807, %v3811
    %v3813 = vlaneseq
    %v3814 = vshrl.u32 %v3813, 7
    %v3815 = vsub.s32 1, %v3814
    %v3816 = vrot.slane %v3807, %v3815
    %v3819 = vmul.f32 %v3796, %v3812
    %v3820 = vmul.f32 %v3797, %v3816
    %v3821 = vmul.f32 %v3798, %v3812
    %v3822 = vmul.f32 %v3799, %v3816
    %v3823 = vmul.f32 %v3800, %v3812
    %v3824 = vmul.f32 %v3801, %v3816
    %v3825 = vmul.f32 %v3802, %v3812
    %v3826 = vmul.f32 %v3803, %v3816
    %v3827 = vmul.f32 %v3804, %v3812
    %v3828 = vmul.f32 %v3805, %v3816
    %v3829 = vadd.f32 %v3776, %v3819
    %v3830 = vadd.f32 %v3777, %v3820
    %v3831 = vadd.f32 %v3778, %v3821
    %v3832 = vadd.f32 %v3779, %v3822
    %v3833 = vadd.f32 %v3780, %v3823
    %v3834 = vadd.f32 %v3781, %v3824
    %v3835 = vadd.f32 %v3782, %v3825
    %v3836 = vadd.f32 %v3783, %v3826
    %v3837 = vadd.f32 %v3784, %v3827
    %v3838 = vadd.f32 %v3785, %v3828
    %v3839 = vld [vmem:[#allocation2 + $0x18] sm:$0x80]
    %v3840 = vld [vmem:[#allocation2 + $0x38] sm:$0xff]
    %v3841 = vld [vmem:[#allocation2 + $0x58] sm:$0xff]
    %v3842 = vld [vmem:[#allocation2 + $0x78] sm:$0xff]
    %v3843 = vld [vmem:[#allocation2 + $0x98] sm:$0xff]
    %v3844 = vld [vmem:[#allocation2 + $0xb8] sm:$0x7f]
    %v3851 = vrot.slane %v3839, 7
    %v3852 = vrot.slane %v3840, 7
    %v3853 = vsel %vm442, %v3851, %v3852
    %v3854 = vrot.slane %v3841, 7
    %v3855 = vsel %vm442, %v3852, %v3854
    %v3856 = vrot.slane %v3842, 7
    %v3857 = vsel %vm442, %v3854, %v3856
    %v3858 = vrot.slane %v3843, 7
    %v3859 = vsel %vm442, %v3856, %v3858
    %v3860 = vrot.slane %v3844, 7
    %v3861 = vsel %vm442, %v3858, %v3860
    %3862 = vrot.lane.b32.xlu0 %v3853, 64
    %v3863 = vpop.permute.xlu0 %3862
    %3864 = vrot.lane.b32.xlu0 %v3855, 64
    %v3865 = vpop.permute.xlu0 %3864
    %3866 = vrot.lane.b32.xlu0 %v3857, 64
    %v3867 = vpop.permute.xlu0 %3866
    %3868 = vrot.lane.b32.xlu0 %v3859, 64
    %v3869 = vpop.permute.xlu0 %3868
    %3870 = vrot.lane.b32.xlu0 %v3861, 64
    %v3871 = vpop.permute.xlu0 %3870
    %v3872 = vsel %vm360, %v3699, %v3863
    %v3873 = vsel %vm360, %v3705, %v3865
    %v3874 = vsel %vm360, %v3711, %v3867
    %v3875 = vsel %vm360, %v3717, %v3869
    %v3876 = vsel %vm360, %v3723, %v3871
    %v3882 = vsel %vm419, %v3872, 0.0
    %v3883 = vsel %vm420, %v3873, 0.0
    %v3884 = vsel %vm421, %v3874, 0.0
    %v3885 = vsel %vm422, %v3875, 0.0
    %v3886 = vsel %vm423, %v3876, 0.0
    %s3887 = scalar_lea.vmem %s16, 2
    %v3888 = vld [vmem:[%s3887] ss:$8 sm:$0x3]
    %v3890 = vlaneseq
    %v3891 = vshrl.u32 %v3890, 7
    %v3892 = vsub.s32 0, %v3891
    %v3893 = vrot.slane %v3888, %v3892
    %v3894 = vlaneseq
    %v3895 = vshrl.u32 %v3894, 7
    %v3896 = vsub.s32 1, %v3895
    %v3897 = vrot.slane %v3888, %v3896
    %v3900 = vmul.f32 %v3745, %v3893
    %v3901 = vmul.f32 %v3882, %v3897
    %v3902 = vmul.f32 %v3747, %v3893
    %v3903 = vmul.f32 %v3883, %v3897
    %v3904 = vmul.f32 %v3749, %v3893
    %v3905 = vmul.f32 %v3884, %v3897
    %v3906 = vmul.f32 %v3751, %v3893
    %v3907 = vmul.f32 %v3885, %v3897
    %v3908 = vmul.f32 %v3753, %v3893
    %v3909 = vmul.f32 %v3886, %v3897
    %v3910 = vadd.f32 %v3829, %v3900
    %v3911 = vadd.f32 %v3830, %v3901
    %v3912 = vadd.f32 %v3831, %v3902
    %v3913 = vadd.f32 %v3832, %v3903
    %v3914 = vadd.f32 %v3833, %v3904
    %v3915 = vadd.f32 %v3834, %v3905
    %v3916 = vadd.f32 %v3835, %v3906
    %v3917 = vadd.f32 %v3836, %v3907
    %v3918 = vadd.f32 %v3837, %v3908
    %v3919 = vadd.f32 %v3838, %v3909
    %v3920 = vld [vmem:[#allocation2 + $0xa0] sm:$0xff]
    %v3921 = vld [vmem:[#allocation2 + $0xa8] sm:$0xff]
    %v3922 = vld [vmem:[#allocation2 + $0xb0] sm:$0xff]
    %s3923 = scalar_lea.vmem %s16, 3
    %v3924 = vld [vmem:[%s3923] ss:$8 sm:$0x3]
    %v3926 = vlaneseq
    %v3927 = vshrl.u32 %v3926, 7
    %v3928 = vsub.s32 0, %v3927
    %v3929 = vrot.slane %v3924, %v3928
    %v3930 = vlaneseq
    %v3931 = vshrl.u32 %v3930, 7
    %v3932 = vsub.s32 1, %v3931
    %v3933 = vrot.slane %v3924, %v3932
    %3934 = vrot.lane.b32.xlu0 %v3929, 64
    %v3935 = vpop.permute.xlu0 %3934
    %3936 = vrot.lane.b32.xlu0 %v3933, 64
    %v3937 = vpop.permute.xlu0 %3936
    %v3938 = vsel %vm360, %v3935, %v3937
    %v3942 = vmul.f32 %v3628, %v3935
    %v3943 = vmul.f32 %v3629, %v3938
    %v3944 = vmul.f32 %v3630, %v3937
    %v3945 = vmul.f32 %v3631, %v3935
    %v3946 = vmul.f32 %v3632, %v3938
    %v3947 = vmul.f32 %v3633, %v3937
    %v3948 = vmul.f32 %v3634, %v3935
    %v3949 = vmul.f32 %v3635, %v3938
    %v3950 = vmul.f32 %v3636, %v3937
    %v3951 = vmul.f32 %v3637, %v3935
    %v3952 = vmul.f32 %v3638, %v3938
    %v3953 = vmul.f32 %v3639, %v3937
    %v3954 = vmul.f32 %v3920, %v3935
    %v3955 = vmul.f32 %v3921, %v3938
    %v3956 = vmul.f32 %v3922, %v3937
    %3972 = vrot.lane.b32.xlu0 %v3942, 64
    %v3973 = vpop.permute.xlu0 %3972
    %3974 = vrot.lane.b32.xlu0 %v3943, 64
    %v3975 = vpop.permute.xlu0 %3974
    %3976 = vrot.lane.b32.xlu0 %v3944, 64
    %v3977 = vpop.permute.xlu0 %3976
    %3978 = vrot.lane.b32.xlu0 %v3945, 64
    %v3979 = vpop.permute.xlu0 %3978
    %3980 = vrot.lane.b32.xlu0 %v3946, 64
    %v3981 = vpop.permute.xlu0 %3980
    %3982 = vrot.lane.b32.xlu0 %v3947, 64
    %v3983 = vpop.permute.xlu0 %3982
    %3984 = vrot.lane.b32.xlu0 %v3948, 64
    %v3985 = vpop.permute.xlu0 %3984
    %3986 = vrot.lane.b32.xlu0 %v3949, 64
    %v3987 = vpop.permute.xlu0 %3986
    %3988 = vrot.lane.b32.xlu0 %v3950, 64
    %v3989 = vpop.permute.xlu0 %3988
    %3990 = vrot.lane.b32.xlu0 %v3951, 64
    %v3991 = vpop.permute.xlu0 %3990
    %3992 = vrot.lane.b32.xlu0 %v3952, 64
    %v3993 = vpop.permute.xlu0 %3992
    %3994 = vrot.lane.b32.xlu0 %v3953, 64
    %v3995 = vpop.permute.xlu0 %3994
    %3996 = vrot.lane.b32.xlu0 %v3954, 64
    %v3997 = vpop.permute.xlu0 %3996
    %3998 = vrot.lane.b32.xlu0 %v3955, 64
    %v3999 = vpop.permute.xlu0 %3998
    %4000 = vrot.lane.b32.xlu0 %v3956, 64
    %v4001 = vpop.permute.xlu0 %4000
    %v4002 = vsel %vm360, %v3973, %v3975
    %v4003 = vsel %vm360, %v3975, %v3977
    %v4004 = vsel %vm360, %v3979, %v3981
    %v4005 = vsel %vm360, %v3981, %v3983
    %v4006 = vsel %vm360, %v3985, %v3987
    %v4007 = vsel %vm360, %v3987, %v3989
    %v4008 = vsel %vm360, %v3991, %v3993
    %v4009 = vsel %vm360, %v3993, %v3995
    %v4010 = vsel %vm360, %v3997, %v3999
    %v4011 = vsel %vm360, %v3999, %v4001
    %v4022 = vadd.f32 %v3910, %v4002
    %v4023 = vadd.f32 %v3911, %v4003
    %v4024 = vadd.f32 %v3912, %v4004
    %v4025 = vadd.f32 %v3913, %v4005
    %v4026 = vadd.f32 %v3914, %v4006
    %v4027 = vadd.f32 %v3915, %v4007
    %v4028 = vadd.f32 %v3916, %v4008
    %v4029 = vadd.f32 %v3917, %v4009
    %v4030 = vadd.f32 %v3918, %v4010
    %v4031 = vadd.f32 %v3919, %v4011
    %s4032 = scalar_lea.vmem %s16, 4
    %v4033 = vld [vmem:[%s4032] ss:$8 sm:$0x3]
    %v4035 = vlaneseq
    %v4036 = vshrl.u32 %v4035, 7
    %v4037 = vsub.s32 0, %v4036
    %v4038 = vrot.slane %v4033, %v4037
    %v4039 = vlaneseq
    %v4040 = vshrl.u32 %v4039, 7
    %v4041 = vsub.s32 1, %v4040
    %v4042 = vrot.slane %v4033, %v4041
    %v4045 = vmul.f32 %v3629, %v4038
    %v4046 = vmul.f32 %v3630, %v4042
    %v4047 = vmul.f32 %v3632, %v4038
    %v4048 = vmul.f32 %v3633, %v4042
    %v4049 = vmul.f32 %v3635, %v4038
    %v4050 = vmul.f32 %v3636, %v4042
    %v4051 = vmul.f32 %v3638, %v4038
    %v4052 = vmul.f32 %v3639, %v4042
    %v4053 = vmul.f32 %v3921, %v4038
    %v4054 = vmul.f32 %v3922, %v4042
    %v4055 = vadd.f32 %v4022, %v4045
    %v4056 = vadd.f32 %v4023, %v4046
    %v4057 = vadd.f32 %v4024, %v4047
    %v4058 = vadd.f32 %v4025, %v4048
    %v4059 = vadd.f32 %v4026, %v4049
    %v4060 = vadd.f32 %v4027, %v4050
    %v4061 = vadd.f32 %v4028, %v4051
    %v4062 = vadd.f32 %v4029, %v4052
    %v4063 = vadd.f32 %v4030, %v4053
    %v4064 = vadd.f32 %v4031, %v4054
    %v4065 = vld [vmem:[#allocation2 + $0xb8] sm:$0xff]
    %s4066 = scalar_lea.vmem %s16, 5
    %v4067 = vld [vmem:[%s4066] ss:$8 sm:$0x3]
    %v4069 = vlaneseq
    %v4070 = vshrl.u32 %v4069, 7
    %v4071 = vsub.s32 0, %v4070
    %v4072 = vrot.slane %v4067, %v4071
    %v4073 = vlaneseq
    %v4074 = vshrl.u32 %v4073, 7
    %v4075 = vsub.s32 1, %v4074
    %v4076 = vrot.slane %v4067, %v4075
    %4077 = vrot.lane.b32.xlu0 %v4072, 64
    %v4078 = vpop.permute.xlu0 %4077
    %4079 = vrot.lane.b32.xlu0 %v4076, 64
    %v4080 = vpop.permute.xlu0 %4079
    %v4081 = vsel %vm360, %v4078, %v4080
    %v4085 = vmul.f32 %v3629, %v4078
    %v4086 = vmul.f32 %v3630, %v4081
    %v4087 = vmul.f32 %v3840, %v4080
    %v4088 = vmul.f32 %v3632, %v4078
    %v4089 = vmul.f32 %v3633, %v4081
    %v4090 = vmul.f32 %v3841, %v4080
    %v4091 = vmul.f32 %v3635, %v4078
    %v4092 = vmul.f32 %v3636, %v4081
    %v4093 = vmul.f32 %v3842, %v4080
    %v4094 = vmul.f32 %v3638, %v4078
    %v4095 = vmul.f32 %v3639, %v4081
    %v4096 = vmul.f32 %v3843, %v4080
    %v4097 = vmul.f32 %v3921, %v4078
    %v4098 = vmul.f32 %v3922, %v4081
    %v4099 = vmul.f32 %v4065, %v4080
    %4115 = vrot.lane.b32.xlu0 %v4085, 64
    %v4116 = vpop.permute.xlu0 %4115
    %4117 = vrot.lane.b32.xlu0 %v4086, 64
    %v4118 = vpop.permute.xlu0 %4117
    %4119 = vrot.lane.b32.xlu0 %v4087, 64
    %v4120 = vpop.permute.xlu0 %4119
    %4121 = vrot.lane.b32.xlu0 %v4088, 64
    %v4122 = vpop.permute.xlu0 %4121
    %4123 = vrot.lane.b32.xlu0 %v4089, 64
    %v4124 = vpop.permute.xlu0 %4123
    %4125 = vrot.lane.b32.xlu0 %v4090, 64
    %v4126 = vpop.permute.xlu0 %4125
    %4127 = vrot.lane.b32.xlu0 %v4091, 64
    %v4128 = vpop.permute.xlu0 %4127
    %4129 = vrot.lane.b32.xlu0 %v4092, 64
    %v4130 = vpop.permute.xlu0 %4129
    %4131 = vrot.lane.b32.xlu0 %v4093, 64
    %v4132 = vpop.permute.xlu0 %4131
    %4133 = vrot.lane.b32.xlu0 %v4094, 64
    %v4134 = vpop.permute.xlu0 %4133
    %4135 = vrot.lane.b32.xlu0 %v4095, 64
    %v4136 = vpop.permute.xlu0 %4135
    %4137 = vrot.lane.b32.xlu0 %v4096, 64
    %v4138 = vpop.permute.xlu0 %4137
    %4139 = vrot.lane.b32.xlu0 %v4097, 64
    %v4140 = vpop.permute.xlu0 %4139
    %4141 = vrot.lane.b32.xlu0 %v4098, 64
    %v4142 = vpop.permute.xlu0 %4141
    %4143 = vrot.lane.b32.xlu0 %v4099, 64
    %v4144 = vpop.permute.xlu0 %4143
    %v4145 = vsel %vm360, %v4116, %v4118
    %v4146 = vsel %vm360, %v4118, %v4120
    %v4147 = vsel %vm360, %v4122, %v4124
    %v4148 = vsel %vm360, %v4124, %v4126
    %v4149 = vsel %vm360, %v4128, %v4130
    %v4150 = vsel %vm360, %v4130, %v4132
    %v4151 = vsel %vm360, %v4134, %v4136
    %v4152 = vsel %vm360, %v4136, %v4138
    %v4153 = vsel %vm360, %v4140, %v4142
    %v4154 = vsel %vm360, %v4142, %v4144
    %v4165 = vadd.f32 %v4055, %v4145
    %v4166 = vadd.f32 %v4056, %v4146
    %v4167 = vadd.f32 %v4057, %v4147
    %v4168 = vadd.f32 %v4058, %v4148
    %v4169 = vadd.f32 %v4059, %v4149
    %v4170 = vadd.f32 %v4060, %v4150
    %v4171 = vadd.f32 %v4061, %v4151
    %v4172 = vadd.f32 %v4062, %v4152
    %v4173 = vadd.f32 %v4063, %v4153
    %v4174 = vadd.f32 %v4064, %v4154
    %v4175 = vld [vmem:[#allocation2 + $0x20] sm:$0xfe]
    %v4176 = vld [vmem:[#allocation2 + $0x28] sm:$0xfe]
    %v4177 = vld [vmem:[#allocation2 + $0x30] sm:$0xfe]
    %v4178 = vld [vmem:[#allocation2 + $0xc0] sm:$0x1]
    %v4179 = vld [vmem:[#allocation2 + $0xc8] sm:$0x1]
    %v4180 = vld [vmem:[#allocation2 + $0xd0] sm:$0x1]
    %v4190 = vrot.slane %v4175, 1
    %v4191 = vrot.slane %v3631, 1
    %v4192 = vsel %vm982, %v4190, %v4191
    %v4193 = vrot.slane %v4176, 1
    %v4194 = vrot.slane %v3632, 1
    %v4195 = vsel %vm982, %v4193, %v4194
    %v4196 = vrot.slane %v4177, 1
    %v4197 = vrot.slane %v3633, 1
    %v4198 = vsel %vm982, %v4196, %v4197
    %v4199 = vrot.slane %v3634, 1
    %v4200 = vsel %vm982, %v4191, %v4199
    %v4201 = vrot.slane %v3635, 1
    %v4202 = vsel %vm982, %v4194, %v4201
    %v4203 = vrot.slane %v3636, 1
    %v4204 = vsel %vm982, %v4197, %v4203
    %v4205 = vrot.slane %v3637, 1
    %v4206 = vsel %vm982, %v4199, %v4205
    %v4207 = vrot.slane %v3638, 1
    %v4208 = vsel %vm982, %v4201, %v4207
    %v4209 = vrot.slane %v3639, 1
    %v4210 = vsel %vm982, %v4203, %v4209
    %v4211 = vrot.slane %v3920, 1
    %v4212 = vsel %vm982, %v4205, %v4211
    %v4213 = vrot.slane %v3921, 1
    %v4214 = vsel %vm982, %v4207, %v4213
    %v4215 = vrot.slane %v3922, 1
    %v4216 = vsel %vm982, %v4209, %v4215
    %v4217 = vrot.slane %v4178, 1
    %v4218 = vsel %vm982, %v4211, %v4217
    %v4219 = vrot.slane %v4179, 1
    %v4220 = vsel %vm982, %v4213, %v4219
    %v4221 = vrot.slane %v4180, 1
    %v4222 = vsel %vm982, %v4215, %v4221
    %4223 = vrot.lane.b32.xlu0 %v4192, 64
    %v4224 = vpop.permute.xlu0 %4223
    %4225 = vrot.lane.b32.xlu0 %v4195, 64
    %v4226 = vpop.permute.xlu0 %4225
    %4227 = vrot.lane.b32.xlu0 %v4198, 64
    %v4228 = vpop.permute.xlu0 %4227
    %4229 = vrot.lane.b32.xlu0 %v4200, 64
    %v4230 = vpop.permute.xlu0 %4229
    %4231 = vrot.lane.b32.xlu0 %v4202, 64
    %v4232 = vpop.permute.xlu0 %4231
    %4233 = vrot.lane.b32.xlu0 %v4204, 64
    %v4234 = vpop.permute.xlu0 %4233
    %4235 = vrot.lane.b32.xlu0 %v4206, 64
    %v4236 = vpop.permute.xlu0 %4235
    %4237 = vrot.lane.b32.xlu0 %v4208, 64
    %v4238 = vpop.permute.xlu0 %4237
    %4239 = vrot.lane.b32.xlu0 %v4210, 64
    %v4240 = vpop.permute.xlu0 %4239
    %4241 = vrot.lane.b32.xlu0 %v4212, 64
    %v4242 = vpop.permute.xlu0 %4241
    %4243 = vrot.lane.b32.xlu0 %v4214, 64
    %v4244 = vpop.permute.xlu0 %4243
    %4245 = vrot.lane.b32.xlu0 %v4216, 64
    %v4246 = vpop.permute.xlu0 %4245
    %4247 = vrot.lane.b32.xlu0 %v4218, 64
    %v4248 = vpop.permute.xlu0 %4247
    %4249 = vrot.lane.b32.xlu0 %v4220, 64
    %v4250 = vpop.permute.xlu0 %4249
    %4251 = vrot.lane.b32.xlu0 %v4222, 64
    %v4252 = vpop.permute.xlu0 %4251
    %v4253 = vsel %vm360, %v4224, %v4226
    %v4254 = vsel %vm360, %v4226, %v4228
    %v4255 = vsel %vm360, %v4230, %v4232
    %v4256 = vsel %vm360, %v4232, %v4234
    %v4257 = vsel %vm360, %v4236, %v4238
    %v4258 = vsel %vm360, %v4238, %v4240
    %v4259 = vsel %vm360, %v4242, %v4244
    %v4260 = vsel %vm360, %v4244, %v4246
    %v4261 = vsel %vm360, %v4248, %v4250
    %v4262 = vsel %vm360, %v4250, %v4252
    %v4273 = vsel %vm968, %v4253, 0.0
    %v4274 = vsel %vm968, %v4254, 0.0
    %v4275 = vsel %vm969, %v4255, 0.0
    %v4276 = vsel %vm969, %v4256, 0.0
    %v4277 = vsel %vm970, %v4257, 0.0
    %v4278 = vsel %vm970, %v4258, 0.0
    %v4279 = vsel %vm971, %v4259, 0.0
    %v4280 = vsel %vm971, %v4260, 0.0
    %v4281 = vsel %vm972, %v4261, 0.0
    %v4282 = vsel %vm972, %v4262, 0.0
    %s4283 = scalar_lea.vmem %s16, 6
    %v4284 = vld [vmem:[%s4283] ss:$8 sm:$0x3]
    %v4286 = vlaneseq
    %v4287 = vshrl.u32 %v4286, 7
    %v4288 = vsub.s32 0, %v4287
    %v4289 = vrot.slane %v4284, %v4288
    %v4290 = vlaneseq
    %v4291 = vshrl.u32 %v4290, 7
    %v4292 = vsub.s32 1, %v4291
    %v4293 = vrot.slane %v4284, %v4292
    %v4296 = vmul.f32 %v4273, %v4289
    %v4297 = vmul.f32 %v4274, %v4293
    %v4298 = vmul.f32 %v4275, %v4289
    %v4299 = vmul.f32 %v4276, %v4293
    %v4300 = vmul.f32 %v4277, %v4289
    %v4301 = vmul.f32 %v4278, %v4293
    %v4302 = vmul.f32 %v4279, %v4289
    %v4303 = vmul.f32 %v4280, %v4293
    %v4304 = vmul.f32 %v4281, %v4289
    %v4305 = vmul.f32 %v4282, %v4293
    %v4306 = vadd.f32 %v4165, %v4296
    %v4307 = vadd.f32 %v4166, %v4297
    %v4308 = vadd.f32 %v4167, %v4298
    %v4309 = vadd.f32 %v4168, %v4299
    %v4310 = vadd.f32 %v4169, %v4300
    %v4311 = vadd.f32 %v4170, %v4301
    %v4312 = vadd.f32 %v4171, %v4302
    %v4313 = vadd.f32 %v4172, %v4303
    %v4314 = vadd.f32 %v4173, %v4304
    %v4315 = vadd.f32 %v4174, %v4305
    %v4326 = vsel %vm968, %v4195, 0.0
    %v4327 = vsel %vm968, %v4198, 0.0
    %v4328 = vsel %vm969, %v4202, 0.0
    %v4329 = vsel %vm969, %v4204, 0.0
    %v4330 = vsel %vm970, %v4208, 0.0
    %v4331 = vsel %vm970, %v4210, 0.0
    %v4332 = vsel %vm971, %v4214, 0.0
    %v4333 = vsel %vm971, %v4216, 0.0
    %v4334 = vsel %vm972, %v4220, 0.0
    %v4335 = vsel %vm972, %v4222, 0.0
    %s4336 = scalar_lea.vmem %s16, 7
    %v4337 = vld [vmem:[%s4336] ss:$8 sm:$0x3]
    %v4339 = vlaneseq
    %v4340 = vshrl.u32 %v4339, 7
    %v4341 = vsub.s32 0, %v4340
    %v4342 = vrot.slane %v4337, %v4341
    %v4343 = vlaneseq
    %v4344 = vshrl.u32 %v4343, 7
    %v4345 = vsub.s32 1, %v4344
    %v4346 = vrot.slane %v4337, %v4345
    %v4349 = vmul.f32 %v4326, %v4342
    %v4350 = vmul.f32 %v4327, %v4346
    %v4351 = vmul.f32 %v4328, %v4342
    %v4352 = vmul.f32 %v4329, %v4346
    %v4353 = vmul.f32 %v4330, %v4342
    %v4354 = vmul.f32 %v4331, %v4346
    %v4355 = vmul.f32 %v4332, %v4342
    %v4356 = vmul.f32 %v4333, %v4346
    %v4357 = vmul.f32 %v4334, %v4342
    %v4358 = vmul.f32 %v4335, %v4346
    %v4359 = vadd.f32 %v4306, %v4349
    %v4360 = vadd.f32 %v4307, %v4350
    %v4361 = vadd.f32 %v4308, %v4351
    %v4362 = vadd.f32 %v4309, %v4352
    %v4363 = vadd.f32 %v4310, %v4353
    %v4364 = vadd.f32 %v4311, %v4354
    %v4365 = vadd.f32 %v4312, %v4355
    %v4366 = vadd.f32 %v4313, %v4356
    %v4367 = vadd.f32 %v4314, %v4357
    %v4368 = vadd.f32 %v4315, %v4358
    %v4369 = vld [vmem:[#allocation2 + $0x38] sm:$0xfe]
    %v4370 = vld [vmem:[#allocation2 + $0xd8] sm:$0x1]
    %v4374 = vrot.slane %v4369, 1
    %v4375 = vrot.slane %v3841, 1
    %v4376 = vsel %vm982, %v4374, %v4375
    %v4377 = vrot.slane %v3842, 1
    %v4378 = vsel %vm982, %v4375, %v4377
    %v4379 = vrot.slane %v3843, 1
    %v4380 = vsel %vm982, %v4377, %v4379
    %v4381 = vrot.slane %v4065, 1
    %v4382 = vsel %vm982, %v4379, %v4381
    %v4383 = vrot.slane %v4370, 1
    %v4384 = vsel %vm982, %v4381, %v4383
    %4385 = vrot.lane.b32.xlu0 %v4376, 64
    %v4386 = vpop.permute.xlu0 %4385
    %4387 = vrot.lane.b32.xlu0 %v4378, 64
    %v4388 = vpop.permute.xlu0 %4387
    %4389 = vrot.lane.b32.xlu0 %v4380, 64
    %v4390 = vpop.permute.xlu0 %4389
    %4391 = vrot.lane.b32.xlu0 %v4382, 64
    %v4392 = vpop.permute.xlu0 %4391
    %4393 = vrot.lane.b32.xlu0 %v4384, 64
    %v4394 = vpop.permute.xlu0 %4393
    %v4395 = vsel %vm360, %v4228, %v4386
    %v4396 = vsel %vm360, %v4234, %v4388
    %v4397 = vsel %vm360, %v4240, %v4390
    %v4398 = vsel %vm360, %v4246, %v4392
    %v4399 = vsel %vm360, %v4252, %v4394
    %v4405 = vsel %vm968, %v4395, 0.0
    %v4406 = vsel %vm969, %v4396, 0.0
    %v4407 = vsel %vm970, %v4397, 0.0
    %v4408 = vsel %vm971, %v4398, 0.0
    %v4409 = vsel %vm972, %v4399, 0.0
    %s4410 = scalar_lea.vmem %s16, 16
    %v4411 = vld [vmem:[%s4410] ss:$8 sm:$0x3]
    %v4413 = vlaneseq
    %v4414 = vshrl.u32 %v4413, 7
    %v4415 = vsub.s32 0, %v4414
    %v4416 = vrot.slane %v4411, %v4415
    %v4417 = vlaneseq
    %v4418 = vshrl.u32 %v4417, 7
    %v4419 = vsub.s32 1, %v4418
    %v4420 = vrot.slane %v4411, %v4419
    %v4423 = vmul.f32 %v4274, %v4416
    %v4424 = vmul.f32 %v4405, %v4420
    %v4425 = vmul.f32 %v4276, %v4416
    %v4426 = vmul.f32 %v4406, %v4420
    %v4427 = vmul.f32 %v4278, %v4416
    %v4428 = vmul.f32 %v4407, %v4420
    %v4429 = vmul.f32 %v4280, %v4416
    %v4430 = vmul.f32 %v4408, %v4420
    %v4431 = vmul.f32 %v4282, %v4416
    %v4432 = vmul.f32 %v4409, %v4420
    %v4433 = vadd.f32 %v4359, %v4423
    %v4434 = vadd.f32 %v4360, %v4424
    %v4435 = vadd.f32 %v4361, %v4425
    %v4436 = vadd.f32 %v4362, %v4426
    %v4437 = vadd.f32 %v4363, %v4427
    %v4438 = vadd.f32 %v4364, %v4428
    %v4439 = vadd.f32 %v4365, %v4429
    %v4440 = vadd.f32 %v4366, %v4430
    %v4441 = vadd.f32 %v4367, %v4431
    %v4442 = vadd.f32 %v4368, %v4432
    %v4443 = vld [vmem:[%s17] sm:$0x3]
    %v4445 = vlaneseq
    %v4446 = vshrl.u32 %v4445, 7
    %v4447 = vsub.s32 0, %v4446
    %v4448 = vrot.slane %v4443, %v4447
    %v4449 = vlaneseq
    %v4450 = vshrl.u32 %v4449, 7
    %v4451 = vsub.s32 1, %v4450
    %v4452 = vrot.slane %v4443, %v4451
    %v4455 = vadd.f32 %v4433, %v4448
    %v4456 = vadd.f32 %v4434, %v4452
    %v4457 = vadd.f32 %v4435, %v4448
    %v4458 = vadd.f32 %v4436, %v4452
    %v4459 = vadd.f32 %v4437, %v4448
    %v4460 = vadd.f32 %v4438, %v4452
    %v4461 = vadd.f32 %v4439, %v4448
    %v4462 = vadd.f32 %v4440, %v4452
    %v4463 = vadd.f32 %v4441, %v4448
    %v4464 = vadd.f32 %v4442, %v4452
    %v4465 = vmax.f32 %v4455, 0.0
    %v4466 = vmax.f32 %v4456, 0.0
    %v4467 = vmax.f32 %v4457, 0.0
    %v4468 = vmax.f32 %v4458, 0.0
    %v4469 = vmax.f32 %v4459, 0.0
    %v4470 = vmax.f32 %v4460, 0.0
    %v4471 = vmax.f32 %v4461, 0.0
    %v4472 = vmax.f32 %v4462, 0.0
    %v4473 = vmax.f32 %v4463, 0.0
    %v4474 = vmax.f32 %v4464, 0.0
    %v4475 = vld [vmem:[%s18] sm:$0xff]
    %v4476 = vld [vmem:[%s18 + $0x8] sm:$0xff]
    %v4477 = vld [vmem:[%s18 + $0x10] sm:$0xff]
    %v4478 = vld [vmem:[%s18 + $0x18] sm:$0xff]
    %v4479 = vld [vmem:[%s18 + $0x20] sm:$0xff]
    %v4480 = vld [vmem:[%s18 + $0x28] sm:$0xff]
    %v4481 = vld [vmem:[%s18 + $0x30] sm:$0xff]
    %v4482 = vld [vmem:[%s18 + $0x38] sm:$0xff]
    %v4483 = vld [vmem:[%s18 + $0x40] sm:$0xff]
    %v4484 = vld [vmem:[%s18 + $0x48] sm:$0xff]
    %v4485 = vld [vmem:[%s18 + $0x50] sm:$0xff]
    %v4486 = vld [vmem:[%s18 + $0x58] sm:$0xff]
    %v4487 = vld [vmem:[%s18 + $0x60] sm:$0xff]
    %v4488 = vld [vmem:[%s18 + $0x68] sm:$0xff]
    %v4489 = vld [vmem:[%s18 + $0x70] sm:$0xff]
    %v4490 = vld [vmem:[%s18 + $0x78] sm:$0xff]
    %v4491 = vld [vmem:[%s18 + $0x80] sm:$0xff]
    %v4492 = vld [vmem:[%s18 + $0x88] sm:$0xff]
    %v4493 = vld [vmem:[%s18 + $0x90] sm:$0xff]
    %v4494 = vld [vmem:[%s18 + $0x98] sm:$0xff]
    %v4495 = vld [vmem:[%s18 + $0xa0] sm:$0xff]
    %v4496 = vld [vmem:[%s18 + $0xa8] sm:$0xff]
    %v4497 = vld [vmem:[%s18 + $0xb0] sm:$0xff]
    %v4498 = vld [vmem:[%s18 + $0xb8] sm:$0xff]
    %v4499 = vld [vmem:[%s18 + $0xc0] sm:$0xff]
    %v4500 = vld [vmem:[%s18 + $0xc8] sm:$0xff]
    %v4501 = vld [vmem:[%s18 + $0xd0] sm:$0xff]
    %v4502 = vld [vmem:[%s18 + $0xd8] sm:$0xff]
    %v4503 = vld [vmem:[%s18 + $0xe0] sm:$0xff]
    %v4504 = vld [vmem:[%s18 + $0xe8] sm:$0xff]
    %v4505 = vld [vmem:[%s18 + $0xf0] sm:$0xff]
    %v4506 = vld [vmem:[%s18 + $0xf8] sm:$0xff]
    %v4507 = vld [vmem:[%s18 + $0x100] sm:$0xff]
    %v4508 = vld [vmem:[%s18 + $0x108] sm:$0xff]
    %v4509 = vld [vmem:[%s18 + $0x110] sm:$0xff]
    %v4510 = vld [vmem:[%s18 + $0x118] sm:$0xff]
    %v4511 = vld [vmem:[%s18 + $0x120] sm:$0xff]
    %v4512 = vld [vmem:[%s18 + $0x128] sm:$0xff]
    %v4513 = vld [vmem:[%s18 + $0x130] sm:$0xff]
    %v4514 = vld [vmem:[%s18 + $0x138] sm:$0xff]
    %v4515 = vld [vmem:[%s18 + $0x140] sm:$0xff]
    %v4516 = vld [vmem:[%s18 + $0x148] sm:$0xff]
    %v4517 = vld [vmem:[%s18 + $0x150] sm:$0xff]
    %v4518 = vld [vmem:[%s18 + $0x158] sm:$0xff]
    %v4519 = vld [vmem:[%s18 + $0x160] sm:$0xff]
    %v4520 = vld [vmem:[%s18 + $0x168] sm:$0xff]
    %v4521 = vld [vmem:[%s18 + $0x170] sm:$0xff]
    %v4522 = vld [vmem:[%s18 + $0x178] sm:$0xff]
    %v4523 = vld [vmem:[%s18 + $0x180] sm:$0xff]
    %v4524 = vld [vmem:[%s18 + $0x188] sm:$0xff]
    %v4525 = vld [vmem:[%s18 + $0x190] sm:$0xff]
    %v4526 = vld [vmem:[%s18 + $0x198] sm:$0xff]
    %v4527 = vld [vmem:[%s18 + $0x1a0] sm:$0xff]
    %v4528 = vld [vmem:[%s18 + $0x1a8] sm:$0xff]
    %v4529 = vld [vmem:[%s18 + $0x1b0] sm:$0xff]
    %v4530 = vld [vmem:[%s18 + $0x1b8] sm:$0xff]
    %v4531 = vld [vmem:[%s18 + $0x1c0] sm:$0xff]
    %v4532 = vld [vmem:[%s18 + $0x1c8] sm:$0xff]
    %v4533 = vld [vmem:[%s18 + $0x1d0] sm:$0xff]
    %v4534 = vld [vmem:[%s18 + $0x1d8] sm:$0xff]
    %v4535 = vld [vmem:[%s18 + $0x1e0] sm:$0xff]
    %v4536 = vld [vmem:[%s18 + $0x1e8] sm:$0xff]
    %v4537 = vld [vmem:[%s18 + $0x1f0] sm:$0xff]
    %v4538 = vld [vmem:[%s18 + $0x1f8] sm:$0xff]
    %v4539 = vld [vmem:[%s19] sm:$0x3]
    %v4541 = vlaneseq
    %v4542 = vshrl.u32 %v4541, 7
    %v4543 = vsub.s32 0, %v4542
    %v4544 = vrot.slane %v4539, %v4543
    %v4545 = vlaneseq
    %v4546 = vshrl.u32 %v4545, 7
    %v4547 = vsub.s32 1, %v4546
    %v4548 = vrot.slane %v4539, %v4547
    %4551 = vmatprep.subr.mxu0 %v4506
    %4552 = vmatpush1.msra.mxu0 %v4505
    %4553 = vmatprep.subr.mxu0 %v4504
    %4554 = vmatpush1.msra.mxu0 %v4503
    %4555 = vmatprep.subr.mxu0 %v4502
    %4556 = vmatpush1.msra.mxu0 %v4501
    %4557 = vmatprep.subr.mxu0 %v4500
    %4558 = vmatpush1.msra.mxu0 %v4499
    %4559 = vmatprep.subr.mxu0 %v4498
    %4560 = vmatpush1.msra.mxu0 %v4497
    %4561 = vmatprep.subr.mxu0 %v4496
    %4562 = vmatpush1.msra.mxu0 %v4495
    %4563 = vmatprep.subr.mxu0 %v4494
    %4564 = vmatpush1.msra.mxu0 %v4493
    %4565 = vmatprep.subr.mxu0 %v4492
    %4566 = vmatpush1.msra.mxu0 %v4491
    %4567 = vmatprep.subr.mxu0 %v4490
    %4568 = vmatpush1.msra.mxu0 %v4489
    %4569 = vmatprep.subr.mxu0 %v4488
    %4570 = vmatpush1.msra.mxu0 %v4487
    %4571 = vmatprep.subr.mxu0 %v4486
    %4572 = vmatpush1.msra.mxu0 %v4485
    %4573 = vmatprep.subr.mxu0 %v4484
    %4574 = vmatpush1.msra.mxu0 %v4483
    %4575 = vmatprep.subr.mxu0 %v4482
    %4576 = vmatpush1.msra.mxu0 %v4481
    %4577 = vmatprep.subr.mxu0 %v4480
    %4578 = vmatpush1.msra.mxu0 %v4479
    %4579 = vmatprep.subr.mxu0 %v4478
    %4580 = vmatpush1.msra.mxu0 %v4477
    %4581 = vmatprep.subr.mxu0 %v4476
    %4582 = vmatpush1.msra.mxu0 %v4475
    %4583 = vmatprep.subr.mxu0 %v4538
    %4584 = vmatpush2.msra.mxu0 %v4537
    %4585 = vmatprep.subr.mxu0 %v4536
    %4586 = vmatpush2.msra.mxu0 %v4535
    %4587 = vmatprep.subr.mxu0 %v4534
    %4588 = vmatpush2.msra.mxu0 %v4533
    %4589 = vmatprep.subr.mxu0 %v4532
    %4590 = vmatpush2.msra.mxu0 %v4531
    %4591 = vmatprep.subr.mxu0 %v4530
    %4592 = vmatpush2.msra.mxu0 %v4529
    %4593 = vmatprep.subr.mxu0 %v4528
    %4594 = vmatpush2.msra.mxu0 %v4527
    %4595 = vmatprep.subr.mxu0 %v4526
    %4596 = vmatpush2.msra.mxu0 %v4525
    %4597 = vmatprep.subr.mxu0 %v4524
    %4598 = vmatpush2.msra.mxu0 %v4523
    %4599 = vmatprep.subr.mxu0 %v4522
    %4600 = vmatpush2.msra.mxu0 %v4521
    %4601 = vmatprep.subr.mxu0 %v4520
    %4602 = vmatpush2.msra.mxu0 %v4519
    %4603 = vmatprep.subr.mxu0 %v4518
    %4604 = vmatpush2.msra.mxu0 %v4517
    %4605 = vmatprep.subr.mxu0 %v4516
    %4606 = vmatpush2.msra.mxu0 %v4515
    %4607 = vmatprep.subr.mxu0 %v4514
    %4608 = vmatpush2.msra.mxu0 %v4513
    %4609 = vmatprep.subr.mxu0 %v4512
    %4610 = vmatpush2.msra.mxu0 %v4511
    %4611 = vmatprep.subr.mxu0 %v4510
    %4612 = vmatpush2.msra.mxu0 %v4509
    %4613 = vmatprep.subr.mxu0 %v4508
    %4614 = vmatpush2.msra.mxu0 %v4507
    %4615 = vmatprep.mubr.f32.mxu0 %v4466
    %4616 = vmatmul.mubr.f32.gmra.mxu0 %v4465
    %v4617 = vpop.f32.mrf.mxu0
    %v4618 = vadd.f32 %v4544, %v4617
    %v4619 = vpop.f32.mrf.mxu0
    %v4620 = vadd.f32 %v4548, %v4619
    %4621 = vmatprep.mubr.f32.mxu0 %v4468
    %4622 = vmatmul.mubr.f32.gmra.mxu0 %v4467
    %v4623 = vpop.f32.mrf.mxu0
    %v4624 = vadd.f32 %v4544, %v4623
    %v4625 = vpop.f32.mrf.mxu0
    %v4626 = vadd.f32 %v4548, %v4625
    %4627 = vmatprep.mubr.f32.mxu0 %v4470
    %4628 = vmatmul.mubr.f32.gmra.mxu0 %v4469
    %v4629 = vpop.f32.mrf.mxu0
    %v4630 = vadd.f32 %v4544, %v4629
    %v4631 = vpop.f32.mrf.mxu0
    %v4632 = vadd.f32 %v4548, %v4631
    %4633 = vmatprep.mubr.f32.mxu0 %v4472
    %4634 = vmatmul.mubr.f32.gmra.mxu0 %v4471
    %v4635 = vpop.f32.mrf.mxu0
    %v4636 = vadd.f32 %v4544, %v4635
    %v4637 = vpop.f32.mrf.mxu0
    %v4638 = vadd.f32 %v4548, %v4637
    %4639 = vmatprep.mubr.f32.mxu0 %v4474
    %4640 = vmatmul.mubr.f32.gmra.mxu0 %v4473
    %v4641 = vpop.f32.mrf.mxu0
    %v4642 = vadd.f32 %v4544, %v4641
    %v4643 = vpop.f32.mrf.mxu0
    %v4644 = vadd.f32 %v4548, %v4643
    %4645 = vdwg.mxu0
    %v4646 = vmax.f32 %v4618, 0.0
    %v4647 = vmax.f32 %v4620, 0.0
    %v4648 = vmax.f32 %v4624, 0.0
    %v4649 = vmax.f32 %v4626, 0.0
    %v4650 = vmax.f32 %v4630, 0.0
    %v4651 = vmax.f32 %v4632, 0.0
    %v4652 = vmax.f32 %v4636, 0.0
    %v4653 = vmax.f32 %v4638, 0.0
    %v4654 = vmax.f32 %v4642, 0.0
    %v4655 = vmax.f32 %v4644, 0.0
    %v4656 = vld [vmem:[%s1] sm:$0x3]
    %vm4657 = vcmask 326656
    %v4659 = vsel %vm4657, %v4656, 0
    %4661 = vmatprep.subr.mxu0 0.0
    %4662 = vmatpush1.msra.mxu0 0.0
    %4663 = vmatprep.subr.mxu0 0.0
    %4664 = vmatpush1.msra.mxu0 0.0
    %4665 = vmatprep.subr.mxu0 0.0
    %4666 = vmatpush1.msra.mxu0 0.0
    %4667 = vmatprep.subr.mxu0 0.0
    %4668 = vmatpush1.msra.mxu0 0.0
    %4669 = vmatprep.subr.mxu0 0.0
    %4670 = vmatpush1.msra.mxu0 0.0
    %4671 = vmatprep.subr.mxu0 0.0
    %4672 = vmatpush1.msra.mxu0 0.0
    %4673 = vmatprep.subr.mxu0 0.0
    %4674 = vmatpush1.msra.mxu0 0.0
    %4675 = vmatprep.subr.mxu0 0.0
    %4676 = vmatpush1.msra.mxu0 0.0
    %4677 = vmatprep.subr.mxu0 0.0
    %4678 = vmatpush1.msra.mxu0 0.0
    %4679 = vmatprep.subr.mxu0 0.0
    %4680 = vmatpush1.msra.mxu0 0.0
    %4681 = vmatprep.subr.mxu0 0.0
    %4682 = vmatpush1.msra.mxu0 0.0
    %4683 = vmatprep.subr.mxu0 %v4655
    %4684 = vmatpush1.msra.mxu0 %v4654
    %4685 = vmatprep.subr.mxu0 %v4653
    %4686 = vmatpush1.msra.mxu0 %v4652
    %4687 = vmatprep.subr.mxu0 %v4651
    %4688 = vmatpush1.msra.mxu0 %v4650
    %4689 = vmatprep.subr.mxu0 %v4649
    %4690 = vmatpush1.msra.mxu0 %v4648
    %4691 = vmatprep.subr.mxu0 %v4647
    %4692 = vmatpush1.msra.mxu0 %v4646
    %4693 = vmatprep.subr.mxu0 0.0
    %4694 = vmatpush2.msra.mxu0 0.0
    %4695 = vmatprep.subr.mxu0 0.0
    %4696 = vmatpush2.msra.mxu0 0.0
    %4697 = vmatprep.subr.mxu0 0.0
    %4698 = vmatpush2.msra.mxu0 0.0
    %4699 = vmatprep.subr.mxu0 0.0
    %4700 = vmatpush2.msra.mxu0 0.0
    %4701 = vmatprep.subr.mxu0 0.0
    %4702 = vmatpush2.msra.mxu0 0.0
    %4703 = vmatprep.subr.mxu0 0.0
    %4704 = vmatpush2.msra.mxu0 0.0
    %4705 = vmatprep.subr.mxu0 0.0
    %4706 = vmatpush2.msra.mxu0 0.0
    %4707 = vmatprep.subr.mxu0 0.0
    %4708 = vmatpush2.msra.mxu0 0.0
    %4709 = vmatprep.subr.mxu0 0.0
    %4710 = vmatpush2.msra.mxu0 0.0
    %4711 = vmatprep.subr.mxu0 0.0
    %4712 = vmatpush2.msra.mxu0 0.0
    %4713 = vmatprep.subr.mxu0 0.0
    %4714 = vmatpush2.msra.mxu0 0.0
    %4715 = vmatprep.subr.mxu0 0.0
    %4716 = vmatpush2.msra.mxu0 0.0
    %4717 = vmatprep.subr.mxu0 0.0
    %4718 = vmatpush2.msra.mxu0 0.0
    %4719 = vmatprep.subr.mxu0 0.0
    %4720 = vmatpush2.msra.mxu0 0.0
    %4721 = vmatprep.subr.mxu0 0.0
    %4722 = vmatpush2.msra.mxu0 0.0
    %4723 = vmatprep.subr.mxu0 0.0
    %4724 = vmatpush2.msra.mxu0 0.0
    %4725 = vmatprep.mubr.f32.mxu0 0.0
    %4726 = vmatmul.mubr.f32.gmra.mxu0 %v4659
    %v4727 = vpop.f32.mrf.mxu0
    %v4728 = vadd.f32 0.0, %v4727
    %v4729 = vpop.f32.mrf.mxu0
    %v4730 = vadd.f32 0.0, %v4729
    %4731 = vdwg.mxu0
    %v4732 = vld [vmem:[%s20] sm:$0xff]
    %v4733 = vld [vmem:[%s20 + $0x8] sm:$0xff]
    %v4734 = vld [vmem:[%s20 + $0x10] sm:$0xff]
    %v4735 = vld [vmem:[%s20 + $0x18] sm:$0xff]
    %v4736 = vld [vmem:[%s20 + $0x20] sm:$0xff]
    %v4737 = vld [vmem:[%s20 + $0x28] sm:$0xff]
    %v4738 = vld [vmem:[%s20 + $0x30] sm:$0xff]
    %v4739 = vld [vmem:[%s20 + $0x38] sm:$0xff]
    %v4740 = vld [vmem:[%s20 + $0x40] sm:$0xff]
    %v4741 = vld [vmem:[%s20 + $0x48] sm:$0xff]
    %v4742 = vld [vmem:[%s20 + $0x50] sm:$0xff]
    %v4743 = vld [vmem:[%s20 + $0x58] sm:$0xff]
    %v4744 = vld [vmem:[%s20 + $0x60] sm:$0xff]
    %v4745 = vld [vmem:[%s20 + $0x68] sm:$0xff]
    %v4746 = vld [vmem:[%s20 + $0x70] sm:$0xff]
    %v4747 = vld [vmem:[%s20 + $0x78] sm:$0xff]
    %v4748 = vld [vmem:[%s20 + $0x80] sm:$0xff]
    %v4749 = vld [vmem:[%s20 + $0x88] sm:$0xff]
    %v4750 = vld [vmem:[%s20 + $0x90] sm:$0xff]
    %v4751 = vld [vmem:[%s20 + $0x98] sm:$0xff]
    %v4752 = vld [vmem:[%s20 + $0xa0] sm:$0xff]
    %v4753 = vld [vmem:[%s20 + $0xa8] sm:$0xff]
    %v4754 = vld [vmem:[%s20 + $0xb0] sm:$0xff]
    %v4755 = vld [vmem:[%s20 + $0xb8] sm:$0xff]
    %v4756 = vld [vmem:[%s20 + $0xc0] sm:$0xff]
    %v4757 = vld [vmem:[%s20 + $0xc8] sm:$0xff]
    %v4758 = vld [vmem:[%s20 + $0xd0] sm:$0xff]
    %v4759 = vld [vmem:[%s20 + $0xd8] sm:$0xff]
    %v4760 = vld [vmem:[%s20 + $0xe0] sm:$0xff]
    %v4761 = vld [vmem:[%s20 + $0xe8] sm:$0xff]
    %v4762 = vld [vmem:[%s20 + $0xf0] sm:$0xff]
    %v4763 = vld [vmem:[%s20 + $0xf8] sm:$0xff]
    %v4764 = vld [vmem:[%s21] sm:$0x1]
    %v4766 = vlaneseq
    %v4767 = vshrl.u32 %v4766, 7
    %v4768 = vsub.s32 0, %v4767
    %v4769 = vrot.slane %v4764, %v4768
    %4771 = vmatprep.subr.mxu0 0.0
    %4772 = vmatpush1.msra.mxu0 %v4747
    %4773 = vmatprep.subr.mxu0 0.0
    %4774 = vmatpush1.msra.mxu0 %v4746
    %4775 = vmatprep.subr.mxu0 0.0
    %4776 = vmatpush1.msra.mxu0 %v4745
    %4777 = vmatprep.subr.mxu0 0.0
    %4778 = vmatpush1.msra.mxu0 %v4744
    %4779 = vmatprep.subr.mxu0 0.0
    %4780 = vmatpush1.msra.mxu0 %v4743
    %4781 = vmatprep.subr.mxu0 0.0
    %4782 = vmatpush1.msra.mxu0 %v4742
    %4783 = vmatprep.subr.mxu0 0.0
    %4784 = vmatpush1.msra.mxu0 %v4741
    %4785 = vmatprep.subr.mxu0 0.0
    %4786 = vmatpush1.msra.mxu0 %v4740
    %4787 = vmatprep.subr.mxu0 0.0
    %4788 = vmatpush1.msra.mxu0 %v4739
    %4789 = vmatprep.subr.mxu0 0.0
    %4790 = vmatpush1.msra.mxu0 %v4738
    %4791 = vmatprep.subr.mxu0 0.0
    %4792 = vmatpush1.msra.mxu0 %v4737
    %4793 = vmatprep.subr.mxu0 0.0
    %4794 = vmatpush1.msra.mxu0 %v4736
    %4795 = vmatprep.subr.mxu0 0.0
    %4796 = vmatpush1.msra.mxu0 %v4735
    %4797 = vmatprep.subr.mxu0 0.0
    %4798 = vmatpush1.msra.mxu0 %v4734
    %4799 = vmatprep.subr.mxu0 0.0
    %4800 = vmatpush1.msra.mxu0 %v4733
    %4801 = vmatprep.subr.mxu0 0.0
    %4802 = vmatpush1.msra.mxu0 %v4732
    %4803 = vmatprep.subr.mxu0 0.0
    %4804 = vmatpush2.msra.mxu0 %v4763
    %4805 = vmatprep.subr.mxu0 0.0
    %4806 = vmatpush2.msra.mxu0 %v4762
    %4807 = vmatprep.subr.mxu0 0.0
    %4808 = vmatpush2.msra.mxu0 %v4761
    %4809 = vmatprep.subr.mxu0 0.0
    %4810 = vmatpush2.msra.mxu0 %v4760
    %4811 = vmatprep.subr.mxu0 0.0
    %4812 = vmatpush2.msra.mxu0 %v4759
    %4813 = vmatprep.subr.mxu0 0.0
    %4814 = vmatpush2.msra.mxu0 %v4758
    %4815 = vmatprep.subr.mxu0 0.0
    %4816 = vmatpush2.msra.mxu0 %v4757
    %4817 = vmatprep.subr.mxu0 0.0
    %4818 = vmatpush2.msra.mxu0 %v4756
    %4819 = vmatprep.subr.mxu0 0.0
    %4820 = vmatpush2.msra.mxu0 %v4755
    %4821 = vmatprep.subr.mxu0 0.0
    %4822 = vmatpush2.msra.mxu0 %v4754
    %4823 = vmatprep.subr.mxu0 0.0
    %4824 = vmatpush2.msra.mxu0 %v4753
    %4825 = vmatprep.subr.mxu0 0.0
    %4826 = vmatpush2.msra.mxu0 %v4752
    %4827 = vmatprep.subr.mxu0 0.0
    %4828 = vmatpush2.msra.mxu0 %v4751
    %4829 = vmatprep.subr.mxu0 0.0
    %4830 = vmatpush2.msra.mxu0 %v4750
    %4831 = vmatprep.subr.mxu0 0.0
    %4832 = vmatpush2.msra.mxu0 %v4749
    %4833 = vmatprep.subr.mxu0 0.0
    %4834 = vmatpush2.msra.mxu0 %v4748
    %4835 = vmatprep.mubr.f32.mxu0 %v4730
    %4836 = vmatmul.mubr.f32.gmra.mxu0 %v4728
    %v4837 = vpop.f32.mrf.mxu0
    %v4838 = vadd.f32 %v4769, %v4837
    %v4839 = vpop.f32.mrf.mxu0
    %4840 = vdwg.mxu0
    %v4841 = vmax.f32 %v4838, 0.0
    %v4842 = vld [vmem:[%s22] sm:$0xff]
    %v4843 = vld [vmem:[%s22 + $0x8] sm:$0xff]
    %v4844 = vld [vmem:[%s22 + $0x10] sm:$0xff]
    %v4845 = vld [vmem:[%s22 + $0x18] sm:$0xff]
    %v4846 = vld [vmem:[%s22 + $0x20] sm:$0xff]
    %v4847 = vld [vmem:[%s22 + $0x28] sm:$0xff]
    %v4848 = vld [vmem:[%s22 + $0x30] sm:$0xff]
    %v4849 = vld [vmem:[%s22 + $0x38] sm:$0xff]
    %v4850 = vld [vmem:[%s23] sm:$0x1]
    %v4852 = vlaneseq
    %v4853 = vshrl.u32 %v4852, 7
    %v4854 = vsub.s32 0, %v4853
    %v4855 = vrot.slane %v4850, %v4854
    %v4858 = vsel %vm360, %v4841, 0
    %4860 = vmatprep.subr.mxu0 0.0
    %4861 = vmatpush1.msra.mxu0 0.0
    %4862 = vmatprep.subr.mxu0 0.0
    %4863 = vmatpush1.msra.mxu0 0.0
    %4864 = vmatprep.subr.mxu0 0.0
    %4865 = vmatpush1.msra.mxu0 0.0
    %4866 = vmatprep.subr.mxu0 0.0
    %4867 = vmatpush1.msra.mxu0 0.0
    %4868 = vmatprep.subr.mxu0 0.0
    %4869 = vmatpush1.msra.mxu0 0.0
    %4870 = vmatprep.subr.mxu0 0.0
    %4871 = vmatpush1.msra.mxu0 0.0
    %4872 = vmatprep.subr.mxu0 0.0
    %4873 = vmatpush1.msra.mxu0 0.0
    %4874 = vmatprep.subr.mxu0 0.0
    %4875 = vmatpush1.msra.mxu0 0.0
    %4876 = vmatprep.subr.mxu0 0.0
    %4877 = vmatpush1.msra.mxu0 %v4849
    %4878 = vmatprep.subr.mxu0 0.0
    %4879 = vmatpush1.msra.mxu0 %v4848
    %4880 = vmatprep.subr.mxu0 0.0
    %4881 = vmatpush1.msra.mxu0 %v4847
    %4882 = vmatprep.subr.mxu0 0.0
    %4883 = vmatpush1.msra.mxu0 %v4846
    %4884 = vmatprep.subr.mxu0 0.0
    %4885 = vmatpush1.msra.mxu0 %v4845
    %4886 = vmatprep.subr.mxu0 0.0
    %4887 = vmatpush1.msra.mxu0 %v4844
    %4888 = vmatprep.subr.mxu0 0.0
    %4889 = vmatpush1.msra.mxu0 %v4843
    %4890 = vmatprep.subr.mxu0 0.0
    %4891 = vmatpush1.msra.mxu0 %v4842
    %4892 = vmatprep.subr.mxu0 0.0
    %4893 = vmatpush2.msra.mxu0 0.0
    %4894 = vmatprep.subr.mxu0 0.0
    %4895 = vmatpush2.msra.mxu0 0.0
    %4896 = vmatprep.subr.mxu0 0.0
    %4897 = vmatpush2.msra.mxu0 0.0
    %4898 = vmatprep.subr.mxu0 0.0
    %4899 = vmatpush2.msra.mxu0 0.0
    %4900 = vmatprep.subr.mxu0 0.0
    %4901 = vmatpush2.msra.mxu0 0.0
    %4902 = vmatprep.subr.mxu0 0.0
    %4903 = vmatpush2.msra.mxu0 0.0
    %4904 = vmatprep.subr.mxu0 0.0
    %4905 = vmatpush2.msra.mxu0 0.0
    %4906 = vmatprep.subr.mxu0 0.0
    %4907 = vmatpush2.msra.mxu0 0.0
    %4908 = vmatprep.subr.mxu0 0.0
    %4909 = vmatpush2.msra.mxu0 0.0
    %4910 = vmatprep.subr.mxu0 0.0
    %4911 = vmatpush2.msra.mxu0 0.0
    %4912 = vmatprep.subr.mxu0 0.0
    %4913 = vmatpush2.msra.mxu0 0.0
    %4914 = vmatprep.subr.mxu0 0.0
    %4915 = vmatpush2.msra.mxu0 0.0
    %4916 = vmatprep.subr.mxu0 0.0
    %4917 = vmatpush2.msra.mxu0 0.0
    %4918 = vmatprep.subr.mxu0 0.0
    %4919 = vmatpush2.msra.mxu0 0.0
    %4920 = vmatprep.subr.mxu0 0.0
    %4921 = vmatpush2.msra.mxu0 0.0
    %4922 = vmatprep.subr.mxu0 0.0
    %4923 = vmatpush2.msra.mxu0 0.0
    %4924 = vmatprep.mubr.f32.mxu0 0.0
    %4925 = vmatmul.mubr.f32.gmra.mxu0 %v4858
    %v4926 = vpop.f32.mrf.mxu0
    %v4927 = vadd.f32 %v4855, %v4926
    %v4928 = vpop.f32.mrf.mxu0
    %4929 = vdwg.mxu0
    %vm4930 = vcmask 91136
    %v4931 = vsel %vm4930, %v4927, -inf
    %4932 = vmax.xlane.f32.xlu0 %v4931
    %v4933 = vpop.xlane.xlu0 %4932
    %v4934 = vsub.f32 %v4927, %v4933
    %v4935 = vmul.f32 %v4934, 1.442695
    %v4936 = vpow.pop %v4935
    %v4937 = vsel %vm4930, %v4936, 0.0
    %4938 = vadd.xlane.f32.xlu0 %v4937
    %v4939 = vpop.xlane.xlu0 %4938
    %v4940 = vrcp.pop %v4939
    %v4941 = vmul.f32 %v4936, %v4940
    %4942 = vst.msk [vmem:[#allocation3] sm:$0x3] %vm4930, %v4941
    // Predicated region
    $region98: #{dscnn_forward.1} parent=1 // pred_check
      _
    $region99: #{dscnn_forward.1} parent=1 // pred_check_branch
      %4944 = sbr.rel (0) target = $region101
    $region100: #{dscnn_forward.1} parent=1 // pred_region
      %s4946 = ssub.s32 32, 32
      %4947 = vsyncadd [#allocation4], %s4946
      %s4949 = sshll.u32 [#allocation3], 4
      %s4950 = int_to_ptr.vmem [resolvable:$true] %s4949
      %4952 = dma.vmem_to_hbm [thread:$0]  %s4950, 32, %s24, [#allocation4]
    $region101: #{dscnn_forward.1} parent=1 // pred_fallthru
      _
    // Predicated region
    $region102: #{dscnn_forward.1} parent=1 // pred_check
      _
    $region103: #{dscnn_forward.1} parent=1 // pred_check_branch
      %4954 = sbr.rel (0) target = $region105
    $region104: #{dscnn_forward.1} parent=1 // pred_region
      %4955 = dma.done [#allocation4], 32
    $region105: #{dscnn_forward.1} parent=1 // pred_fallthru
      _
    %4956 = vsyncpa [#allocation4], 1

</llo_original>
